<compile_context>
chip_gen: v6e
topology: v6e:2x2x1
jax: 0.10.0
libtpu: 0.0.40
codegen_flags: <defaults>
</compile_context>

<pallas_src>
import math

import jax
import jax.numpy as jnp
from jax.experimental import pallas as pl
from jax.experimental.pallas import tpu as pltpu

# Safe on v5e/v6e (128 MiB) and v7x (64 MiB).  TODO(synk): raise toward
# ~48-56 MiB on v5e/v6e (keep <=32 MiB on v7x) once conv strips are halo-tiled
# for real 640x640 resolutions.
VMEM_LIMIT = 32 * 1024 * 1024


def _cost(inputs, out_bytes, flops, transcendentals=0):
    bytes_accessed = int(out_bytes) + sum(int(a.size) * a.dtype.itemsize
                                          for a in inputs)
    return pl.CostEstimate(flops=int(flops),
                           transcendentals=int(transcendentals),
                           bytes_accessed=int(bytes_accessed))


def _silu(v):
    return v * jax.nn.sigmoid(v)          # f32 math; sigmoid goes to the EUP


# ----------------------------------------------------------------------------
# Kernel 1: 3x3 conv, stride 2, pad 1, + bias + SiLU.
# Input arrives as a phase-major space-to-depth layout (N, 4*Hh, Wh, C) where
# row p*Hh + r holds padded-input row 2r + p//2, column parity p%2.  The 9
# shifted taps are gathered in VMEM into one (Ho*Wo, 9*C) operand and fed to a
# single MXU dot (K = 9*C) with the bias added in the epilogue.
# ----------------------------------------------------------------------------
def _make_conv_s2_kernel(Hh, Wh, C, Ho, Wo, Cout):
    def kernel(x_ref, w_ref, b_ref, o_ref):
        taps = []
        for di in range(3):                       # tap order matches w reshape
            for dj in range(3):
                p = (di % 2) * 2 + (dj % 2)       # phase (row parity, col parity)
                rs = p * Hh + di // 2             # static row start inside phase
                cs = dj // 2                      # static col start
                taps.append(x_ref[0, rs:rs + Ho, cs:cs + Wo, :]
                            .reshape(Ho * Wo, C))
        col = jnp.concatenate(taps, axis=-1)      # (Ho*Wo, 9*C) bf16, in VMEM
        acc = jnp.dot(col, w_ref[...], preferred_element_type=jnp.float32)
        acc = acc + b_ref[...]
        acc = _silu(acc)                          # SiLU in f32
        o_ref[0] = acc.astype(o_ref.dtype)
    return kernel


def conv3x3_s2(x_nhwc, w_col, b, out_dtype=jnp.bfloat16):
    """3x3 conv, stride 2, pad 1. w_col: (9*Cin, Cout) tap-major, b: (Cout,)."""
    N, H, W, C = x_nhwc.shape
    Cout = w_col.shape[-1]
    assert w_col.shape[0] == 9 * C and H % 2 == 0 and W % 2 == 0
    Ho, Wo = H // 2, W // 2
    Hh, Wh = H // 2 + 1, W // 2 + 1

    xp = jnp.pad(x_nhwc.astype(jnp.bfloat16), ((0, 0), (1, 1), (1, 1), (0, 0)))
    # Single space-to-depth transpose (one XLA copy), replacing 4 strided
    # phase slices: phase p = a*2 + b holds xp rows a::2, cols b::2.
    s2d = (xp.reshape(N, Hh, 2, Wh, 2, C)
             .transpose(0, 2, 4, 1, 3, 5)
             .reshape(N, 4 * Hh, Wh, C))
    wb = w_col.astype(jnp.bfloat16)
    b2 = b.reshape(1, Cout).astype(jnp.float32)

    out = pl.pallas_call(
        _make_conv_s2_kernel(Hh, Wh, C, Ho, Wo, Cout),
        out_shape=jax.ShapeDtypeStruct((N, Ho * Wo, Cout), out_dtype),
        grid=(N,),
        in_specs=[pl.BlockSpec((1, 4 * Hh, Wh, C), lambda n: (n, 0, 0, 0)),
                  pl.BlockSpec((9 * C, Cout), lambda n: (0, 0)),
                  pl.BlockSpec((1, Cout), lambda n: (0, 0))],
        out_specs=pl.BlockSpec((1, Ho * Wo, Cout), lambda n: (n, 0, 0)),
        compiler_params=pltpu.CompilerParams(
            dimension_semantics=("parallel",), vmem_limit_bytes=VMEM_LIMIT),
        cost_estimate=_cost([s2d, wb, b2], N * Ho * Wo * Cout * 2,
                            2 * N * Ho * Wo * 9 * C * Cout,
                            N * Ho * Wo * Cout),
    )(s2d, wb, b2)
    # TODO(synk): at real 640x640 resolutions this per-image block must be
    # halo-row-tiled (<=~8-12 MiB/step on v7x) and the output presented as a
    # lane-dense (Ho, Wo*Cout) slab; at these shapes both are negligible.
    return out.reshape(N, Ho, Wo, Cout)


# ----------------------------------------------------------------------------
# Kernel 2: fully fused C3 block + global-average-pool + classifier head.
#   y1 = SiLU(x @ Wcv1 + b),  y2 = SiLU(x @ Wcv2 + b)        (1x1 convs)
#   z  = SiLU(y1 @ Wb1 + b)                                   (bottleneck cv1)
#   bsp = SiLU(conv3x3_s1(z) + b) + y1                        (bottleneck cv2 + shortcut)
#   h  = SiLU(bsp @ Wcv3a + y2 @ Wcv3b + b)                   (cv3, split weights: no concat)
#   logits = mean_hw(h) @ Whead + bhead                        (GAP + head, 128 lanes)
# All intermediates live in vregs / a small VMEM scratch; one (1,128) store.
# ----------------------------------------------------------------------------
def _make_c3_gap_head_kernel(H, W, c, n_lanes):
    HW = H * W
    inv_hw = 1.0 / HW

    def kernel(x_ref, w1_ref, b1_ref, w2_ref, b2_ref, wb1_ref, bb1_ref,
               wb2_ref, bb2_ref, w3a_ref, w3b_ref, b3_ref, wh_ref, bh_ref,
               o_ref, zpad_ref):
        x = x_ref[0]                                                # (HW, Cin) bf16
        y1 = _silu(jnp.dot(x, w1_ref[...],
                           preferred_element_type=jnp.float32) + b1_ref[...])
        y2 = _silu(jnp.dot(x, w2_ref[...],
                           preferred_element_type=jnp.float32) + b2_ref[...])
        z = _silu(jnp.dot(y1.astype(jnp.bfloat16), wb1_ref[...],
                          preferred_element_type=jnp.float32) + bb1_ref[...])

        # zero-padded z (pad=1) kept in VMEM scratch for the 3x3 bottleneck conv
        zpad_ref[...] = jnp.zeros_like(zpad_ref)
        zpad_ref[1:H + 1, 1:W + 1, :] = z.reshape(H, W, c).astype(jnp.bfloat16)
        taps = [zpad_ref[di:di + H, dj:dj + W, :].reshape(HW, c)
                for di in range(3) for dj in range(3)]
        col = jnp.concatenate(taps, axis=-1)                        # (HW, 9*c)
        bsp = _silu(jnp.dot(col, wb2_ref[...],
                            preferred_element_type=jnp.float32)
                    + bb2_ref[...]) + y1                            # shortcut (f32)

        h = _silu(jnp.dot(bsp.astype(jnp.bfloat16), w3a_ref[...],
                          preferred_element_type=jnp.float32)
                  + jnp.dot(y2.astype(jnp.bfloat16), w3b_ref[...],
                            preferred_element_type=jnp.float32)
                  + b3_ref[...])                                    # (HW, 2c) f32

        pooled = jnp.sum(h, axis=0, keepdims=True) * inv_hw         # (1, 2c) f32
        logits = jnp.dot(pooled, wh_ref[...],
                         preferred_element_type=jnp.float32) + bh_ref[...]
        o_ref[0] = logits                                           # (1, n_lanes)
    return kernel


def c3_gap_head(x_nhwc, params, num_classes=5):
    N, H, W, C = x_nhwc.shape
    HW = H * W
    c = params["c3_b1_w"].shape[0]
    NP = params["head_w"].shape[1]
    bf, f32 = jnp.bfloat16, jnp.float32

    x3 = x_nhwc.reshape(N, HW, C).astype(bf)
    args = (
        x3,
        params["c3_cv1_w"].astype(bf), params["c3_cv1_b"].reshape(1, -1).astype(f32),
        params["c3_cv2_w"].astype(bf), params["c3_cv2_b"].reshape(1, -1).astype(f32),
        params["c3_b1_w"].astype(bf),  params["c3_b1_b"].reshape(1, -1).astype(f32),
        params["c3_b2_w"].astype(bf),  params["c3_b2_b"].reshape(1, -1).astype(f32),
        params["c3_cv3a_w"].astype(bf), params["c3_cv3b_w"].astype(bf),
        params["c3_cv3_b"].reshape(1, -1).astype(f32),
        params["head_w"].astype(f32),  params["head_b"].reshape(1, -1).astype(f32),
    )
    in_specs = [pl.BlockSpec((1, HW, C), lambda n: (n, 0, 0))]
    in_specs += [pl.BlockSpec(a.shape, lambda n: (0, 0)) for a in args[1:]]

    flops = 2 * N * HW * (2 * C * c + c * c + 9 * c * c + 2 * (2 * c) * c) \
            + 2 * N * (2 * c) * NP
    out = pl.pallas_call(
        _make_c3_gap_head_kernel(H, W, c, NP),
        out_shape=jax.ShapeDtypeStruct((N, 1, NP), jnp.float32),
        grid=(N,),
        in_specs=in_specs,
        out_specs=pl.BlockSpec((1, 1, NP), lambda n: (n, 0, 0)),
        scratch_shapes=[pltpu.VMEM((H + 2, W + 2, c), jnp.bfloat16)],
        compiler_params=pltpu.CompilerParams(
            dimension_semantics=("parallel",), vmem_limit_bytes=VMEM_LIMIT),
        cost_estimate=_cost(list(args), N * NP * 4, flops, N * HW * 6 * c),
    )(*args)
    return out.reshape(N, NP)[:, :num_classes]


# ----------------------------------------------------------------------------
# Deterministic synthetic parameters (tiny YOLOv5-cls backbone shapes)
# ----------------------------------------------------------------------------
def init_params(key):
    def dense(k, shape, fan_in):
        return jax.random.normal(k, shape, jnp.float32) / math.sqrt(fan_in)

    def bias(k, n):
        return jax.random.normal(k, (n,), jnp.float32) * 0.01

    ks = jax.random.split(key, 16)
    # stem 3x3: cin=3 zero-padded to 8 (lane alignment), cout=16, tap-major (9*8, 16)
    stem_w = jnp.pad(dense(ks[0], (9, 3, 16), 9 * 3), ((0, 0), (0, 5), (0, 0)))
    cv3_w = dense(ks[6], (32, 32), 32)
    return {
        "stem_w": stem_w.reshape(9 * 8, 16),   "stem_b": bias(ks[8], 16),
        "conv2_w": dense(ks[1], (9, 16, 32), 9 * 16).reshape(9 * 16, 32),
        "conv2_b": bias(ks[9], 32),
        "c3_cv1_w": dense(ks[2], (32, 16), 32), "c3_cv1_b": bias(ks[10], 16),
        "c3_cv2_w": dense(ks[3], (32, 16), 32), "c3_cv2_b": bias(ks[11], 16),
        "c3_b1_w": dense(ks[4], (16, 16), 16),  "c3_b1_b": bias(ks[12], 16),
        "c3_b2_w": dense(ks[5], (9, 16, 16), 9 * 16).reshape(9 * 16, 16),
        "c3_b2_b": bias(ks[13], 16),
        # cv3 (32 -> 32) split into the [bsp | y2] halves so no concat is needed
        "c3_cv3a_w": cv3_w[:16], "c3_cv3b_w": cv3_w[16:],
        "c3_cv3_b": bias(ks[14], 32),
        # head padded to 128 output lanes; logits sliced to 5 outside
        "head_w": jnp.pad(dense(ks[7], (32, 5), 32), ((0, 0), (0, 123))),
        "head_b": jnp.zeros((128,), jnp.float32),
    }


# ----------------------------------------------------------------------------
# Forward pass (equivalent of YOLOv5.forward -> (N, num_classes) logits)
# ----------------------------------------------------------------------------
def yolov5_forward(x_nchw, params):
    # NCHW (PyTorch) -> NHWC; bf16 activations between kernels, f32 accumulation
    # and f32 bias/SiLU/residual math inside every kernel.
    x = jnp.transpose(x_nchw, (0, 2, 3, 1)).astype(jnp.bfloat16)
    x = jnp.pad(x, ((0, 0), (0, 0), (0, 0), (0, 8 - x.shape[-1])))   # 3 -> 8 ch

    x = conv3x3_s2(x, params["stem_w"], params["stem_b"])     # (N, 16, 16, 16)
    x = conv3x3_s2(x, params["conv2_w"], params["conv2_b"])   # (N,  8,  8, 32)
    # Entire C3 block + GAP + linear head in one fused Pallas call.
    return c3_gap_head(x, params, num_classes=5)              # (N, 5)


# TODO(synk): torchvision transforms (Resize/Normalize) and softmax/argmax live
# in `predict()`, not `forward()`, so they are intentionally not in the kernel
# path; forward() returns raw logits exactly like `self.model(x)`.


if __name__ == "__main__":
    key = jax.random.PRNGKey(0)
    pkey, xkey = jax.random.split(key)
    params = init_params(pkey)

    # Small image batch consistent with the module (3-channel images), NCHW.
    # TODO(synk): batch=2 keeps every grid latency-bound; larger batches give
    # the software pipeline real work (and both v7x TCs more than 1 step each).
    x = jax.random.normal(xkey, (2, 3, 32, 32), jnp.float32)

    logits = jax.jit(yolov5_forward)(x, params)
    logits = jax.block_until_ready(logits)

    assert logits.shape == (2, 5), logits.shape
    assert bool(jnp.all(jnp.isfinite(logits)))
    print("KERNEL_OK")
</pallas_src>

<mosaic_0001>
module attributes {stable_mosaic.version = 11 : i64} {
  func.func @kernel(%arg0: i32, %arg1: memref<1x68x17x8xbf16, #tpu.memory_space<vmem>>, %arg2: memref<72x16xbf16, #tpu.memory_space<vmem>>, %arg3: memref<1x16xf32, #tpu.memory_space<vmem>>, %arg4: memref<1x256x16xbf16, #tpu.memory_space<vmem>>) attributes {dimension_semantics = [#tpu.dimension_semantics<parallel>], iteration_bounds = array<i64: 2>, scalar_prefetch = 0 : i64, scratch_operands = 0 : i64, tpu.core_type = #tpu.core_type<tc>, window_params = [{transform_indices = @transform_0, window_bounds = array<i64: 1, 68, 17, 8>}, {pipeline_mode = #tpu.pipeline_mode<synchronous>, transform_indices = @transform_1, window_bounds = array<i64: 72, 16>}, {pipeline_mode = #tpu.pipeline_mode<synchronous>, transform_indices = @transform_2, window_bounds = array<i64: 1, 16>}, {transform_indices = @transform_3, window_bounds = array<i64: 1, 256, 16>}]} {
    %c0 = arith.constant 0 : index
    %c0_0 = arith.constant 0 : index
    %c0_1 = arith.constant 0 : index
    %c0_2 = arith.constant 0 : index
    %0 = vector.load %arg1[%c0, %c0_0, %c0_1, %c0_2] : memref<1x68x17x8xbf16, #tpu.memory_space<vmem>>, vector<1x16x16x8xbf16>
    %1 = vector.shape_cast %0 : vector<1x16x16x8xbf16> to vector<16x16x8xbf16>
    %2 = vector.shape_cast %1 : vector<16x16x8xbf16> to vector<256x8xbf16>
    %c0_3 = arith.constant 0 : index
    %c17 = arith.constant 17 : index
    %c0_4 = arith.constant 0 : index
    %c0_5 = arith.constant 0 : index
    %3 = vector.load %arg1[%c0_3, %c17, %c0_4, %c0_5] : memref<1x68x17x8xbf16, #tpu.memory_space<vmem>>, vector<1x16x16x8xbf16>
    %4 = vector.shape_cast %3 : vector<1x16x16x8xbf16> to vector<16x16x8xbf16>
    %5 = vector.shape_cast %4 : vector<16x16x8xbf16> to vector<256x8xbf16>
    %c0_6 = arith.constant 0 : index
    %c0_7 = arith.constant 0 : index
    %c1 = arith.constant 1 : index
    %c0_8 = arith.constant 0 : index
    %6 = vector.load %arg1[%c0_6, %c0_7, %c1, %c0_8] : memref<1x68x17x8xbf16, #tpu.memory_space<vmem>>, vector<1x16x16x8xbf16>
    %7 = vector.shape_cast %6 : vector<1x16x16x8xbf16> to vector<16x16x8xbf16>
    %8 = vector.shape_cast %7 : vector<16x16x8xbf16> to vector<256x8xbf16>
    %c0_9 = arith.constant 0 : index
    %c34 = arith.constant 34 : index
    %c0_10 = arith.constant 0 : index
    %c0_11 = arith.constant 0 : index
    %9 = vector.load %arg1[%c0_9, %c34, %c0_10, %c0_11] : memref<1x68x17x8xbf16, #tpu.memory_space<vmem>>, vector<1x16x16x8xbf16>
    %10 = vector.shape_cast %9 : vector<1x16x16x8xbf16> to vector<16x16x8xbf16>
    %11 = vector.shape_cast %10 : vector<16x16x8xbf16> to vector<256x8xbf16>
    %c0_12 = arith.constant 0 : index
    %c51 = arith.constant 51 : index
    %c0_13 = arith.constant 0 : index
    %c0_14 = arith.constant 0 : index
    %12 = vector.load %arg1[%c0_12, %c51, %c0_13, %c0_14] : memref<1x68x17x8xbf16, #tpu.memory_space<vmem>>, vector<1x16x16x8xbf16>
    %13 = vector.shape_cast %12 : vector<1x16x16x8xbf16> to vector<16x16x8xbf16>
    %14 = vector.shape_cast %13 : vector<16x16x8xbf16> to vector<256x8xbf16>
    %c0_15 = arith.constant 0 : index
    %c34_16 = arith.constant 34 : index
    %c1_17 = arith.constant 1 : index
    %c0_18 = arith.constant 0 : index
    %15 = vector.load %arg1[%c0_15, %c34_16, %c1_17, %c0_18] : memref<1x68x17x8xbf16, #tpu.memory_space<vmem>>, vector<1x16x16x8xbf16>
    %16 = vector.shape_cast %15 : vector<1x16x16x8xbf16> to vector<16x16x8xbf16>
    %17 = vector.shape_cast %16 : vector<16x16x8xbf16> to vector<256x8xbf16>
    %c0_19 = arith.constant 0 : index
    %c1_20 = arith.constant 1 : index
    %c0_21 = arith.constant 0 : index
    %c0_22 = arith.constant 0 : index
    %18 = vector.load %arg1[%c0_19, %c1_20, %c0_21, %c0_22] : memref<1x68x17x8xbf16, #tpu.memory_space<vmem>>, vector<1x16x16x8xbf16>
    %19 = vector.shape_cast %18 : vector<1x16x16x8xbf16> to vector<16x16x8xbf16>
    %20 = vector.shape_cast %19 : vector<16x16x8xbf16> to vector<256x8xbf16>
    %c0_23 = arith.constant 0 : index
    %c18 = arith.constant 18 : index
    %c0_24 = arith.constant 0 : index
    %c0_25 = arith.constant 0 : index
    %21 = vector.load %arg1[%c0_23, %c18, %c0_24, %c0_25] : memref<1x68x17x8xbf16, #tpu.memory_space<vmem>>, vector<1x16x16x8xbf16>
    %22 = vector.shape_cast %21 : vector<1x16x16x8xbf16> to vector<16x16x8xbf16>
    %23 = vector.shape_cast %22 : vector<16x16x8xbf16> to vector<256x8xbf16>
    %c0_26 = arith.constant 0 : index
    %c1_27 = arith.constant 1 : index
    %c1_28 = arith.constant 1 : index
    %c0_29 = arith.constant 0 : index
    %24 = vector.load %arg1[%c0_26, %c1_27, %c1_28, %c0_29] : memref<1x68x17x8xbf16, #tpu.memory_space<vmem>>, vector<1x16x16x8xbf16>
    %25 = vector.shape_cast %24 : vector<1x16x16x8xbf16> to vector<16x16x8xbf16>
    %26 = vector.shape_cast %25 : vector<16x16x8xbf16> to vector<256x8xbf16>
    %27 = tpu.concatenate %2, %5, %8, %11, %14, %17, %20, %23, %26 in 1 : vector<256x8xbf16>, vector<256x8xbf16>, vector<256x8xbf16>, vector<256x8xbf16>, vector<256x8xbf16>, vector<256x8xbf16>, vector<256x8xbf16>, vector<256x8xbf16>, vector<256x8xbf16> -> vector<256x72xbf16>
    %c0_30 = arith.constant 0 : index
    %c0_31 = arith.constant 0 : index
    %28 = vector.load %arg2[%c0_30, %c0_31] : memref<72x16xbf16, #tpu.memory_space<vmem>>, vector<72x16xbf16>
    %cst = arith.constant dense<0.000000e+00> : vector<256x16xf32>
    %29 = tpu.matmul %27, %28, %cst {dimension_numbers = #tpu.dot_dimension_numbers<[1], [0], [0], [1], [0, 0, 1, 1], [], []>} : vector<256x72xbf16>, vector<72x16xbf16>, vector<256x16xf32> -> vector<256x16xf32>
    %c0_32 = arith.constant 0 : index
    %c0_33 = arith.constant 0 : index
    %30 = vector.load %arg3[%c0_32, %c0_33] : memref<1x16xf32, #tpu.memory_space<vmem>>, vector<1x16xf32>
    %31 = vector.broadcast %30 : vector<1x16xf32> to vector<256x16xf32>
    %32 = arith.addf %29, %31 : vector<256x16xf32>
    %33 = arith.negf %32 : vector<256x16xf32>
    %34 = math.exp %33 : vector<256x16xf32>
    %cst_34 = arith.constant 1.000000e+00 : f32
    %35 = vector.broadcast %cst_34 : f32 to vector<256x16xf32>
    %36 = arith.addf %35, %34 : vector<256x16xf32>
    %37 = arith.divf %35, %36 : vector<256x16xf32>
    %38 = arith.mulf %32, %37 : vector<256x16xf32>
    %39 = arith.truncf %38 : vector<256x16xf32> to vector<256x16xbf16>
    %c0_35 = arith.constant 0 : index
    %c0_36 = arith.constant 0 : index
    %c0_37 = arith.constant 0 : index
    %40 = vector.load %arg4[%c0_35, %c0_36, %c0_37] : memref<1x256x16xbf16, #tpu.memory_space<vmem>>, vector<1x256x16xbf16>
    %41 = vector.shape_cast %40 : vector<1x256x16xbf16> to vector<256x16xbf16>
    %42 = vector.shape_cast %39 : vector<256x16xbf16> to vector<1x256x16xbf16>
    tpu.vector_store %arg4[%c0_35, %c0_36, %c0_37], %42 {strides = array<i32>} : memref<1x256x16xbf16, #tpu.memory_space<vmem>>, vector<1x256x16xbf16>,
    return
  }
  func.func @transform_0(%arg0: i32) -> (i32, i32, i32, i32) {
    %c0_i32 = arith.constant 0 : i32
    %c0_i32_0 = arith.constant 0 : i32
    %c0_i32_1 = arith.constant 0 : i32
    %c0_i32_2 = arith.constant 0 : i32
    return %arg0, %c0_i32, %c0_i32_0, %c0_i32_1 : i32, i32, i32, i32
  }
  func.func @transform_1(%arg0: i32) -> (i32, i32) {
    %c0_i32 = arith.constant 0 : i32
    %c0_i32_0 = arith.constant 0 : i32
    %c0_i32_1 = arith.constant 0 : i32
    return %c0_i32, %c0_i32_0 : i32, i32
  }
  func.func @transform_2(%arg0: i32) -> (i32, i32) {
    %c0_i32 = arith.constant 0 : i32
    %c0_i32_0 = arith.constant 0 : i32
    %c0_i32_1 = arith.constant 0 : i32
    return %c0_i32, %c0_i32_0 : i32, i32
  }
  func.func @transform_3(%arg0: i32) -> (i32, i32, i32) {
    %c0_i32 = arith.constant 0 : i32
    %c0_i32_0 = arith.constant 0 : i32
    %c0_i32_1 = arith.constant 0 : i32
    return %arg0, %c0_i32, %c0_i32_0 : i32, i32, i32
  }
}

module attributes {stable_mosaic.version = 11 : i64} {
  func.func @kernel(%arg0: i32, %arg1: memref<1x36x9x16xbf16, #tpu.memory_space<vmem>>, %arg2: memref<144x32xbf16, #tpu.memory_space<vmem>>, %arg3: memref<1x32xf32, #tpu.memory_space<vmem>>, %arg4: memref<1x64x32xbf16, #tpu.memory_space<vmem>>) attributes {dimension_semantics = [#tpu.dimension_semantics<parallel>], iteration_bounds = array<i64: 2>, scalar_prefetch = 0 : i64, scratch_operands = 0 : i64, tpu.core_type = #tpu.core_type<tc>, window_params = [{transform_indices = @transform_0, window_bounds = array<i64: 1, 36, 9, 16>}, {pipeline_mode = #tpu.pipeline_mode<synchronous>, transform_indices = @transform_1, window_bounds = array<i64: 144, 32>}, {pipeline_mode = #tpu.pipeline_mode<synchronous>, transform_indices = @transform_2, window_bounds = array<i64: 1, 32>}, {transform_indices = @transform_3, window_bounds = array<i64: 1, 64, 32>}]} {
    %c0 = arith.constant 0 : index
    %c0_0 = arith.constant 0 : index
    %c0_1 = arith.constant 0 : index
    %c0_2 = arith.constant 0 : index
    %0 = vector.load %arg1[%c0, %c0_0, %c0_1, %c0_2] : memref<1x36x9x16xbf16, #tpu.memory_space<vmem>>, vector<1x8x8x16xbf16>
    %1 = vector.shape_cast %0 : vector<1x8x8x16xbf16> to vector<8x8x16xbf16>
    %2 = vector.shape_cast %1 : vector<8x8x16xbf16> to vector<64x16xbf16>
    %c0_3 = arith.constant 0 : index
    %c9 = arith.constant 9 : index
    %c0_4 = arith.constant 0 : index
    %c0_5 = arith.constant 0 : index
    %3 = vector.load %arg1[%c0_3, %c9, %c0_4, %c0_5] : memref<1x36x9x16xbf16, #tpu.memory_space<vmem>>, vector<1x8x8x16xbf16>
    %4 = vector.shape_cast %3 : vector<1x8x8x16xbf16> to vector<8x8x16xbf16>
    %5 = vector.shape_cast %4 : vector<8x8x16xbf16> to vector<64x16xbf16>
    %c0_6 = arith.constant 0 : index
    %c0_7 = arith.constant 0 : index
    %c1 = arith.constant 1 : index
    %c0_8 = arith.constant 0 : index
    %6 = vector.load %arg1[%c0_6, %c0_7, %c1, %c0_8] : memref<1x36x9x16xbf16, #tpu.memory_space<vmem>>, vector<1x8x8x16xbf16>
    %7 = vector.shape_cast %6 : vector<1x8x8x16xbf16> to vector<8x8x16xbf16>
    %8 = vector.shape_cast %7 : vector<8x8x16xbf16> to vector<64x16xbf16>
    %c0_9 = arith.constant 0 : index
    %c18 = arith.constant 18 : index
    %c0_10 = arith.constant 0 : index
    %c0_11 = arith.constant 0 : index
    %9 = vector.load %arg1[%c0_9, %c18, %c0_10, %c0_11] : memref<1x36x9x16xbf16, #tpu.memory_space<vmem>>, vector<1x8x8x16xbf16>
    %10 = vector.shape_cast %9 : vector<1x8x8x16xbf16> to vector<8x8x16xbf16>
    %11 = vector.shape_cast %10 : vector<8x8x16xbf16> to vector<64x16xbf16>
    %c0_12 = arith.constant 0 : index
    %c27 = arith.constant 27 : index
    %c0_13 = arith.constant 0 : index
    %c0_14 = arith.constant 0 : index
    %12 = vector.load %arg1[%c0_12, %c27, %c0_13, %c0_14] : memref<1x36x9x16xbf16, #tpu.memory_space<vmem>>, vector<1x8x8x16xbf16>
    %13 = vector.shape_cast %12 : vector<1x8x8x16xbf16> to vector<8x8x16xbf16>
    %14 = vector.shape_cast %13 : vector<8x8x16xbf16> to vector<64x16xbf16>
    %c0_15 = arith.constant 0 : index
    %c18_16 = arith.constant 18 : index
    %c1_17 = arith.constant 1 : index
    %c0_18 = arith.constant 0 : index
    %15 = vector.load %arg1[%c0_15, %c18_16, %c1_17, %c0_18] : memref<1x36x9x16xbf16, #tpu.memory_space<vmem>>, vector<1x8x8x16xbf16>
    %16 = vector.shape_cast %15 : vector<1x8x8x16xbf16> to vector<8x8x16xbf16>
    %17 = vector.shape_cast %16 : vector<8x8x16xbf16> to vector<64x16xbf16>
    %c0_19 = arith.constant 0 : index
    %c1_20 = arith.constant 1 : index
    %c0_21 = arith.constant 0 : index
    %c0_22 = arith.constant 0 : index
    %18 = vector.load %arg1[%c0_19, %c1_20, %c0_21, %c0_22] : memref<1x36x9x16xbf16, #tpu.memory_space<vmem>>, vector<1x8x8x16xbf16>
    %19 = vector.shape_cast %18 : vector<1x8x8x16xbf16> to vector<8x8x16xbf16>
    %20 = vector.shape_cast %19 : vector<8x8x16xbf16> to vector<64x16xbf16>
    %c0_23 = arith.constant 0 : index
    %c10 = arith.constant 10 : index
    %c0_24 = arith.constant 0 : index
    %c0_25 = arith.constant 0 : index
    %21 = vector.load %arg1[%c0_23, %c10, %c0_24, %c0_25] : memref<1x36x9x16xbf16, #tpu.memory_space<vmem>>, vector<1x8x8x16xbf16>
    %22 = vector.shape_cast %21 : vector<1x8x8x16xbf16> to vector<8x8x16xbf16>
    %23 = vector.shape_cast %22 : vector<8x8x16xbf16> to vector<64x16xbf16>
    %c0_26 = arith.constant 0 : index
    %c1_27 = arith.constant 1 : index
    %c1_28 = arith.constant 1 : index
    %c0_29 = arith.constant 0 : index
    %24 = vector.load %arg1[%c0_26, %c1_27, %c1_28, %c0_29] : memref<1x36x9x16xbf16, #tpu.memory_space<vmem>>, vector<1x8x8x16xbf16>
    %25 = vector.shape_cast %24 : vector<1x8x8x16xbf16> to vector<8x8x16xbf16>
    %26 = vector.shape_cast %25 : vector<8x8x16xbf16> to vector<64x16xbf16>
    %27 = tpu.concatenate %2, %5, %8, %11, %14, %17, %20, %23, %26 in 1 : vector<64x16xbf16>, vector<64x16xbf16>, vector<64x16xbf16>, vector<64x16xbf16>, vector<64x16xbf16>, vector<64x16xbf16>, vector<64x16xbf16>, vector<64x16xbf16>, vector<64x16xbf16> -> vector<64x144xbf16>
    %c0_30 = arith.constant 0 : index
    %c0_31 = arith.constant 0 : index
    %28 = vector.load %arg2[%c0_30, %c0_31] : memref<144x32xbf16, #tpu.memory_space<vmem>>, vector<144x32xbf16>
    %cst = arith.constant dense<0.000000e+00> : vector<64x32xf32>
    %29 = tpu.matmul %27, %28, %cst {dimension_numbers = #tpu.dot_dimension_numbers<[1], [0], [0], [1], [0, 0, 1, 1], [], []>} : vector<64x144xbf16>, vector<144x32xbf16>, vector<64x32xf32> -> vector<64x32xf32>
    %c0_32 = arith.constant 0 : index
    %c0_33 = arith.constant 0 : index
    %30 = vector.load %arg3[%c0_32, %c0_33] : memref<1x32xf32, #tpu.memory_space<vmem>>, vector<1x32xf32>
    %31 = vector.broadcast %30 : vector<1x32xf32> to vector<64x32xf32>
    %32 = arith.addf %29, %31 : vector<64x32xf32>
    %33 = arith.negf %32 : vector<64x32xf32>
    %34 = math.exp %33 : vector<64x32xf32>
    %cst_34 = arith.constant 1.000000e+00 : f32
    %35 = vector.broadcast %cst_34 : f32 to vector<64x32xf32>
    %36 = arith.addf %35, %34 : vector<64x32xf32>
    %37 = arith.divf %35, %36 : vector<64x32xf32>
    %38 = arith.mulf %32, %37 : vector<64x32xf32>
    %39 = arith.truncf %38 : vector<64x32xf32> to vector<64x32xbf16>
    %c0_35 = arith.constant 0 : index
    %c0_36 = arith.constant 0 : index
    %c0_37 = arith.constant 0 : index
    %40 = vector.load %arg4[%c0_35, %c0_36, %c0_37] : memref<1x64x32xbf16, #tpu.memory_space<vmem>>, vector<1x64x32xbf16>
    %41 = vector.shape_cast %40 : vector<1x64x32xbf16> to vector<64x32xbf16>
    %42 = vector.shape_cast %39 : vector<64x32xbf16> to vector<1x64x32xbf16>
    tpu.vector_store %arg4[%c0_35, %c0_36, %c0_37], %42 {strides = array<i32>} : memref<1x64x32xbf16, #tpu.memory_space<vmem>>, vector<1x64x32xbf16>,
    return
  }
  func.func @transform_0(%arg0: i32) -> (i32, i32, i32, i32) {
    %c0_i32 = arith.constant 0 : i32
    %c0_i32_0 = arith.constant 0 : i32
    %c0_i32_1 = arith.constant 0 : i32
    %c0_i32_2 = arith.constant 0 : i32
    return %arg0, %c0_i32, %c0_i32_0, %c0_i32_1 : i32, i32, i32, i32
  }
  func.func @transform_1(%arg0: i32) -> (i32, i32) {
    %c0_i32 = arith.constant 0 : i32
    %c0_i32_0 = arith.constant 0 : i32
    %c0_i32_1 = arith.constant 0 : i32
    return %c0_i32, %c0_i32_0 : i32, i32
  }
  func.func @transform_2(%arg0: i32) -> (i32, i32) {
    %c0_i32 = arith.constant 0 : i32
    %c0_i32_0 = arith.constant 0 : i32
    %c0_i32_1 = arith.constant 0 : i32
    return %c0_i32, %c0_i32_0 : i32, i32
  }
  func.func @transform_3(%arg0: i32) -> (i32, i32, i32) {
    %c0_i32 = arith.constant 0 : i32
    %c0_i32_0 = arith.constant 0 : i32
    %c0_i32_1 = arith.constant 0 : i32
    return %arg0, %c0_i32, %c0_i32_0 : i32, i32, i32
  }
}

module attributes {stable_mosaic.version = 11 : i64} {
  func.func @kernel(%arg0: i32, %arg1: memref<1x64x32xbf16, #tpu.memory_space<vmem>>, %arg2: memref<32x16xbf16, #tpu.memory_space<vmem>>, %arg3: memref<1x16xf32, #tpu.memory_space<vmem>>, %arg4: memref<32x16xbf16, #tpu.memory_space<vmem>>, %arg5: memref<1x16xf32, #tpu.memory_space<vmem>>, %arg6: memref<16x16xbf16, #tpu.memory_space<vmem>>, %arg7: memref<1x16xf32, #tpu.memory_space<vmem>>, %arg8: memref<144x16xbf16, #tpu.memory_space<vmem>>, %arg9: memref<1x16xf32, #tpu.memory_space<vmem>>, %arg10: memref<16x32xbf16, #tpu.memory_space<vmem>>, %arg11: memref<16x32xbf16, #tpu.memory_space<vmem>>, %arg12: memref<1x32xf32, #tpu.memory_space<vmem>>, %arg13: memref<32x128xf32, #tpu.memory_space<vmem>>, %arg14: memref<1x128xf32, #tpu.memory_space<vmem>>, %arg15: memref<1x1x128xf32, #tpu.memory_space<vmem>>, %arg16: memref<10x10x16xbf16, #tpu.memory_space<vmem>>) attributes {dimension_semantics = [#tpu.dimension_semantics<parallel>], iteration_bounds = array<i64: 2>, scalar_prefetch = 0 : i64, scratch_operands = 1 : i64, tpu.core_type = #tpu.core_type<tc>, window_params = [{transform_indices = @transform_0, window_bounds = array<i64: 1, 64, 32>}, {pipeline_mode = #tpu.pipeline_mode<synchronous>, transform_indices = @transform_1, window_bounds = array<i64: 32, 16>}, {pipeline_mode = #tpu.pipeline_mode<synchronous>, transform_indices = @transform_2, window_bounds = array<i64: 1, 16>}, {pipeline_mode = #tpu.pipeline_mode<synchronous>, transform_indices = @transform_3, window_bounds = array<i64: 32, 16>}, {pipeline_mode = #tpu.pipeline_mode<synchronous>, transform_indices = @transform_4, window_bounds = array<i64: 1, 16>}, {pipeline_mode = #tpu.pipeline_mode<synchronous>, transform_indices = @transform_5, window_bounds = array<i64: 16, 16>}, {pipeline_mode = #tpu.pipeline_mode<synchronous>, transform_indices = @transform_6, window_bounds = array<i64: 1, 16>}, {pipeline_mode = #tpu.pipeline_mode<synchronous>, transform_indices = @transform_7, window_bounds = array<i64: 144, 16>}, {pipeline_mode = #tpu.pipeline_mode<synchronous>, transform_indices = @transform_8, window_bounds = array<i64: 1, 16>}, {pipeline_mode = #tpu.pipeline_mode<synchronous>, transform_indices = @transform_9, window_bounds = array<i64: 16, 32>}, {pipeline_mode = #tpu.pipeline_mode<synchronous>, transform_indices = @transform_10, window_bounds = array<i64: 16, 32>}, {pipeline_mode = #tpu.pipeline_mode<synchronous>, transform_indices = @transform_11, window_bounds = array<i64: 1, 32>}, {pipeline_mode = #tpu.pipeline_mode<synchronous>, transform_indices = @transform_12, window_bounds = array<i64: 32, 128>}, {pipeline_mode = #tpu.pipeline_mode<synchronous>, transform_indices = @transform_13, window_bounds = array<i64: 1, 128>}, {transform_indices = @transform_14, window_bounds = array<i64: 1, 1, 128>}]} {
    %c0 = arith.constant 0 : index
    %c0_0 = arith.constant 0 : index
    %c0_1 = arith.constant 0 : index
    %0 = vector.load %arg1[%c0, %c0_0, %c0_1] : memref<1x64x32xbf16, #tpu.memory_space<vmem>>, vector<1x64x32xbf16>
    %1 = vector.shape_cast %0 : vector<1x64x32xbf16> to vector<64x32xbf16>
    %c0_2 = arith.constant 0 : index
    %c0_3 = arith.constant 0 : index
    %2 = vector.load %arg2[%c0_2, %c0_3] : memref<32x16xbf16, #tpu.memory_space<vmem>>, vector<32x16xbf16>
    %cst = arith.constant dense<0.000000e+00> : vector<64x16xf32>
    %3 = tpu.matmul %1, %2, %cst {dimension_numbers = #tpu.dot_dimension_numbers<[1], [0], [0], [1], [0, 0, 1, 1], [], []>} : vector<64x32xbf16>, vector<32x16xbf16>, vector<64x16xf32> -> vector<64x16xf32>
    %c0_4 = arith.constant 0 : index
    %c0_5 = arith.constant 0 : index
    %4 = vector.load %arg3[%c0_4, %c0_5] : memref<1x16xf32, #tpu.memory_space<vmem>>, vector<1x16xf32>
    %5 = vector.broadcast %4 : vector<1x16xf32> to vector<64x16xf32>
    %6 = arith.addf %3, %5 : vector<64x16xf32>
    %7 = arith.negf %6 : vector<64x16xf32>
    %8 = math.exp %7 : vector<64x16xf32>
    %cst_6 = arith.constant 1.000000e+00 : f32
    %9 = vector.broadcast %cst_6 : f32 to vector<64x16xf32>
    %10 = arith.addf %9, %8 : vector<64x16xf32>
    %11 = arith.divf %9, %10 : vector<64x16xf32>
    %12 = arith.mulf %6, %11 : vector<64x16xf32>
    %c0_7 = arith.constant 0 : index
    %c0_8 = arith.constant 0 : index
    %13 = vector.load %arg4[%c0_7, %c0_8] : memref<32x16xbf16, #tpu.memory_space<vmem>>, vector<32x16xbf16>
    %cst_9 = arith.constant dense<0.000000e+00> : vector<64x16xf32>
    %14 = tpu.matmul %1, %13, %cst_9 {dimension_numbers = #tpu.dot_dimension_numbers<[1], [0], [0], [1], [0, 0, 1, 1], [], []>} : vector<64x32xbf16>, vector<32x16xbf16>, vector<64x16xf32> -> vector<64x16xf32>
    %c0_10 = arith.constant 0 : index
    %c0_11 = arith.constant 0 : index
    %15 = vector.load %arg5[%c0_10, %c0_11] : memref<1x16xf32, #tpu.memory_space<vmem>>, vector<1x16xf32>
    %16 = vector.broadcast %15 : vector<1x16xf32> to vector<64x16xf32>
    %17 = arith.addf %14, %16 : vector<64x16xf32>
    %18 = arith.negf %17 : vector<64x16xf32>
    %19 = math.exp %18 : vector<64x16xf32>
    %cst_12 = arith.constant 1.000000e+00 : f32
    %20 = vector.broadcast %cst_12 : f32 to vector<64x16xf32>
    %21 = arith.addf %20, %19 : vector<64x16xf32>
    %22 = arith.divf %20, %21 : vector<64x16xf32>
    %23 = arith.mulf %17, %22 : vector<64x16xf32>
    %24 = arith.truncf %12 : vector<64x16xf32> to vector<64x16xbf16>
    %c0_13 = arith.constant 0 : index
    %c0_14 = arith.constant 0 : index
    %25 = vector.load %arg6[%c0_13, %c0_14] : memref<16x16xbf16, #tpu.memory_space<vmem>>, vector<16x16xbf16>
    %cst_15 = arith.constant dense<0.000000e+00> : vector<64x16xf32>
    %26 = tpu.matmul %24, %25, %cst_15 {dimension_numbers = #tpu.dot_dimension_numbers<[1], [0], [0], [1], [0, 0, 1, 1], [], []>} : vector<64x16xbf16>, vector<16x16xbf16>, vector<64x16xf32> -> vector<64x16xf32>
    %c0_16 = arith.constant 0 : index
    %c0_17 = arith.constant 0 : index
    %27 = vector.load %arg7[%c0_16, %c0_17] : memref<1x16xf32, #tpu.memory_space<vmem>>, vector<1x16xf32>
    %28 = vector.broadcast %27 : vector<1x16xf32> to vector<64x16xf32>
    %29 = arith.addf %26, %28 : vector<64x16xf32>
    %30 = arith.negf %29 : vector<64x16xf32>
    %31 = math.exp %30 : vector<64x16xf32>
    %cst_18 = arith.constant 1.000000e+00 : f32
    %32 = vector.broadcast %cst_18 : f32 to vector<64x16xf32>
    %33 = arith.addf %32, %31 : vector<64x16xf32>
    %34 = arith.divf %32, %33 : vector<64x16xf32>
    %35 = arith.mulf %29, %34 : vector<64x16xf32>
    %cst_19 = arith.constant 0.000000e+00 : bf16
    %36 = vector.broadcast %cst_19 : bf16 to vector<10x10x16xbf16>
    %c0_20 = arith.constant 0 : index
    %c0_21 = arith.constant 0 : index
    %c0_22 = arith.constant 0 : index
    %37 = vector.load %arg16[%c0_20, %c0_21, %c0_22] : memref<10x10x16xbf16, #tpu.memory_space<vmem>>, vector<10x10x16xbf16>
    tpu.vector_store %arg16[%c0_20, %c0_21, %c0_22], %36 {strides = array<i32>} : memref<10x10x16xbf16, #tpu.memory_space<vmem>>, vector<10x10x16xbf16>,
    %38 = vector.shape_cast %35 : vector<64x16xf32> to vector<8x8x16xf32>
    %39 = arith.truncf %38 : vector<8x8x16xf32> to vector<8x8x16xbf16>
    %c1 = arith.constant 1 : index
    %c1_23 = arith.constant 1 : index
    %c0_24 = arith.constant 0 : index
    %40 = vector.load %arg16[%c1, %c1_23, %c0_24] : memref<10x10x16xbf16, #tpu.memory_space<vmem>>, vector<8x8x16xbf16>
    tpu.vector_store %arg16[%c1, %c1_23, %c0_24], %39 {strides = array<i32>} : memref<10x10x16xbf16, #tpu.memory_space<vmem>>, vector<8x8x16xbf16>,
    %c0_25 = arith.constant 0 : index
    %c0_26 = arith.constant 0 : index
    %c0_27 = arith.constant 0 : index
    %41 = vector.load %arg16[%c0_25, %c0_26, %c0_27] : memref<10x10x16xbf16, #tpu.memory_space<vmem>>, vector<8x8x16xbf16>
    %42 = vector.shape_cast %41 : vector<8x8x16xbf16> to vector<64x16xbf16>
    %c0_28 = arith.constant 0 : index
    %c1_29 = arith.constant 1 : index
    %c0_30 = arith.constant 0 : index
    %43 = vector.load %arg16[%c0_28, %c1_29, %c0_30] : memref<10x10x16xbf16, #tpu.memory_space<vmem>>, vector<8x8x16xbf16>
    %44 = vector.shape_cast %43 : vector<8x8x16xbf16> to vector<64x16xbf16>
    %c0_31 = arith.constant 0 : index
    %c2 = arith.constant 2 : index
    %c0_32 = arith.constant 0 : index
    %45 = vector.load %arg16[%c0_31, %c2, %c0_32] : memref<10x10x16xbf16, #tpu.memory_space<vmem>>, vector<8x8x16xbf16>
    %46 = vector.shape_cast %45 : vector<8x8x16xbf16> to vector<64x16xbf16>
    %c1_33 = arith.constant 1 : index
    %c0_34 = arith.constant 0 : index
    %c0_35 = arith.constant 0 : index
    %47 = vector.load %arg16[%c1_33, %c0_34, %c0_35] : memref<10x10x16xbf16, #tpu.memory_space<vmem>>, vector<8x8x16xbf16>
    %48 = vector.shape_cast %47 : vector<8x8x16xbf16> to vector<64x16xbf16>
    %c1_36 = arith.constant 1 : index
    %c1_37 = arith.constant 1 : index
    %c0_38 = arith.constant 0 : index
    %49 = vector.load %arg16[%c1_36, %c1_37, %c0_38] : memref<10x10x16xbf16, #tpu.memory_space<vmem>>, vector<8x8x16xbf16>
    %50 = vector.shape_cast %49 : vector<8x8x16xbf16> to vector<64x16xbf16>
    %c1_39 = arith.constant 1 : index
    %c2_40 = arith.constant 2 : index
    %c0_41 = arith.constant 0 : index
    %51 = vector.load %arg16[%c1_39, %c2_40, %c0_41] : memref<10x10x16xbf16, #tpu.memory_space<vmem>>, vector<8x8x16xbf16>
    %52 = vector.shape_cast %51 : vector<8x8x16xbf16> to vector<64x16xbf16>
    %c2_42 = arith.constant 2 : index
    %c0_43 = arith.constant 0 : index
    %c0_44 = arith.constant 0 : index
    %53 = vector.load %arg16[%c2_42, %c0_43, %c0_44] : memref<10x10x16xbf16, #tpu.memory_space<vmem>>, vector<8x8x16xbf16>
    %54 = vector.shape_cast %53 : vector<8x8x16xbf16> to vector<64x16xbf16>
    %c2_45 = arith.constant 2 : index
    %c1_46 = arith.constant 1 : index
    %c0_47 = arith.constant 0 : index
    %55 = vector.load %arg16[%c2_45, %c1_46, %c0_47] : memref<10x10x16xbf16, #tpu.memory_space<vmem>>, vector<8x8x16xbf16>
    %56 = vector.shape_cast %55 : vector<8x8x16xbf16> to vector<64x16xbf16>
    %c2_48 = arith.constant 2 : index
    %c2_49 = arith.constant 2 : index
    %c0_50 = arith.constant 0 : index
    %57 = vector.load %arg16[%c2_48, %c2_49, %c0_50] : memref<10x10x16xbf16, #tpu.memory_space<vmem>>, vector<8x8x16xbf16>
    %58 = vector.shape_cast %57 : vector<8x8x16xbf16> to vector<64x16xbf16>
    %59 = tpu.concatenate %42, %44, %46, %48, %50, %52, %54, %56, %58 in 1 : vector<64x16xbf16>, vector<64x16xbf16>, vector<64x16xbf16>, vector<64x16xbf16>, vector<64x16xbf16>, vector<64x16xbf16>, vector<64x16xbf16>, vector<64x16xbf16>, vector<64x16xbf16> -> vector<64x144xbf16>
    %c0_51 = arith.constant 0 : index
    %c0_52 = arith.constant 0 : index
    %60 = vector.load %arg8[%c0_51, %c0_52] : memref<144x16xbf16, #tpu.memory_space<vmem>>, vector<144x16xbf16>
    %cst_53 = arith.constant dense<0.000000e+00> : vector<64x16xf32>
    %61 = tpu.matmul %59, %60, %cst_53 {dimension_numbers = #tpu.dot_dimension_numbers<[1], [0], [0], [1], [0, 0, 1, 1], [], []>} : vector<64x144xbf16>, vector<144x16xbf16>, vector<64x16xf32> -> vector<64x16xf32>
    %c0_54 = arith.constant 0 : index
    %c0_55 = arith.constant 0 : index
    %62 = vector.load %arg9[%c0_54, %c0_55] : memref<1x16xf32, #tpu.memory_space<vmem>>, vector<1x16xf32>
    %63 = vector.broadcast %62 : vector<1x16xf32> to vector<64x16xf32>
    %64 = arith.addf %61, %63 : vector<64x16xf32>
    %65 = arith.negf %64 : vector<64x16xf32>
    %66 = math.exp %65 : vector<64x16xf32>
    %cst_56 = arith.constant 1.000000e+00 : f32
    %67 = vector.broadcast %cst_56 : f32 to vector<64x16xf32>
    %68 = arith.addf %67, %66 : vector<64x16xf32>
    %69 = arith.divf %67, %68 : vector<64x16xf32>
    %70 = arith.mulf %64, %69 : vector<64x16xf32>
    %71 = arith.addf %70, %12 : vector<64x16xf32>
    %72 = arith.truncf %71 : vector<64x16xf32> to vector<64x16xbf16>
    %c0_57 = arith.constant 0 : index
    %c0_58 = arith.constant 0 : index
    %73 = vector.load %arg10[%c0_57, %c0_58] : memref<16x32xbf16, #tpu.memory_space<vmem>>, vector<16x32xbf16>
    %cst_59 = arith.constant dense<0.000000e+00> : vector<64x32xf32>
    %74 = tpu.matmul %72, %73, %cst_59 {dimension_numbers = #tpu.dot_dimension_numbers<[1], [0], [0], [1], [0, 0, 1, 1], [], []>} : vector<64x16xbf16>, vector<16x32xbf16>, vector<64x32xf32> -> vector<64x32xf32>
    %75 = arith.truncf %23 : vector<64x16xf32> to vector<64x16xbf16>
    %c0_60 = arith.constant 0 : index
    %c0_61 = arith.constant 0 : index
    %76 = vector.load %arg11[%c0_60, %c0_61] : memref<16x32xbf16, #tpu.memory_space<vmem>>, vector<16x32xbf16>
    %cst_62 = arith.constant dense<0.000000e+00> : vector<64x32xf32>
    %77 = tpu.matmul %75, %76, %cst_62 {dimension_numbers = #tpu.dot_dimension_numbers<[1], [0], [0], [1], [0, 0, 1, 1], [], []>} : vector<64x16xbf16>, vector<16x32xbf16>, vector<64x32xf32> -> vector<64x32xf32>
    %78 = arith.addf %74, %77 : vector<64x32xf32>
    %c0_63 = arith.constant 0 : index
    %c0_64 = arith.constant 0 : index
    %79 = vector.load %arg12[%c0_63, %c0_64] : memref<1x32xf32, #tpu.memory_space<vmem>>, vector<1x32xf32>
    %80 = vector.broadcast %79 : vector<1x32xf32> to vector<64x32xf32>
    %81 = arith.addf %78, %80 : vector<64x32xf32>
    %82 = arith.negf %81 : vector<64x32xf32>
    %83 = math.exp %82 : vector<64x32xf32>
    %cst_65 = arith.constant 1.000000e+00 : f32
    %84 = vector.broadcast %cst_65 : f32 to vector<64x32xf32>
    %85 = arith.addf %84, %83 : vector<64x32xf32>
    %86 = arith.divf %84, %85 : vector<64x32xf32>
    %87 = arith.mulf %81, %86 : vector<64x32xf32>
    %cst_66 = arith.constant dense<0.000000e+00> : vector<32xf32>
    %88 = vector.multi_reduction <add>, %87, %cst_66 [0] : vector<64x32xf32> to vector<32xf32>
    %89 = vector.shape_cast %88 : vector<32xf32> to vector<1x32xf32>
    %cst_67 = arith.constant 1.562500e-02 : f32
    %90 = vector.broadcast %cst_67 : f32 to vector<1x32xf32>
    %91 = arith.mulf %89, %90 : vector<1x32xf32>
    %c0_68 = arith.constant 0 : index
    %c0_69 = arith.constant 0 : index
    %92 = vector.load %arg13[%c0_68, %c0_69] : memref<32x128xf32, #tpu.memory_space<vmem>>, vector<32x128xf32>
    %cst_70 = arith.constant dense<0.000000e+00> : vector<1x128xf32>
    %93 = tpu.matmul %91, %92, %cst_70 {dimension_numbers = #tpu.dot_dimension_numbers<[1], [0], [0], [1], [0, 0, 1, 1], [], []>} : vector<1x32xf32>, vector<32x128xf32>, vector<1x128xf32> -> vector<1x128xf32>
    %c0_71 = arith.constant 0 : index
    %c0_72 = arith.constant 0 : index
    %94 = vector.load %arg14[%c0_71, %c0_72] : memref<1x128xf32, #tpu.memory_space<vmem>>, vector<1x128xf32>
    %95 = arith.addf %93, %94 : vector<1x128xf32>
    %c0_73 = arith.constant 0 : index
    %c0_74 = arith.constant 0 : index
    %c0_75 = arith.constant 0 : index
    %96 = vector.load %arg15[%c0_73, %c0_74, %c0_75] : memref<1x1x128xf32, #tpu.memory_space<vmem>>, vector<1x1x128xf32>
    %97 = vector.shape_cast %96 : vector<1x1x128xf32> to vector<1x128xf32>
    %98 = vector.shape_cast %95 : vector<1x128xf32> to vector<1x1x128xf32>
    tpu.vector_store %arg15[%c0_73, %c0_74, %c0_75], %98 {strides = array<i32>} : memref<1x1x128xf32, #tpu.memory_space<vmem>>, vector<1x1x128xf32>,
    return
  }
  func.func @transform_0(%arg0: i32) -> (i32, i32, i32) {
    %c0_i32 = arith.constant 0 : i32
    %c0_i32_0 = arith.constant 0 : i32
    %c0_i32_1 = arith.constant 0 : i32
    return %arg0, %c0_i32, %c0_i32_0 : i32, i32, i32
  }
  func.func @transform_1(%arg0: i32) -> (i32, i32) {
    %c0_i32 = arith.constant 0 : i32
    %c0_i32_0 = arith.constant 0 : i32
    %c0_i32_1 = arith.constant 0 : i32
    return %c0_i32, %c0_i32_0 : i32, i32
  }
  func.func @transform_2(%arg0: i32) -> (i32, i32) {
    %c0_i32 = arith.constant 0 : i32
    %c0_i32_0 = arith.constant 0 : i32
    %c0_i32_1 = arith.constant 0 : i32
    return %c0_i32, %c0_i32_0 : i32, i32
  }
  func.func @transform_3(%arg0: i32) -> (i32, i32) {
    %c0_i32 = arith.constant 0 : i32
    %c0_i32_0 = arith.constant 0 : i32
    %c0_i32_1 = arith.constant 0 : i32
    return %c0_i32, %c0_i32_0 : i32, i32
  }
  func.func @transform_4(%arg0: i32) -> (i32, i32) {
    %c0_i32 = arith.constant 0 : i32
    %c0_i32_0 = arith.constant 0 : i32
    %c0_i32_1 = arith.constant 0 : i32
    return %c0_i32, %c0_i32_0 : i32, i32
  }
  func.func @transform_5(%arg0: i32) -> (i32, i32) {
    %c0_i32 = arith.constant 0 : i32
    %c0_i32_0 = arith.constant 0 : i32
    %c0_i32_1 = arith.constant 0 : i32
    return %c0_i32, %c0_i32_0 : i32, i32
  }
  func.func @transform_6(%arg0: i32) -> (i32, i32) {
    %c0_i32 = arith.constant 0 : i32
    %c0_i32_0 = arith.constant 0 : i32
    %c0_i32_1 = arith.constant 0 : i32
    return %c0_i32, %c0_i32_0 : i32, i32
  }
  func.func @transform_7(%arg0: i32) -> (i32, i32) {
    %c0_i32 = arith.constant 0 : i32
    %c0_i32_0 = arith.constant 0 : i32
    %c0_i32_1 = arith.constant 0 : i32
    return %c0_i32, %c0_i32_0 : i32, i32
  }
  func.func @transform_8(%arg0: i32) -> (i32, i32) {
    %c0_i32 = arith.constant 0 : i32
    %c0_i32_0 = arith.constant 0 : i32
    %c0_i32_1 = arith.constant 0 : i32
    return %c0_i32, %c0_i32_0 : i32, i32
  }
  func.func @transform_9(%arg0: i32) -> (i32, i32) {
    %c0_i32 = arith.constant 0 : i32
    %c0_i32_0 = arith.constant 0 : i32
    %c0_i32_1 = arith.constant 0 : i32
    return %c0_i32, %c0_i32_0 : i32, i32
  }
  func.func @transform_10(%arg0: i32) -> (i32, i32) {
    %c0_i32 = arith.constant 0 : i32
    %c0_i32_0 = arith.constant 0 : i32
    %c0_i32_1 = arith.constant 0 : i32
    return %c0_i32, %c0_i32_0 : i32, i32
  }
  func.func @transform_11(%arg0: i32) -> (i32, i32) {
    %c0_i32 = arith.constant 0 : i32
    %c0_i32_0 = arith.constant 0 : i32
    %c0_i32_1 = arith.constant 0 : i32
    return %c0_i32, %c0_i32_0 : i32, i32
  }
  func.func @transform_12(%arg0: i32) -> (i32, i32) {
    %c0_i32 = arith.constant 0 : i32
    %c0_i32_0 = arith.constant 0 : i32
    %c0_i32_1 = arith.constant 0 : i32
    return %c0_i32, %c0_i32_0 : i32, i32
  }
  func.func @transform_13(%arg0: i32) -> (i32, i32) {
    %c0_i32 = arith.constant 0 : i32
    %c0_i32_0 = arith.constant 0 : i32
    %c0_i32_1 = arith.constant 0 : i32
    return %c0_i32, %c0_i32_0 : i32, i32
  }
  func.func @transform_14(%arg0: i32) -> (i32, i32, i32) {
    %c0_i32 = arith.constant 0 : i32
    %c0_i32_0 = arith.constant 0 : i32
    %c0_i32_1 = arith.constant 0 : i32
    return %arg0, %c0_i32, %c0_i32_0 : i32, i32, i32
  }
}

</mosaic_0001>

<llo_original>
// kernel: yolov5_forward.4
$region0: #{yolov5_forward.4}
  #allocation0 [shape = 'u32[]', space=smem, size = 0x4, offset = 0x4, fixed_abs, tag = 'smem constant byte address 0x4 - core index']
  #allocation1 [shape = 'u32[144,128]{1,0:T(1,128)}', space=vmem, size = 0x12000, scoped, tag = 'internal scratch']
  %s0 = inlined_call_operand.vmem [shape: bf16[2,36,9,16], index: 0, kind: input, shape index: {}]
  %s1 = inlined_call_operand.vmem [shape: bf16[144,32], index: 1, kind: input, shape index: {}]
  %s2 = inlined_call_operand.vmem [shape: f32[1,32], index: 2, kind: input, shape index: {}]
  %s3 = inlined_call_operand.vmem [shape: bf16[2,64,32], index: 3, kind: output, shape index: {}]
  %s4 = sld [smem:[#allocation0]]
  $region45: #{yolov5_forward.4} parent=0
    _
  %s6 = ssub.s32 1, %s4
  %s7 = scalar_select 0, %s6, %s4
  loop: start=0, step=1, limit=4
  $region2: #{yolov5_forward.4} parent=0 // loop_pre_header
    _
  $region3: #{yolov5_forward.4} parent=0 // loop_header
    %s9 = sphi 0, %s13
    %p10 = scmp.ge.s32.totalorder %s9, 4
    %s19 = sphi 0, %s21
    %s22 = sphi 0, %s19
    %s23 = sphi 0, %s22
    %s39 = sphi 0, %s23
    %s43 = sphi 0, %s43
    %s45 = sphi 0, %s43
    %s46 = sphi 0, %s45
    %s60 = sphi 0, %s46
    %s64 = sphi 0, %s64
    %s66 = sphi 0, %s64
    %s67 = sphi 0, %s66
    %s81 = sphi 0, %s67
    %s87 = sphi 0, %s89
    %s90 = sphi 0, %s87
    %s91 = sphi 0, %s90
    %s107 = sphi 0, %s91
  $region4: #{yolov5_forward.4} parent=0 // loop_header_branch
    %12 = sbr.rel (%p10) target = $region8
  $region5: #{yolov5_forward.4} parent=0 // loop_body
    %s14 = ssub.s32 %s9, 1
    %s15 = ssub.s32 %s9, 2
    %s16 = sadd.s32 %s9, 1
    %s17 = ssub.s32 %s9, %s16
    %p18 = scmp.eq.s32.totalorder %s17, 0
    %s20 = sadd.s32 %s19, 1
    %s21 = scalar_select %p18, %s19, %s20
    %p24 = pneg %p18
    %p25 = scmp.eq.s32.totalorder %s9, 1
    %p26 = por %p24, %p25
    %p27 = scmp.ne.s32.totalorder %s19, %s22
    %p28 = scmp.eq.s32.totalorder %s9, 0
    %p29 = por %p27, %p28
    %p30 = scmp.ne.s32.totalorder %s19, %s22
    %p31 = scmp.eq.s32.totalorder %s14, 1
    %p32 = por %p30, %p31
    %p33 = scmp.ne.s32.totalorder %s22, %s23
    %p34 = scmp.eq.s32.totalorder %s14, 0
    %p35 = por %p33, %p34
    %p36 = scmp.ne.s32.totalorder %s22, %s23
    %p37 = scmp.eq.s32.totalorder %s15, 1
    %p38 = por %p36, %p37
    %p40 = scmp.ne.s32.totalorder %s23, %s39
    %p41 = scmp.eq.s32.totalorder %s15, 0
    %p42 = por %p40, %p41
    %s44 = sadd.s32 %s43, 1
    %p47 = scmp.eq.s32.totalorder %s9, 1
    %p48 = scmp.ne.s32.totalorder %s43, %s45
    %p49 = scmp.eq.s32.totalorder %s9, 0
    %p50 = por %p48, %p49
    %p51 = scmp.ne.s32.totalorder %s43, %s45
    %p52 = scmp.eq.s32.totalorder %s14, 1
    %p53 = por %p51, %p52
    %p54 = scmp.ne.s32.totalorder %s45, %s46
    %p55 = scmp.eq.s32.totalorder %s14, 0
    %p56 = por %p54, %p55
    %p57 = scmp.ne.s32.totalorder %s45, %s46
    %p58 = scmp.eq.s32.totalorder %s15, 1
    %p59 = por %p57, %p58
    %p61 = scmp.ne.s32.totalorder %s46, %s60
    %p62 = scmp.eq.s32.totalorder %s15, 0
    %p63 = por %p61, %p62
    %s65 = sadd.s32 %s64, 1
    %p68 = scmp.eq.s32.totalorder %s9, 1
    %p69 = scmp.ne.s32.totalorder %s64, %s66
    %p70 = scmp.eq.s32.totalorder %s9, 0
    %p71 = por %p69, %p70
    %p72 = scmp.ne.s32.totalorder %s64, %s66
    %p73 = scmp.eq.s32.totalorder %s14, 1
    %p74 = por %p72, %p73
    %p75 = scmp.ne.s32.totalorder %s66, %s67
    %p76 = scmp.eq.s32.totalorder %s14, 0
    %p77 = por %p75, %p76
    %p78 = scmp.ne.s32.totalorder %s66, %s67
    %p79 = scmp.eq.s32.totalorder %s15, 1
    %p80 = por %p78, %p79
    %p82 = scmp.ne.s32.totalorder %s67, %s81
    %p83 = scmp.eq.s32.totalorder %s15, 0
    %p84 = por %p82, %p83
    %s85 = ssub.s32 %s9, %s16
    %p86 = scmp.eq.s32.totalorder %s85, 0
    %s88 = sadd.s32 %s87, 1
    %s89 = scalar_select %p86, %s87, %s88
    %p92 = pneg %p86
    %p93 = scmp.eq.s32.totalorder %s9, 1
    %p94 = por %p92, %p93
    %p95 = scmp.ne.s32.totalorder %s87, %s90
    %p96 = scmp.eq.s32.totalorder %s9, 0
    %p97 = por %p95, %p96
    %p98 = scmp.ne.s32.totalorder %s87, %s90
    %p99 = scmp.eq.s32.totalorder %s14, 1
    %p100 = por %p98, %p99
    %p101 = scmp.ne.s32.totalorder %s90, %s91
    %p102 = scmp.eq.s32.totalorder %s14, 0
    %p103 = por %p101, %p102
    %p104 = scmp.ne.s32.totalorder %s90, %s91
    %p105 = scmp.eq.s32.totalorder %s15, 1
    %p106 = por %p104, %p105
    %p108 = scmp.ne.s32.totalorder %s91, %s107
    %p109 = scmp.eq.s32.totalorder %s15, 0
    %p110 = por %p108, %p109
    %p111 = scmp.le.s32.totalorder 1, %s9
    %p112 = scmp.lt.s32.totalorder %s9, 3
    %p113 = pnand %p111, %p112
    %p114 = pneg %p113
    // Predicated region
    $region9: #{yolov5_forward.4} parent=5 // pred_check
      _
    $region10: #{yolov5_forward.4} parent=5 // pred_check_branch
      %116 = sbr.rel (%p113) target = $region12
    $region11: #{yolov5_forward.4} parent=5 // pred_region
      %s117 = ssub.s32 %s9, 1
      // Predicated region
      $region13: #{yolov5_forward.4} parent=11 // pred_check
        %p118 = pneg %p56
      $region14: #{yolov5_forward.4} parent=11 // pred_check_branch
        %120 = sbr.rel (%p118) target = $region16
      $region15: #{yolov5_forward.4} parent=11 // pred_region
        _
      $region16: #{yolov5_forward.4} parent=11 // pred_fallthru
        _
      // Predicated region
      $region17: #{yolov5_forward.4} parent=11 // pred_check
        %p121 = pneg %p77
      $region18: #{yolov5_forward.4} parent=11 // pred_check_branch
        %123 = sbr.rel (%p121) target = $region20
      $region19: #{yolov5_forward.4} parent=11 // pred_region
        _
      $region20: #{yolov5_forward.4} parent=11 // pred_fallthru
        _
    $region12: #{yolov5_forward.4} parent=5 // pred_fallthru
      _
    %p124 = scmp.lt.s32.totalorder %s9, 2
    // Predicated region
    $region21: #{yolov5_forward.4} parent=5 // pred_check
      %p125 = pneg %p124
    $region22: #{yolov5_forward.4} parent=5 // pred_check_branch
      %127 = sbr.rel (%p125) target = $region24
    $region23: #{yolov5_forward.4} parent=5 // pred_region
      // Predicated region
      $region25: #{yolov5_forward.4} parent=23 // pred_check
        %p128 = pneg %p29
      $region26: #{yolov5_forward.4} parent=23 // pred_check_branch
        %130 = sbr.rel (%p128) target = $region28
      $region27: #{yolov5_forward.4} parent=23 // pred_region
        %p131 = scmp.lt.s32.totalorder %s9, 1
        %s132 = scalar_select %p131, %s9, 1
        %s133 = smul.addr %s132, 72
        %s134 = smul.addr %s133, 4
        %s135 = scalar_lea.vmem %s0, %s134
      $region28: #{yolov5_forward.4} parent=23 // pred_fallthru
        _
    $region24: #{yolov5_forward.4} parent=5 // pred_fallthru
      _
    %p136 = scmp.le.s32.totalorder 1, %s9
    %p137 = scmp.lt.s32.totalorder %s9, 3
    %p138 = pnand %p136, %p137
    %p139 = pneg %p138
    // Predicated region
    $region29: #{yolov5_forward.4} parent=5 // pred_check
      _
    $region30: #{yolov5_forward.4} parent=5 // pred_check_branch
      %141 = sbr.rel (%p138) target = $region32
    $region31: #{yolov5_forward.4} parent=5 // pred_region
      %s142 = ssub.s32 %s9, 1
      %p143 = scmp.lt.s32.totalorder %s14, 1
      %s144 = scalar_select %p143, %s14, 1
      %s145 = smul.addr %s144, 72
      %s146 = smul.addr %s145, 4
      %s147 = scalar_lea.vmem %s0, %s146
      %p148 = pneg %p35
      %p149 = pneg %p32
      %p150 = pneg %p56
      %p151 = pneg %p53
      %p152 = pneg %p77
      %p153 = pneg %p74
      %p154 = pneg %p103
      %p155 = pneg %p100
      %p156 = scmp.lt.s32.totalorder %s14, 1
      %s157 = scalar_select %p156, %s14, 1
      %s158 = smul.addr %s157, 8
      %s159 = smul.addr %s158, 4
      %s160 = scalar_lea.vmem %s3, %s159
      %p161 = scmp.lt.s32.totalorder %s14, 1
      %s162 = scalar_select %p161, %s14, 1
      %s163 = smul.addr %s162, 72
      %s164 = smul.addr %s163, 4
      %s165 = scalar_lea.vmem %s0, %s164
      %p166 = scmp.lt.s32.totalorder %s14, 1
      %s167 = scalar_select %p166, %s14, 1
      %s168 = smul.addr %s167, 8
      %s169 = smul.addr %s168, 4
      %s170 = scalar_lea.vmem %s3, %s169
      %v172 = vld [vmem:[%s165] sm:$0xf]
      %v173 = vld [vmem:[%s165 + $0x8] sm:$0xf]
      %v174 = vld [vmem:[%s165 + $0x10] sm:$0xf]
      %v175 = vld [vmem:[%s165 + $0x18] sm:$0xf]
      %v176 = vld [vmem:[%s165 + $0x20] sm:$0xf]
      %v177 = vld [vmem:[%s165 + $0x28] sm:$0xf]
      %v178 = vld [vmem:[%s165 + $0x30] sm:$0xf]
      %v179 = vld [vmem:[%s165 + $0x38] sm:$0xf]
      %s180 = scalar_lea.vmem %s165, 72
      %v181 = vld [vmem:[%s180] sm:$0xf]
      %v182 = vld [vmem:[%s180 + $0x8] sm:$0xf]
      %v183 = vld [vmem:[%s180 + $0x10] sm:$0xf]
      %v184 = vld [vmem:[%s180 + $0x18] sm:$0xf]
      %v185 = vld [vmem:[%s180 + $0x20] sm:$0xf]
      %v186 = vld [vmem:[%s180 + $0x28] sm:$0xf]
      %v187 = vld [vmem:[%s180 + $0x30] sm:$0xf]
      %v188 = vld [vmem:[%s180 + $0x38] sm:$0xf]
      %v189 = vld [vmem:[%s165 + $0x4] sm:$0x1]
      %v190 = vld [vmem:[%s165 + $0xc] sm:$0x1]
      %v191 = vld [vmem:[%s165 + $0x14] sm:$0x1]
      %v192 = vld [vmem:[%s165 + $0x1c] sm:$0x1]
      %v193 = vld [vmem:[%s165 + $0x24] sm:$0x1]
      %v194 = vld [vmem:[%s165 + $0x2c] sm:$0x1]
      %v195 = vld [vmem:[%s165 + $0x34] sm:$0x1]
      %v196 = vld [vmem:[%s165 + $0x3c] sm:$0x1]
      %vm197 = vsmask.f32 3328
      %vm198 = vsmask.f32 7440
      %vm199 = vmor %vm197, %vm198
      %v201 = vshrl.u32 %v172, 16
      %v203 = vrot.slane %v201, 4
      %v204 = vshll.u32 %v172, 16
      %v206 = vrot.slane %v204, 5
      %v207 = vor.u32 %v203, %v206
      %v208 = vrot.slane %v207, 4
      %v210 = vshll.u32 %v189, 16
      %v212 = vrot.slane %v210, 5
      %v213 = vsel %vm199, %v208, %v212
      %v215 = vshrl.u32 %v173, 16
      %v217 = vrot.slane %v215, 4
      %v218 = vshll.u32 %v173, 16
      %v220 = vrot.slane %v218, 5
      %v221 = vor.u32 %v217, %v220
      %v222 = vrot.slane %v221, 4
      %v224 = vshll.u32 %v190, 16
      %v226 = vrot.slane %v224, 5
      %v227 = vsel %vm199, %v222, %v226
      %v229 = vshrl.u32 %v174, 16
      %v231 = vrot.slane %v229, 4
      %v232 = vshll.u32 %v174, 16
      %v234 = vrot.slane %v232, 5
      %v235 = vor.u32 %v231, %v234
      %v236 = vrot.slane %v235, 4
      %v238 = vshll.u32 %v191, 16
      %v240 = vrot.slane %v238, 5
      %v241 = vsel %vm199, %v236, %v240
      %v243 = vshrl.u32 %v175, 16
      %v245 = vrot.slane %v243, 4
      %v246 = vshll.u32 %v175, 16
      %v248 = vrot.slane %v246, 5
      %v249 = vor.u32 %v245, %v248
      %v250 = vrot.slane %v249, 4
      %v252 = vshll.u32 %v192, 16
      %v254 = vrot.slane %v252, 5
      %v255 = vsel %vm199, %v250, %v254
      %v257 = vshrl.u32 %v176, 16
      %v259 = vrot.slane %v257, 4
      %v260 = vshll.u32 %v176, 16
      %v262 = vrot.slane %v260, 5
      %v263 = vor.u32 %v259, %v262
      %v264 = vrot.slane %v263, 4
      %v266 = vshll.u32 %v193, 16
      %v268 = vrot.slane %v266, 5
      %v269 = vsel %vm199, %v264, %v268
      %v271 = vshrl.u32 %v177, 16
      %v273 = vrot.slane %v271, 4
      %v274 = vshll.u32 %v177, 16
      %v276 = vrot.slane %v274, 5
      %v277 = vor.u32 %v273, %v276
      %v278 = vrot.slane %v277, 4
      %v280 = vshll.u32 %v194, 16
      %v282 = vrot.slane %v280, 5
      %v283 = vsel %vm199, %v278, %v282
      %v285 = vshrl.u32 %v178, 16
      %v287 = vrot.slane %v285, 4
      %v288 = vshll.u32 %v178, 16
      %v290 = vrot.slane %v288, 5
      %v291 = vor.u32 %v287, %v290
      %v292 = vrot.slane %v291, 4
      %v294 = vshll.u32 %v195, 16
      %v296 = vrot.slane %v294, 5
      %v297 = vsel %vm199, %v292, %v296
      %v299 = vshrl.u32 %v179, 16
      %v301 = vrot.slane %v299, 4
      %v302 = vshll.u32 %v179, 16
      %v304 = vrot.slane %v302, 5
      %v305 = vor.u32 %v301, %v304
      %v306 = vrot.slane %v305, 4
      %v308 = vshll.u32 %v196, 16
      %v310 = vrot.slane %v308, 5
      %v311 = vsel %vm199, %v306, %v310
      %s312 = scalar_lea.vmem %s165, 144
      %v313 = vld [vmem:[%s312] sm:$0xf]
      %v314 = vld [vmem:[%s312 + $0x8] sm:$0xf]
      %v315 = vld [vmem:[%s312 + $0x10] sm:$0xf]
      %v316 = vld [vmem:[%s312 + $0x18] sm:$0xf]
      %v317 = vld [vmem:[%s312 + $0x20] sm:$0xf]
      %v318 = vld [vmem:[%s312 + $0x28] sm:$0xf]
      %v319 = vld [vmem:[%s312 + $0x30] sm:$0xf]
      %v320 = vld [vmem:[%s312 + $0x38] sm:$0xf]
      %s321 = scalar_lea.vmem %s165, 216
      %v322 = vld [vmem:[%s321] sm:$0xf]
      %v323 = vld [vmem:[%s321 + $0x8] sm:$0xf]
      %v324 = vld [vmem:[%s321 + $0x10] sm:$0xf]
      %v325 = vld [vmem:[%s321 + $0x18] sm:$0xf]
      %v326 = vld [vmem:[%s321 + $0x20] sm:$0xf]
      %v327 = vld [vmem:[%s321 + $0x28] sm:$0xf]
      %v328 = vld [vmem:[%s321 + $0x30] sm:$0xf]
      %v329 = vld [vmem:[%s321 + $0x38] sm:$0xf]
      %v330 = vld [vmem:[%s312 + $0x4] sm:$0x1]
      %v331 = vld [vmem:[%s312 + $0xc] sm:$0x1]
      %v332 = vld [vmem:[%s312 + $0x14] sm:$0x1]
      %v333 = vld [vmem:[%s312 + $0x1c] sm:$0x1]
      %v334 = vld [vmem:[%s312 + $0x24] sm:$0x1]
      %v335 = vld [vmem:[%s312 + $0x2c] sm:$0x1]
      %v336 = vld [vmem:[%s312 + $0x34] sm:$0x1]
      %v337 = vld [vmem:[%s312 + $0x3c] sm:$0x1]
      %v339 = vshrl.u32 %v313, 16
      %v341 = vrot.slane %v339, 4
      %v342 = vshll.u32 %v313, 16
      %v344 = vrot.slane %v342, 5
      %v345 = vor.u32 %v341, %v344
      %v346 = vrot.slane %v345, 4
      %v348 = vshll.u32 %v330, 16
      %v350 = vrot.slane %v348, 5
      %v351 = vsel %vm199, %v346, %v350
      %v353 = vshrl.u32 %v314, 16
      %v355 = vrot.slane %v353, 4
      %v356 = vshll.u32 %v314, 16
      %v358 = vrot.slane %v356, 5
      %v359 = vor.u32 %v355, %v358
      %v360 = vrot.slane %v359, 4
      %v362 = vshll.u32 %v331, 16
      %v364 = vrot.slane %v362, 5
      %v365 = vsel %vm199, %v360, %v364
      %v367 = vshrl.u32 %v315, 16
      %v369 = vrot.slane %v367, 4
      %v370 = vshll.u32 %v315, 16
      %v372 = vrot.slane %v370, 5
      %v373 = vor.u32 %v369, %v372
      %v374 = vrot.slane %v373, 4
      %v376 = vshll.u32 %v332, 16
      %v378 = vrot.slane %v376, 5
      %v379 = vsel %vm199, %v374, %v378
      %v381 = vshrl.u32 %v316, 16
      %v383 = vrot.slane %v381, 4
      %v384 = vshll.u32 %v316, 16
      %v386 = vrot.slane %v384, 5
      %v387 = vor.u32 %v383, %v386
      %v388 = vrot.slane %v387, 4
      %v390 = vshll.u32 %v333, 16
      %v392 = vrot.slane %v390, 5
      %v393 = vsel %vm199, %v388, %v392
      %v395 = vshrl.u32 %v317, 16
      %v397 = vrot.slane %v395, 4
      %v398 = vshll.u32 %v317, 16
      %v400 = vrot.slane %v398, 5
      %v401 = vor.u32 %v397, %v400
      %v402 = vrot.slane %v401, 4
      %v404 = vshll.u32 %v334, 16
      %v406 = vrot.slane %v404, 5
      %v407 = vsel %vm199, %v402, %v406
      %v409 = vshrl.u32 %v318, 16
      %v411 = vrot.slane %v409, 4
      %v412 = vshll.u32 %v318, 16
      %v414 = vrot.slane %v412, 5
      %v415 = vor.u32 %v411, %v414
      %v416 = vrot.slane %v415, 4
      %v418 = vshll.u32 %v335, 16
      %v420 = vrot.slane %v418, 5
      %v421 = vsel %vm199, %v416, %v420
      %v423 = vshrl.u32 %v319, 16
      %v425 = vrot.slane %v423, 4
      %v426 = vshll.u32 %v319, 16
      %v428 = vrot.slane %v426, 5
      %v429 = vor.u32 %v425, %v428
      %v430 = vrot.slane %v429, 4
      %v432 = vshll.u32 %v336, 16
      %v434 = vrot.slane %v432, 5
      %v435 = vsel %vm199, %v430, %v434
      %v437 = vshrl.u32 %v320, 16
      %v439 = vrot.slane %v437, 4
      %v440 = vshll.u32 %v320, 16
      %v442 = vrot.slane %v440, 5
      %v443 = vor.u32 %v439, %v442
      %v444 = vrot.slane %v443, 4
      %v446 = vshll.u32 %v337, 16
      %v448 = vrot.slane %v446, 5
      %v449 = vsel %vm199, %v444, %v448
      %s450 = scalar_lea.vmem %s165, 8
      %v451 = vld [vmem:[%s450] sm:$0xf]
      %v452 = vld [vmem:[%s450 + $0x8] sm:$0xf]
      %v453 = vld [vmem:[%s450 + $0x10] sm:$0xf]
      %v454 = vld [vmem:[%s450 + $0x18] sm:$0xf]
      %v455 = vld [vmem:[%s450 + $0x20] sm:$0xf]
      %v456 = vld [vmem:[%s450 + $0x28] sm:$0xf]
      %v457 = vld [vmem:[%s450 + $0x30] sm:$0xf]
      %v458 = vld [vmem:[%s450 + $0x38] sm:$0xf]
      %s459 = scalar_lea.vmem %s165, 80
      %v460 = vld [vmem:[%s459] sm:$0xf]
      %v461 = vld [vmem:[%s459 + $0x8] sm:$0xf]
      %v462 = vld [vmem:[%s459 + $0x10] sm:$0xf]
      %v463 = vld [vmem:[%s459 + $0x18] sm:$0xf]
      %v464 = vld [vmem:[%s459 + $0x20] sm:$0xf]
      %v465 = vld [vmem:[%s459 + $0x28] sm:$0xf]
      %v466 = vld [vmem:[%s459 + $0x30] sm:$0xf]
      %v467 = vld [vmem:[%s459 + $0x38] sm:$0xf]
      %v468 = vld [vmem:[%s450 + $0x4] sm:$0x1]
      %v469 = vld [vmem:[%s450 + $0xc] sm:$0x1]
      %v470 = vld [vmem:[%s450 + $0x14] sm:$0x1]
      %v471 = vld [vmem:[%s450 + $0x1c] sm:$0x1]
      %v472 = vld [vmem:[%s450 + $0x24] sm:$0x1]
      %v473 = vld [vmem:[%s450 + $0x2c] sm:$0x1]
      %v474 = vld [vmem:[%s450 + $0x34] sm:$0x1]
      %v475 = vld [vmem:[%s450 + $0x3c] sm:$0x1]
      %v477 = vshrl.u32 %v451, 16
      %v479 = vrot.slane %v477, 4
      %v480 = vshll.u32 %v451, 16
      %v482 = vrot.slane %v480, 5
      %v483 = vor.u32 %v479, %v482
      %v484 = vrot.slane %v483, 4
      %v486 = vshll.u32 %v468, 16
      %v488 = vrot.slane %v486, 5
      %v489 = vsel %vm199, %v484, %v488
      %v491 = vshrl.u32 %v452, 16
      %v493 = vrot.slane %v491, 4
      %v494 = vshll.u32 %v452, 16
      %v496 = vrot.slane %v494, 5
      %v497 = vor.u32 %v493, %v496
      %v498 = vrot.slane %v497, 4
      %v500 = vshll.u32 %v469, 16
      %v502 = vrot.slane %v500, 5
      %v503 = vsel %vm199, %v498, %v502
      %v505 = vshrl.u32 %v453, 16
      %v507 = vrot.slane %v505, 4
      %v508 = vshll.u32 %v453, 16
      %v510 = vrot.slane %v508, 5
      %v511 = vor.u32 %v507, %v510
      %v512 = vrot.slane %v511, 4
      %v514 = vshll.u32 %v470, 16
      %v516 = vrot.slane %v514, 5
      %v517 = vsel %vm199, %v512, %v516
      %v519 = vshrl.u32 %v454, 16
      %v521 = vrot.slane %v519, 4
      %v522 = vshll.u32 %v454, 16
      %v524 = vrot.slane %v522, 5
      %v525 = vor.u32 %v521, %v524
      %v526 = vrot.slane %v525, 4
      %v528 = vshll.u32 %v471, 16
      %v530 = vrot.slane %v528, 5
      %v531 = vsel %vm199, %v526, %v530
      %v533 = vshrl.u32 %v455, 16
      %v535 = vrot.slane %v533, 4
      %v536 = vshll.u32 %v455, 16
      %v538 = vrot.slane %v536, 5
      %v539 = vor.u32 %v535, %v538
      %v540 = vrot.slane %v539, 4
      %v542 = vshll.u32 %v472, 16
      %v544 = vrot.slane %v542, 5
      %v545 = vsel %vm199, %v540, %v544
      %v547 = vshrl.u32 %v456, 16
      %v549 = vrot.slane %v547, 4
      %v550 = vshll.u32 %v456, 16
      %v552 = vrot.slane %v550, 5
      %v553 = vor.u32 %v549, %v552
      %v554 = vrot.slane %v553, 4
      %v556 = vshll.u32 %v473, 16
      %v558 = vrot.slane %v556, 5
      %v559 = vsel %vm199, %v554, %v558
      %v561 = vshrl.u32 %v457, 16
      %v563 = vrot.slane %v561, 4
      %v564 = vshll.u32 %v457, 16
      %v566 = vrot.slane %v564, 5
      %v567 = vor.u32 %v563, %v566
      %v568 = vrot.slane %v567, 4
      %v570 = vshll.u32 %v474, 16
      %v572 = vrot.slane %v570, 5
      %v573 = vsel %vm199, %v568, %v572
      %v575 = vshrl.u32 %v458, 16
      %v577 = vrot.slane %v575, 4
      %v578 = vshll.u32 %v458, 16
      %v580 = vrot.slane %v578, 5
      %v581 = vor.u32 %v577, %v580
      %v582 = vrot.slane %v581, 4
      %v584 = vshll.u32 %v475, 16
      %v586 = vrot.slane %v584, 5
      %v587 = vsel %vm199, %v582, %v586
      %v596 = vunpack.c.l.b16 %v172
      %v597 = vunpack.c.l.b16 %v173
      %v598 = vunpack.c.l.b16 %v174
      %v599 = vunpack.c.l.b16 %v175
      %v600 = vunpack.c.l.b16 %v176
      %v601 = vunpack.c.l.b16 %v177
      %v602 = vunpack.c.l.b16 %v178
      %v603 = vunpack.c.l.b16 %v179
      %v604 = vpack.c.b16 %v597, %v596
      %v605 = vpack.c.b16 %v599, %v598
      %v606 = vpack.c.b16 %v601, %v600
      %v607 = vpack.c.b16 %v603, %v602
      %v616 = vunpack.c.l.b16 %v181
      %v617 = vunpack.c.l.b16 %v182
      %v618 = vunpack.c.l.b16 %v183
      %v619 = vunpack.c.l.b16 %v184
      %v620 = vunpack.c.l.b16 %v185
      %v621 = vunpack.c.l.b16 %v186
      %v622 = vunpack.c.l.b16 %v187
      %v623 = vunpack.c.l.b16 %v188
      %v624 = vpack.c.b16 %v617, %v616
      %v625 = vpack.c.b16 %v619, %v618
      %v626 = vpack.c.b16 %v621, %v620
      %v627 = vpack.c.b16 %v623, %v622
      %628 = vrot.lane.b32.xlu0 %v624, 16
      %v629 = vpop.permute.xlu0 %628
      %630 = vrot.lane.b32.xlu0 %v625, 16
      %v631 = vpop.permute.xlu0 %630
      %632 = vrot.lane.b32.xlu0 %v626, 16
      %v633 = vpop.permute.xlu0 %632
      %634 = vrot.lane.b32.xlu0 %v627, 16
      %v635 = vpop.permute.xlu0 %634
      %v636 = vunpack.c.l.b16 %v213
      %v637 = vunpack.c.l.b16 %v227
      %v638 = vunpack.c.l.b16 %v241
      %v639 = vunpack.c.l.b16 %v255
      %v640 = vunpack.c.l.b16 %v269
      %v641 = vunpack.c.l.b16 %v283
      %v642 = vunpack.c.l.b16 %v297
      %v643 = vunpack.c.l.b16 %v311
      %v644 = vpack.c.b16 %v637, %v636
      %v645 = vpack.c.b16 %v639, %v638
      %v646 = vpack.c.b16 %v641, %v640
      %v647 = vpack.c.b16 %v643, %v642
      %648 = vrot.lane.b32.xlu0 %v644, 32
      %v649 = vpop.permute.xlu0 %648
      %650 = vrot.lane.b32.xlu0 %v645, 32
      %v651 = vpop.permute.xlu0 %650
      %652 = vrot.lane.b32.xlu0 %v646, 32
      %v653 = vpop.permute.xlu0 %652
      %654 = vrot.lane.b32.xlu0 %v647, 32
      %v655 = vpop.permute.xlu0 %654
      %v664 = vunpack.c.l.b16 %v313
      %v665 = vunpack.c.l.b16 %v314
      %v666 = vunpack.c.l.b16 %v315
      %v667 = vunpack.c.l.b16 %v316
      %v668 = vunpack.c.l.b16 %v317
      %v669 = vunpack.c.l.b16 %v318
      %v670 = vunpack.c.l.b16 %v319
      %v671 = vunpack.c.l.b16 %v320
      %v672 = vpack.c.b16 %v665, %v664
      %v673 = vpack.c.b16 %v667, %v666
      %v674 = vpack.c.b16 %v669, %v668
      %v675 = vpack.c.b16 %v671, %v670
      %676 = vrot.lane.b32.xlu0 %v672, 48
      %v677 = vpop.permute.xlu0 %676
      %678 = vrot.lane.b32.xlu0 %v673, 48
      %v679 = vpop.permute.xlu0 %678
      %680 = vrot.lane.b32.xlu0 %v674, 48
      %v681 = vpop.permute.xlu0 %680
      %682 = vrot.lane.b32.xlu0 %v675, 48
      %v683 = vpop.permute.xlu0 %682
      %v692 = vunpack.c.l.b16 %v322
      %v693 = vunpack.c.l.b16 %v323
      %v694 = vunpack.c.l.b16 %v324
      %v695 = vunpack.c.l.b16 %v325
      %v696 = vunpack.c.l.b16 %v326
      %v697 = vunpack.c.l.b16 %v327
      %v698 = vunpack.c.l.b16 %v328
      %v699 = vunpack.c.l.b16 %v329
      %v700 = vpack.c.b16 %v693, %v692
      %v701 = vpack.c.b16 %v695, %v694
      %v702 = vpack.c.b16 %v697, %v696
      %v703 = vpack.c.b16 %v699, %v698
      %704 = vrot.lane.b32.xlu0 %v700, 64
      %v705 = vpop.permute.xlu0 %704
      %706 = vrot.lane.b32.xlu0 %v701, 64
      %v707 = vpop.permute.xlu0 %706
      %708 = vrot.lane.b32.xlu0 %v702, 64
      %v709 = vpop.permute.xlu0 %708
      %710 = vrot.lane.b32.xlu0 %v703, 64
      %v711 = vpop.permute.xlu0 %710
      %v712 = vunpack.c.l.b16 %v351
      %v713 = vunpack.c.l.b16 %v365
      %v714 = vunpack.c.l.b16 %v379
      %v715 = vunpack.c.l.b16 %v393
      %v716 = vunpack.c.l.b16 %v407
      %v717 = vunpack.c.l.b16 %v421
      %v718 = vunpack.c.l.b16 %v435
      %v719 = vunpack.c.l.b16 %v449
      %v720 = vpack.c.b16 %v713, %v712
      %v721 = vpack.c.b16 %v715, %v714
      %v722 = vpack.c.b16 %v717, %v716
      %v723 = vpack.c.b16 %v719, %v718
      %724 = vrot.lane.b32.xlu0 %v720, 80
      %v725 = vpop.permute.xlu0 %724
      %726 = vrot.lane.b32.xlu0 %v721, 80
      %v727 = vpop.permute.xlu0 %726
      %728 = vrot.lane.b32.xlu0 %v722, 80
      %v729 = vpop.permute.xlu0 %728
      %730 = vrot.lane.b32.xlu0 %v723, 80
      %v731 = vpop.permute.xlu0 %730
      %v740 = vunpack.c.l.b16 %v451
      %v741 = vunpack.c.l.b16 %v452
      %v742 = vunpack.c.l.b16 %v453
      %v743 = vunpack.c.l.b16 %v454
      %v744 = vunpack.c.l.b16 %v455
      %v745 = vunpack.c.l.b16 %v456
      %v746 = vunpack.c.l.b16 %v457
      %v747 = vunpack.c.l.b16 %v458
      %v748 = vpack.c.b16 %v741, %v740
      %v749 = vpack.c.b16 %v743, %v742
      %v750 = vpack.c.b16 %v745, %v744
      %v751 = vpack.c.b16 %v747, %v746
      %752 = vrot.lane.b32.xlu0 %v748, 96
      %v753 = vpop.permute.xlu0 %752
      %754 = vrot.lane.b32.xlu0 %v749, 96
      %v755 = vpop.permute.xlu0 %754
      %756 = vrot.lane.b32.xlu0 %v750, 96
      %v757 = vpop.permute.xlu0 %756
      %758 = vrot.lane.b32.xlu0 %v751, 96
      %v759 = vpop.permute.xlu0 %758
      %v768 = vunpack.c.l.b16 %v460
      %v769 = vunpack.c.l.b16 %v461
      %v770 = vunpack.c.l.b16 %v462
      %v771 = vunpack.c.l.b16 %v463
      %v772 = vunpack.c.l.b16 %v464
      %v773 = vunpack.c.l.b16 %v465
      %v774 = vunpack.c.l.b16 %v466
      %v775 = vunpack.c.l.b16 %v467
      %v776 = vpack.c.b16 %v769, %v768
      %v777 = vpack.c.b16 %v771, %v770
      %v778 = vpack.c.b16 %v773, %v772
      %v779 = vpack.c.b16 %v775, %v774
      %780 = vrot.lane.b32.xlu0 %v776, 112
      %v781 = vpop.permute.xlu0 %780
      %782 = vrot.lane.b32.xlu0 %v777, 112
      %v783 = vpop.permute.xlu0 %782
      %784 = vrot.lane.b32.xlu0 %v778, 112
      %v785 = vpop.permute.xlu0 %784
      %786 = vrot.lane.b32.xlu0 %v779, 112
      %v787 = vpop.permute.xlu0 %786
      %v788 = vunpack.c.l.b16 %v489
      %v789 = vunpack.c.l.b16 %v503
      %v790 = vunpack.c.l.b16 %v517
      %v791 = vunpack.c.l.b16 %v531
      %v792 = vunpack.c.l.b16 %v545
      %v793 = vunpack.c.l.b16 %v559
      %v794 = vunpack.c.l.b16 %v573
      %v795 = vunpack.c.l.b16 %v587
      %v796 = vpack.c.b16 %v789, %v788
      %v797 = vpack.c.b16 %v791, %v790
      %v798 = vpack.c.b16 %v793, %v792
      %v799 = vpack.c.b16 %v795, %v794
      %vm800 = vcmask 130048
      %v803 = vsel %vm800, %v604, %v629
      %v806 = vsel %vm800, %v605, %v631
      %v809 = vsel %vm800, %v606, %v633
      %v812 = vsel %vm800, %v607, %v635
      %vm813 = vcmask 261120
      %v815 = vsel %vm813, %v803, %v649
      %v817 = vsel %vm813, %v806, %v651
      %v819 = vsel %vm813, %v809, %v653
      %v821 = vsel %vm813, %v812, %v655
      %vm822 = vcmask 392192
      %v824 = vsel %vm822, %v815, %v677
      %v826 = vsel %vm822, %v817, %v679
      %v828 = vsel %vm822, %v819, %v681
      %v830 = vsel %vm822, %v821, %v683
      %vm831 = vcmask 523264
      %v833 = vsel %vm831, %v824, %v705
      %v835 = vsel %vm831, %v826, %v707
      %v837 = vsel %vm831, %v828, %v709
      %v839 = vsel %vm831, %v830, %v711
      %vm840 = vcmask 654336
      %v842 = vsel %vm840, %v833, %v725
      %v844 = vsel %vm840, %v835, %v727
      %v846 = vsel %vm840, %v837, %v729
      %v848 = vsel %vm840, %v839, %v731
      %vm849 = vcmask 785408
      %v851 = vsel %vm849, %v842, %v753
      %v853 = vsel %vm849, %v844, %v755
      %v855 = vsel %vm849, %v846, %v757
      %v857 = vsel %vm849, %v848, %v759
      %vm858 = vcmask 916480
      %v860 = vsel %vm858, %v851, %v781
      %v863 = vsel %vm858, %v853, %v783
      %v866 = vsel %vm858, %v855, %v785
      %v869 = vsel %vm858, %v857, %v787
      %v871 = vld [vmem:[%s1] sm:$0xf]
      %v872 = vld [vmem:[%s1 + $0x4] sm:$0xf]
      %v873 = vld [vmem:[%s1 + $0x8] sm:$0xf]
      %v874 = vld [vmem:[%s1 + $0xc] sm:$0xf]
      %v875 = vld [vmem:[%s1 + $0x10] sm:$0xf]
      %v876 = vld [vmem:[%s1 + $0x14] sm:$0xf]
      %v877 = vld [vmem:[%s1 + $0x18] sm:$0xf]
      %v878 = vld [vmem:[%s1 + $0x1c] sm:$0xf]
      %v879 = vld [vmem:[%s1 + $0x20] sm:$0xf]
      %v880 = vld [vmem:[%s1 + $0x24] sm:$0xf]
      %v881 = vld [vmem:[%s1 + $0x28] sm:$0xf]
      %v882 = vld [vmem:[%s1 + $0x2c] sm:$0xf]
      %v883 = vld [vmem:[%s1 + $0x30] sm:$0xf]
      %v884 = vld [vmem:[%s1 + $0x34] sm:$0xf]
      %v885 = vld [vmem:[%s1 + $0x38] sm:$0xf]
      %v886 = vld [vmem:[%s1 + $0x3c] sm:$0xf]
      %v887 = vld [vmem:[%s1 + $0x40] sm:$0xf]
      %v888 = vld [vmem:[%s1 + $0x44] sm:$0xf]
      %v889 = vld [vmem:[%s2] sm:$0x1]
      %v891 = vlaneseq
      %v892 = vshrl.u32 %v891, 7
      %v893 = vsub.s32 0, %v892
      %v894 = vrot.slane %v889, %v893
      %v914 = vunpack.c.l.b16 %v871
      %v915 = vunpack.c.l.b16 %v872
      %v916 = vunpack.c.l.b16 %v873
      %v917 = vunpack.c.l.b16 %v874
      %v918 = vunpack.c.l.b16 %v875
      %v919 = vunpack.c.l.b16 %v876
      %v920 = vunpack.c.l.b16 %v877
      %v921 = vunpack.c.l.b16 %v878
      %v922 = vunpack.c.l.b16 %v879
      %v923 = vunpack.c.l.b16 %v880
      %v924 = vunpack.c.l.b16 %v881
      %v925 = vunpack.c.l.b16 %v882
      %v926 = vunpack.c.l.b16 %v883
      %v927 = vunpack.c.l.b16 %v884
      %v928 = vunpack.c.l.b16 %v885
      %v929 = vunpack.c.l.b16 %v886
      %v930 = vunpack.c.l.b16 %v887
      %v931 = vunpack.c.l.b16 %v888
      %v932 = vpack.c.b16 %v915, %v914
      %v933 = vpack.c.b16 %v917, %v916
      %v934 = vpack.c.b16 %v919, %v918
      %v935 = vpack.c.b16 %v921, %v920
      %v936 = vpack.c.b16 %v923, %v922
      %v937 = vpack.c.b16 %v925, %v924
      %v938 = vpack.c.b16 %v927, %v926
      %v939 = vpack.c.b16 %v929, %v928
      %v940 = vpack.c.b16 %v931, %v930
      %v951 = vsel %vm800, %v796, 0
      %v954 = vsel %vm800, %v797, 0
      %v957 = vsel %vm800, %v798, 0
      %v960 = vsel %vm800, %v799, 0
      %962 = vmatprep.subr.bf16.mxu0 0
      %963 = vmatpush1.bf16.msra.mxu0 %v939
      %964 = vmatprep.subr.bf16.mxu0 0
      %965 = vmatpush1.bf16.msra.mxu0 %v938
      %966 = vmatprep.subr.bf16.mxu0 0
      %967 = vmatpush1.bf16.msra.mxu0 %v937
      %968 = vmatprep.subr.bf16.mxu0 0
      %969 = vmatpush1.bf16.msra.mxu0 %v936
      %970 = vmatprep.subr.bf16.mxu0 0
      %971 = vmatpush1.bf16.msra.mxu0 %v935
      %972 = vmatprep.subr.bf16.mxu0 0
      %973 = vmatpush1.bf16.msra.mxu0 %v934
      %974 = vmatprep.subr.bf16.mxu0 0
      %975 = vmatpush1.bf16.msra.mxu0 %v933
      %976 = vmatprep.subr.bf16.mxu0 0
      %977 = vmatpush1.bf16.msra.mxu0 %v932
      %978 = vmatprep.subr.bf16.mxu0 0
      %979 = vmatpush2.bf16.msra.mxu0 0
      %980 = vmatprep.subr.bf16.mxu0 0
      %981 = vmatpush2.bf16.msra.mxu0 0
      %982 = vmatprep.subr.bf16.mxu0 0
      %983 = vmatpush2.bf16.msra.mxu0 0
      %984 = vmatprep.subr.bf16.mxu0 0
      %985 = vmatpush2.bf16.msra.mxu0 0
      %986 = vmatprep.subr.bf16.mxu0 0
      %987 = vmatpush2.bf16.msra.mxu0 0
      %988 = vmatprep.subr.bf16.mxu0 0
      %989 = vmatpush2.bf16.msra.mxu0 0
      %990 = vmatprep.subr.bf16.mxu0 0
      %991 = vmatpush2.bf16.msra.mxu0 0
      %992 = vmatprep.subr.bf16.mxu0 0
      %993 = vmatpush2.bf16.msra.mxu0 %v940
      %994 = vmatprep.mubr.bf16.mxu0 %v951
      %995 = vmatmul.mubr.bf16.gmra.mxu0 %v860
      %v996 = vpop.f32.mrf.mxu0
      %v997 = vadd.f32 %v894, %v996
      %v998 = vpop.f32.mrf.mxu0
      %v999 = vpop.f32.mrf.mxu0
      %v1000 = vadd.f32 %v894, %v999
      %v1001 = vpop.f32.mrf.mxu0
      %1002 = vmatprep.mubr.bf16.mxu0 %v954
      %1003 = vmatmul.mubr.bf16.gmra.mxu0 %v863
      %v1004 = vpop.f32.mrf.mxu0
      %v1005 = vadd.f32 %v894, %v1004
      %v1006 = vpop.f32.mrf.mxu0
      %v1007 = vpop.f32.mrf.mxu0
      %v1008 = vadd.f32 %v894, %v1007
      %v1009 = vpop.f32.mrf.mxu0
      %1010 = vmatprep.mubr.bf16.mxu0 %v957
      %1011 = vmatmul.mubr.bf16.gmra.mxu0 %v866
      %v1012 = vpop.f32.mrf.mxu0
      %v1013 = vadd.f32 %v894, %v1012
      %v1014 = vpop.f32.mrf.mxu0
      %v1015 = vpop.f32.mrf.mxu0
      %v1016 = vadd.f32 %v894, %v1015
      %v1017 = vpop.f32.mrf.mxu0
      %1018 = vmatprep.mubr.bf16.mxu0 %v960
      %1019 = vmatmul.mubr.bf16.gmra.mxu0 %v869
      %v1020 = vpop.f32.mrf.mxu0
      %v1021 = vadd.f32 %v894, %v1020
      %v1022 = vpop.f32.mrf.mxu0
      %v1023 = vpop.f32.mrf.mxu0
      %v1024 = vadd.f32 %v894, %v1023
      %v1025 = vpop.f32.mrf.mxu0
      %1026 = vdwg.mxu0
      %v1027 = vxor.u32 %v997, 2147483648
      %v1028 = vxor.u32 %v1000, 2147483648
      %v1029 = vxor.u32 %v1005, 2147483648
      %v1030 = vxor.u32 %v1008, 2147483648
      %v1031 = vxor.u32 %v1013, 2147483648
      %v1032 = vxor.u32 %v1016, 2147483648
      %v1033 = vxor.u32 %v1021, 2147483648
      %v1034 = vxor.u32 %v1024, 2147483648
      %v1035 = vmul.f32 %v1027, 1.442695
      %v1036 = vpow.pop %v1035
      %v1037 = vmul.f32 %v1028, 1.442695
      %v1038 = vpow.pop %v1037
      %v1039 = vmul.f32 %v1029, 1.442695
      %v1040 = vpow.pop %v1039
      %v1041 = vmul.f32 %v1030, 1.442695
      %v1042 = vpow.pop %v1041
      %v1043 = vmul.f32 %v1031, 1.442695
      %v1044 = vpow.pop %v1043
      %v1045 = vmul.f32 %v1032, 1.442695
      %v1046 = vpow.pop %v1045
      %v1047 = vmul.f32 %v1033, 1.442695
      %v1048 = vpow.pop %v1047
      %v1049 = vmul.f32 %v1034, 1.442695
      %v1050 = vpow.pop %v1049
      %v1051 = vadd.f32 %v1036, 1.0
      %v1052 = vadd.f32 %v1038, 1.0
      %v1053 = vadd.f32 %v1040, 1.0
      %v1054 = vadd.f32 %v1042, 1.0
      %v1055 = vadd.f32 %v1044, 1.0
      %v1056 = vadd.f32 %v1046, 1.0
      %v1057 = vadd.f32 %v1048, 1.0
      %v1058 = vadd.f32 %v1050, 1.0
      %v1059 = vrcp.pop %v1051
      %v1060 = vmul.f32 1.0, %v1059
      %v1061 = vrcp.pop %v1052
      %v1062 = vmul.f32 1.0, %v1061
      %v1063 = vrcp.pop %v1053
      %v1064 = vmul.f32 1.0, %v1063
      %v1065 = vrcp.pop %v1054
      %v1066 = vmul.f32 1.0, %v1065
      %v1067 = vrcp.pop %v1055
      %v1068 = vmul.f32 1.0, %v1067
      %v1069 = vrcp.pop %v1056
      %v1070 = vmul.f32 1.0, %v1069
      %v1071 = vrcp.pop %v1057
      %v1072 = vmul.f32 1.0, %v1071
      %v1073 = vrcp.pop %v1058
      %v1074 = vmul.f32 1.0, %v1073
      %v1075 = vmul.f32 %v997, %v1060
      %v1076 = vmul.f32 %v1000, %v1062
      %v1077 = vmul.f32 %v1005, %v1064
      %v1078 = vmul.f32 %v1008, %v1066
      %v1079 = vmul.f32 %v1013, %v1068
      %v1080 = vmul.f32 %v1016, %v1070
      %v1081 = vmul.f32 %v1021, %v1072
      %v1082 = vmul.f32 %v1024, %v1074
      %v1083 = vpack.c.bf16 %v1076, %v1075
      %v1084 = vpack.c.bf16 %v1078, %v1077
      %v1085 = vpack.c.bf16 %v1080, %v1079
      %v1086 = vpack.c.bf16 %v1082, %v1081
      %v1091 = vunpack.c.l.b16 %v1083
      %v1092 = vunpack.c.h.b16 %v1083
      %v1093 = vunpack.c.l.b16 %v1084
      %v1094 = vunpack.c.h.b16 %v1084
      %v1095 = vunpack.c.l.b16 %v1085
      %v1096 = vunpack.c.h.b16 %v1085
      %v1097 = vunpack.c.l.b16 %v1086
      %v1098 = vunpack.c.h.b16 %v1086
      %v1099 = vpack.c.b16 %v1091, %v1091
      %v1100 = vpack.c.b16 %v1092, %v1092
      %v1101 = vpack.c.b16 %v1093, %v1093
      %v1102 = vpack.c.b16 %v1094, %v1094
      %v1103 = vpack.c.b16 %v1095, %v1095
      %v1104 = vpack.c.b16 %v1096, %v1096
      %v1105 = vpack.c.b16 %v1097, %v1097
      %v1106 = vpack.c.b16 %v1098, %v1098
      %vm1115 = vcmask 257024
      %1116 = vst.msk [vmem:[%s170] sm:$0xf] %vm1115, %v1099
      %1117 = vst.msk [vmem:[%s170 + $0x4] sm:$0xf] %vm1115, %v1100
      %1118 = vst.msk [vmem:[%s170 + $0x8] sm:$0xf] %vm1115, %v1101
      %1119 = vst.msk [vmem:[%s170 + $0xc] sm:$0xf] %vm1115, %v1102
      %1120 = vst.msk [vmem:[%s170 + $0x10] sm:$0xf] %vm1115, %v1103
      %1121 = vst.msk [vmem:[%s170 + $0x14] sm:$0xf] %vm1115, %v1104
      %1122 = vst.msk [vmem:[%s170 + $0x18] sm:$0xf] %vm1115, %v1105
      %1123 = vst.msk [vmem:[%s170 + $0x1c] sm:$0xf] %vm1115, %v1106
      %p1124 = scmp.lt.s32.totalorder %s14, 1
      %s1125 = scalar_select %p1124, %s14, 1
      %s1126 = smul.addr %s1125, 8
      %s1127 = smul.addr %s1126, 4
      %s1128 = scalar_lea.vmem %s3, %s1127
      // Predicated region
      $region33: #{yolov5_forward.4} parent=31 // pred_check
        %p1129 = pneg %p100
      $region34: #{yolov5_forward.4} parent=31 // pred_check_branch
        %1131 = sbr.rel (%p1129) target = $region36
      $region35: #{yolov5_forward.4} parent=31 // pred_region
        _
      $region36: #{yolov5_forward.4} parent=31 // pred_fallthru
        _
    $region32: #{yolov5_forward.4} parent=5 // pred_fallthru
      _
    %p1132 = scmp.le.s32.totalorder 2, %s9
    // Predicated region
    $region37: #{yolov5_forward.4} parent=5 // pred_check
      %p1133 = pneg %p1132
    $region38: #{yolov5_forward.4} parent=5 // pred_check_branch
      %1135 = sbr.rel (%p1133) target = $region40
    $region39: #{yolov5_forward.4} parent=5 // pred_region
      %s1136 = ssub.s32 %s9, 2
      // Predicated region
      $region41: #{yolov5_forward.4} parent=39 // pred_check
        %p1137 = pneg %p106
      $region42: #{yolov5_forward.4} parent=39 // pred_check_branch
        %1139 = sbr.rel (%p1137) target = $region44
      $region43: #{yolov5_forward.4} parent=39 // pred_region
        %p1140 = scmp.lt.s32.totalorder %s15, 1
        %s1141 = scalar_select %p1140, %s15, 1
        %s1142 = smul.addr %s1141, 8
        %s1143 = smul.addr %s1142, 4
        %s1144 = scalar_lea.vmem %s3, %s1143
      $region44: #{yolov5_forward.4} parent=39 // pred_fallthru
        _
    $region40: #{yolov5_forward.4} parent=5 // pred_fallthru
      _
  $region6: #{yolov5_forward.4} parent=0 // loop_footer
    %s13 = sadd.s32 1, %s9
  $region7: #{yolov5_forward.4} parent=0 // loop_footer_branch
    %8 = sbr.rel target = $region3
  $region8: #{yolov5_forward.4} parent=0 // loop_exit
    _

// kernel: yolov5_forward.3
$region0: #{yolov5_forward.3}
  #allocation0 [shape = 'u32[]', space=smem, size = 0x4, offset = 0x4, fixed_abs, tag = 'smem constant byte address 0x4 - core index']
  #allocation1 [shape = 'u32[144,128]{1,0:T(1,128)}', space=vmem, size = 0x12000, scoped, tag = 'internal scratch']
  %s0 = inlined_call_operand.vmem [shape: bf16[2,68,17,8], index: 0, kind: input, shape index: {}]
  %s1 = inlined_call_operand.vmem [shape: bf16[72,16], index: 1, kind: input, shape index: {}]
  %s2 = inlined_call_operand.vmem [shape: f32[1,16], index: 2, kind: input, shape index: {}]
  %s3 = inlined_call_operand.vmem [shape: bf16[2,256,16], index: 3, kind: output, shape index: {}]
  %s4 = sld [smem:[#allocation0]]
  $region45: #{yolov5_forward.3} parent=0
    _
  %s6 = ssub.s32 1, %s4
  %s7 = scalar_select 0, %s6, %s4
  loop: start=0, step=1, limit=4
  $region2: #{yolov5_forward.3} parent=0 // loop_pre_header
    _
  $region3: #{yolov5_forward.3} parent=0 // loop_header
    %s9 = sphi 0, %s13
    %p10 = scmp.ge.s32.totalorder %s9, 4
    %s19 = sphi 0, %s21
    %s22 = sphi 0, %s19
    %s23 = sphi 0, %s22
    %s39 = sphi 0, %s23
    %s43 = sphi 0, %s43
    %s45 = sphi 0, %s43
    %s46 = sphi 0, %s45
    %s60 = sphi 0, %s46
    %s64 = sphi 0, %s64
    %s66 = sphi 0, %s64
    %s67 = sphi 0, %s66
    %s81 = sphi 0, %s67
    %s87 = sphi 0, %s89
    %s90 = sphi 0, %s87
    %s91 = sphi 0, %s90
    %s107 = sphi 0, %s91
  $region4: #{yolov5_forward.3} parent=0 // loop_header_branch
    %12 = sbr.rel (%p10) target = $region8
  $region5: #{yolov5_forward.3} parent=0 // loop_body
    %s14 = ssub.s32 %s9, 1
    %s15 = ssub.s32 %s9, 2
    %s16 = sadd.s32 %s9, 1
    %s17 = ssub.s32 %s9, %s16
    %p18 = scmp.eq.s32.totalorder %s17, 0
    %s20 = sadd.s32 %s19, 1
    %s21 = scalar_select %p18, %s19, %s20
    %p24 = pneg %p18
    %p25 = scmp.eq.s32.totalorder %s9, 1
    %p26 = por %p24, %p25
    %p27 = scmp.ne.s32.totalorder %s19, %s22
    %p28 = scmp.eq.s32.totalorder %s9, 0
    %p29 = por %p27, %p28
    %p30 = scmp.ne.s32.totalorder %s19, %s22
    %p31 = scmp.eq.s32.totalorder %s14, 1
    %p32 = por %p30, %p31
    %p33 = scmp.ne.s32.totalorder %s22, %s23
    %p34 = scmp.eq.s32.totalorder %s14, 0
    %p35 = por %p33, %p34
    %p36 = scmp.ne.s32.totalorder %s22, %s23
    %p37 = scmp.eq.s32.totalorder %s15, 1
    %p38 = por %p36, %p37
    %p40 = scmp.ne.s32.totalorder %s23, %s39
    %p41 = scmp.eq.s32.totalorder %s15, 0
    %p42 = por %p40, %p41
    %s44 = sadd.s32 %s43, 1
    %p47 = scmp.eq.s32.totalorder %s9, 1
    %p48 = scmp.ne.s32.totalorder %s43, %s45
    %p49 = scmp.eq.s32.totalorder %s9, 0
    %p50 = por %p48, %p49
    %p51 = scmp.ne.s32.totalorder %s43, %s45
    %p52 = scmp.eq.s32.totalorder %s14, 1
    %p53 = por %p51, %p52
    %p54 = scmp.ne.s32.totalorder %s45, %s46
    %p55 = scmp.eq.s32.totalorder %s14, 0
    %p56 = por %p54, %p55
    %p57 = scmp.ne.s32.totalorder %s45, %s46
    %p58 = scmp.eq.s32.totalorder %s15, 1
    %p59 = por %p57, %p58
    %p61 = scmp.ne.s32.totalorder %s46, %s60
    %p62 = scmp.eq.s32.totalorder %s15, 0
    %p63 = por %p61, %p62
    %s65 = sadd.s32 %s64, 1
    %p68 = scmp.eq.s32.totalorder %s9, 1
    %p69 = scmp.ne.s32.totalorder %s64, %s66
    %p70 = scmp.eq.s32.totalorder %s9, 0
    %p71 = por %p69, %p70
    %p72 = scmp.ne.s32.totalorder %s64, %s66
    %p73 = scmp.eq.s32.totalorder %s14, 1
    %p74 = por %p72, %p73
    %p75 = scmp.ne.s32.totalorder %s66, %s67
    %p76 = scmp.eq.s32.totalorder %s14, 0
    %p77 = por %p75, %p76
    %p78 = scmp.ne.s32.totalorder %s66, %s67
    %p79 = scmp.eq.s32.totalorder %s15, 1
    %p80 = por %p78, %p79
    %p82 = scmp.ne.s32.totalorder %s67, %s81
    %p83 = scmp.eq.s32.totalorder %s15, 0
    %p84 = por %p82, %p83
    %s85 = ssub.s32 %s9, %s16
    %p86 = scmp.eq.s32.totalorder %s85, 0
    %s88 = sadd.s32 %s87, 1
    %s89 = scalar_select %p86, %s87, %s88
    %p92 = pneg %p86
    %p93 = scmp.eq.s32.totalorder %s9, 1
    %p94 = por %p92, %p93
    %p95 = scmp.ne.s32.totalorder %s87, %s90
    %p96 = scmp.eq.s32.totalorder %s9, 0
    %p97 = por %p95, %p96
    %p98 = scmp.ne.s32.totalorder %s87, %s90
    %p99 = scmp.eq.s32.totalorder %s14, 1
    %p100 = por %p98, %p99
    %p101 = scmp.ne.s32.totalorder %s90, %s91
    %p102 = scmp.eq.s32.totalorder %s14, 0
    %p103 = por %p101, %p102
    %p104 = scmp.ne.s32.totalorder %s90, %s91
    %p105 = scmp.eq.s32.totalorder %s15, 1
    %p106 = por %p104, %p105
    %p108 = scmp.ne.s32.totalorder %s91, %s107
    %p109 = scmp.eq.s32.totalorder %s15, 0
    %p110 = por %p108, %p109
    %p111 = scmp.le.s32.totalorder 1, %s9
    %p112 = scmp.lt.s32.totalorder %s9, 3
    %p113 = pnand %p111, %p112
    %p114 = pneg %p113
    // Predicated region
    $region9: #{yolov5_forward.3} parent=5 // pred_check
      _
    $region10: #{yolov5_forward.3} parent=5 // pred_check_branch
      %116 = sbr.rel (%p113) target = $region12
    $region11: #{yolov5_forward.3} parent=5 // pred_region
      %s117 = ssub.s32 %s9, 1
      // Predicated region
      $region13: #{yolov5_forward.3} parent=11 // pred_check
        %p118 = pneg %p56
      $region14: #{yolov5_forward.3} parent=11 // pred_check_branch
        %120 = sbr.rel (%p118) target = $region16
      $region15: #{yolov5_forward.3} parent=11 // pred_region
        _
      $region16: #{yolov5_forward.3} parent=11 // pred_fallthru
        _
      // Predicated region
      $region17: #{yolov5_forward.3} parent=11 // pred_check
        %p121 = pneg %p77
      $region18: #{yolov5_forward.3} parent=11 // pred_check_branch
        %123 = sbr.rel (%p121) target = $region20
      $region19: #{yolov5_forward.3} parent=11 // pred_region
        _
      $region20: #{yolov5_forward.3} parent=11 // pred_fallthru
        _
    $region12: #{yolov5_forward.3} parent=5 // pred_fallthru
      _
    %p124 = scmp.lt.s32.totalorder %s9, 2
    // Predicated region
    $region21: #{yolov5_forward.3} parent=5 // pred_check
      %p125 = pneg %p124
    $region22: #{yolov5_forward.3} parent=5 // pred_check_branch
      %127 = sbr.rel (%p125) target = $region24
    $region23: #{yolov5_forward.3} parent=5 // pred_region
      // Predicated region
      $region25: #{yolov5_forward.3} parent=23 // pred_check
        %p128 = pneg %p29
      $region26: #{yolov5_forward.3} parent=23 // pred_check_branch
        %130 = sbr.rel (%p128) target = $region28
      $region27: #{yolov5_forward.3} parent=23 // pred_region
        %p131 = scmp.lt.s32.totalorder %s9, 1
        %s132 = scalar_select %p131, %s9, 1
        %s133 = smul.addr %s132, 204
        %s134 = smul.addr %s133, 4
        %s135 = scalar_lea.vmem %s0, %s134
      $region28: #{yolov5_forward.3} parent=23 // pred_fallthru
        _
    $region24: #{yolov5_forward.3} parent=5 // pred_fallthru
      _
    %p136 = scmp.le.s32.totalorder 1, %s9
    %p137 = scmp.lt.s32.totalorder %s9, 3
    %p138 = pnand %p136, %p137
    %p139 = pneg %p138
    // Predicated region
    $region29: #{yolov5_forward.3} parent=5 // pred_check
      _
    $region30: #{yolov5_forward.3} parent=5 // pred_check_branch
      %141 = sbr.rel (%p138) target = $region32
    $region31: #{yolov5_forward.3} parent=5 // pred_region
      %s142 = ssub.s32 %s9, 1
      %p143 = scmp.lt.s32.totalorder %s14, 1
      %s144 = scalar_select %p143, %s14, 1
      %s145 = smul.addr %s144, 204
      %s146 = smul.addr %s145, 4
      %s147 = scalar_lea.vmem %s0, %s146
      %p148 = pneg %p35
      %p149 = pneg %p32
      %p150 = pneg %p56
      %p151 = pneg %p53
      %p152 = pneg %p77
      %p153 = pneg %p74
      %p154 = pneg %p103
      %p155 = pneg %p100
      %p156 = scmp.lt.s32.totalorder %s14, 1
      %s157 = scalar_select %p156, %s14, 1
      %s158 = smul.addr %s157, 32
      %s159 = smul.addr %s158, 4
      %s160 = scalar_lea.vmem %s3, %s159
      %p161 = scmp.lt.s32.totalorder %s14, 1
      %s162 = scalar_select %p161, %s14, 1
      %s163 = smul.addr %s162, 204
      %s164 = smul.addr %s163, 4
      %s165 = scalar_lea.vmem %s0, %s164
      %p166 = scmp.lt.s32.totalorder %s14, 1
      %s167 = scalar_select %p166, %s14, 1
      %s168 = smul.addr %s167, 32
      %s169 = smul.addr %s168, 4
      %s170 = scalar_lea.vmem %s3, %s169
      %v172 = vld [vmem:[%s165] sm:$0xf]
      %v173 = vld [vmem:[%s165 + $0x4] sm:$0xf]
      %v174 = vld [vmem:[%s165 + $0xc] sm:$0xf]
      %v175 = vld [vmem:[%s165 + $0x10] sm:$0xf]
      %v176 = vld [vmem:[%s165 + $0x18] sm:$0xf]
      %v177 = vld [vmem:[%s165 + $0x1c] sm:$0xf]
      %v178 = vld [vmem:[%s165 + $0x24] sm:$0xf]
      %v179 = vld [vmem:[%s165 + $0x28] sm:$0xf]
      %v180 = vld [vmem:[%s165 + $0x30] sm:$0xf]
      %v181 = vld [vmem:[%s165 + $0x34] sm:$0xf]
      %v182 = vld [vmem:[%s165 + $0x3c] sm:$0xf]
      %v183 = vld [vmem:[%s165 + $0x40] sm:$0xf]
      %v184 = vld [vmem:[%s165 + $0x48] sm:$0xf]
      %v185 = vld [vmem:[%s165 + $0x4c] sm:$0xf]
      %v186 = vld [vmem:[%s165 + $0x54] sm:$0xf]
      %v187 = vld [vmem:[%s165 + $0x58] sm:$0xf]
      %v188 = vld [vmem:[%s165 + $0x60] sm:$0xf]
      %v189 = vld [vmem:[%s165 + $0x64] sm:$0xf]
      %v190 = vld [vmem:[%s165 + $0x6c] sm:$0xf]
      %v191 = vld [vmem:[%s165 + $0x70] sm:$0xf]
      %v192 = vld [vmem:[%s165 + $0x78] sm:$0xf]
      %v193 = vld [vmem:[%s165 + $0x7c] sm:$0xf]
      %v194 = vld [vmem:[%s165 + $0x84] sm:$0xf]
      %v195 = vld [vmem:[%s165 + $0x88] sm:$0xf]
      %v196 = vld [vmem:[%s165 + $0x90] sm:$0xf]
      %v197 = vld [vmem:[%s165 + $0x94] sm:$0xf]
      %v198 = vld [vmem:[%s165 + $0x9c] sm:$0xf]
      %v199 = vld [vmem:[%s165 + $0xa0] sm:$0xf]
      %v200 = vld [vmem:[%s165 + $0xa8] sm:$0xf]
      %v201 = vld [vmem:[%s165 + $0xac] sm:$0xf]
      %v202 = vld [vmem:[%s165 + $0xb4] sm:$0xf]
      %v203 = vld [vmem:[%s165 + $0xb8] sm:$0xf]
      %s204 = scalar_lea.vmem %s165, 204
      %v205 = vld [vmem:[%s204] sm:$0xf]
      %v206 = vld [vmem:[%s204 + $0x4] sm:$0xf]
      %v207 = vld [vmem:[%s204 + $0xc] sm:$0xf]
      %v208 = vld [vmem:[%s204 + $0x10] sm:$0xf]
      %v209 = vld [vmem:[%s204 + $0x18] sm:$0xf]
      %v210 = vld [vmem:[%s204 + $0x1c] sm:$0xf]
      %v211 = vld [vmem:[%s204 + $0x24] sm:$0xf]
      %v212 = vld [vmem:[%s204 + $0x28] sm:$0xf]
      %v213 = vld [vmem:[%s204 + $0x30] sm:$0xf]
      %v214 = vld [vmem:[%s204 + $0x34] sm:$0xf]
      %v215 = vld [vmem:[%s204 + $0x3c] sm:$0xf]
      %v216 = vld [vmem:[%s204 + $0x40] sm:$0xf]
      %v217 = vld [vmem:[%s204 + $0x48] sm:$0xf]
      %v218 = vld [vmem:[%s204 + $0x4c] sm:$0xf]
      %v219 = vld [vmem:[%s204 + $0x54] sm:$0xf]
      %v220 = vld [vmem:[%s204 + $0x58] sm:$0xf]
      %v221 = vld [vmem:[%s204 + $0x60] sm:$0xf]
      %v222 = vld [vmem:[%s204 + $0x64] sm:$0xf]
      %v223 = vld [vmem:[%s204 + $0x6c] sm:$0xf]
      %v224 = vld [vmem:[%s204 + $0x70] sm:$0xf]
      %v225 = vld [vmem:[%s204 + $0x78] sm:$0xf]
      %v226 = vld [vmem:[%s204 + $0x7c] sm:$0xf]
      %v227 = vld [vmem:[%s204 + $0x84] sm:$0xf]
      %v228 = vld [vmem:[%s204 + $0x88] sm:$0xf]
      %v229 = vld [vmem:[%s204 + $0x90] sm:$0xf]
      %v230 = vld [vmem:[%s204 + $0x94] sm:$0xf]
      %v231 = vld [vmem:[%s204 + $0x9c] sm:$0xf]
      %v232 = vld [vmem:[%s204 + $0xa0] sm:$0xf]
      %v233 = vld [vmem:[%s204 + $0xa8] sm:$0xf]
      %v234 = vld [vmem:[%s204 + $0xac] sm:$0xf]
      %v235 = vld [vmem:[%s204 + $0xb4] sm:$0xf]
      %v236 = vld [vmem:[%s204 + $0xb8] sm:$0xf]
      %v237 = vld [vmem:[%s165 + $0x8] sm:$0x1]
      %v238 = vld [vmem:[%s165 + $0x14] sm:$0x1]
      %v239 = vld [vmem:[%s165 + $0x20] sm:$0x1]
      %v240 = vld [vmem:[%s165 + $0x2c] sm:$0x1]
      %v241 = vld [vmem:[%s165 + $0x38] sm:$0x1]
      %v242 = vld [vmem:[%s165 + $0x44] sm:$0x1]
      %v243 = vld [vmem:[%s165 + $0x50] sm:$0x1]
      %v244 = vld [vmem:[%s165 + $0x5c] sm:$0x1]
      %v245 = vld [vmem:[%s165 + $0x68] sm:$0x1]
      %v246 = vld [vmem:[%s165 + $0x74] sm:$0x1]
      %v247 = vld [vmem:[%s165 + $0x80] sm:$0x1]
      %v248 = vld [vmem:[%s165 + $0x8c] sm:$0x1]
      %v249 = vld [vmem:[%s165 + $0x98] sm:$0x1]
      %v250 = vld [vmem:[%s165 + $0xa4] sm:$0x1]
      %v251 = vld [vmem:[%s165 + $0xb0] sm:$0x1]
      %v252 = vld [vmem:[%s165 + $0xbc] sm:$0x1]
      %vm253 = vsmask.f32 3328
      %vm254 = vsmask.f32 7440
      %vm255 = vmor %vm253, %vm254
      %v257 = vshrl.u32 %v172, 16
      %v259 = vrot.slane %v257, 4
      %v260 = vshll.u32 %v172, 16
      %v262 = vrot.slane %v260, 5
      %v263 = vor.u32 %v259, %v262
      %v264 = vrot.slane %v263, 4
      %v266 = vshll.u32 %v173, 16
      %v268 = vrot.slane %v266, 5
      %v269 = vsel %vm255, %v264, %v268
      %v270 = vshrl.u32 %v173, 16
      %v272 = vrot.slane %v270, 4
      %v273 = vor.u32 %v272, %v268
      %v274 = vrot.slane %v273, 4
      %v276 = vshll.u32 %v237, 16
      %v278 = vrot.slane %v276, 5
      %v279 = vsel %vm255, %v274, %v278
      %v281 = vshrl.u32 %v174, 16
      %v283 = vrot.slane %v281, 4
      %v284 = vshll.u32 %v174, 16
      %v286 = vrot.slane %v284, 5
      %v287 = vor.u32 %v283, %v286
      %v288 = vrot.slane %v287, 4
      %v290 = vshll.u32 %v175, 16
      %v292 = vrot.slane %v290, 5
      %v293 = vsel %vm255, %v288, %v292
      %v294 = vshrl.u32 %v175, 16
      %v296 = vrot.slane %v294, 4
      %v297 = vor.u32 %v296, %v292
      %v298 = vrot.slane %v297, 4
      %v300 = vshll.u32 %v238, 16
      %v302 = vrot.slane %v300, 5
      %v303 = vsel %vm255, %v298, %v302
      %v305 = vshrl.u32 %v176, 16
      %v307 = vrot.slane %v305, 4
      %v308 = vshll.u32 %v176, 16
      %v310 = vrot.slane %v308, 5
      %v311 = vor.u32 %v307, %v310
      %v312 = vrot.slane %v311, 4
      %v314 = vshll.u32 %v177, 16
      %v316 = vrot.slane %v314, 5
      %v317 = vsel %vm255, %v312, %v316
      %v318 = vshrl.u32 %v177, 16
      %v320 = vrot.slane %v318, 4
      %v321 = vor.u32 %v320, %v316
      %v322 = vrot.slane %v321, 4
      %v324 = vshll.u32 %v239, 16
      %v326 = vrot.slane %v324, 5
      %v327 = vsel %vm255, %v322, %v326
      %v329 = vshrl.u32 %v178, 16
      %v331 = vrot.slane %v329, 4
      %v332 = vshll.u32 %v178, 16
      %v334 = vrot.slane %v332, 5
      %v335 = vor.u32 %v331, %v334
      %v336 = vrot.slane %v335, 4
      %v338 = vshll.u32 %v179, 16
      %v340 = vrot.slane %v338, 5
      %v341 = vsel %vm255, %v336, %v340
      %v342 = vshrl.u32 %v179, 16
      %v344 = vrot.slane %v342, 4
      %v345 = vor.u32 %v344, %v340
      %v346 = vrot.slane %v345, 4
      %v348 = vshll.u32 %v240, 16
      %v350 = vrot.slane %v348, 5
      %v351 = vsel %vm255, %v346, %v350
      %v353 = vshrl.u32 %v180, 16
      %v355 = vrot.slane %v353, 4
      %v356 = vshll.u32 %v180, 16
      %v358 = vrot.slane %v356, 5
      %v359 = vor.u32 %v355, %v358
      %v360 = vrot.slane %v359, 4
      %v362 = vshll.u32 %v181, 16
      %v364 = vrot.slane %v362, 5
      %v365 = vsel %vm255, %v360, %v364
      %v366 = vshrl.u32 %v181, 16
      %v368 = vrot.slane %v366, 4
      %v369 = vor.u32 %v368, %v364
      %v370 = vrot.slane %v369, 4
      %v372 = vshll.u32 %v241, 16
      %v374 = vrot.slane %v372, 5
      %v375 = vsel %vm255, %v370, %v374
      %v377 = vshrl.u32 %v182, 16
      %v379 = vrot.slane %v377, 4
      %v380 = vshll.u32 %v182, 16
      %v382 = vrot.slane %v380, 5
      %v383 = vor.u32 %v379, %v382
      %v384 = vrot.slane %v383, 4
      %v386 = vshll.u32 %v183, 16
      %v388 = vrot.slane %v386, 5
      %v389 = vsel %vm255, %v384, %v388
      %v390 = vshrl.u32 %v183, 16
      %v392 = vrot.slane %v390, 4
      %v393 = vor.u32 %v392, %v388
      %v394 = vrot.slane %v393, 4
      %v396 = vshll.u32 %v242, 16
      %v398 = vrot.slane %v396, 5
      %v399 = vsel %vm255, %v394, %v398
      %v401 = vshrl.u32 %v184, 16
      %v403 = vrot.slane %v401, 4
      %v404 = vshll.u32 %v184, 16
      %v406 = vrot.slane %v404, 5
      %v407 = vor.u32 %v403, %v406
      %v408 = vrot.slane %v407, 4
      %v410 = vshll.u32 %v185, 16
      %v412 = vrot.slane %v410, 5
      %v413 = vsel %vm255, %v408, %v412
      %v414 = vshrl.u32 %v185, 16
      %v416 = vrot.slane %v414, 4
      %v417 = vor.u32 %v416, %v412
      %v418 = vrot.slane %v417, 4
      %v420 = vshll.u32 %v243, 16
      %v422 = vrot.slane %v420, 5
      %v423 = vsel %vm255, %v418, %v422
      %v425 = vshrl.u32 %v186, 16
      %v427 = vrot.slane %v425, 4
      %v428 = vshll.u32 %v186, 16
      %v430 = vrot.slane %v428, 5
      %v431 = vor.u32 %v427, %v430
      %v432 = vrot.slane %v431, 4
      %v434 = vshll.u32 %v187, 16
      %v436 = vrot.slane %v434, 5
      %v437 = vsel %vm255, %v432, %v436
      %v438 = vshrl.u32 %v187, 16
      %v440 = vrot.slane %v438, 4
      %v441 = vor.u32 %v440, %v436
      %v442 = vrot.slane %v441, 4
      %v444 = vshll.u32 %v244, 16
      %v446 = vrot.slane %v444, 5
      %v447 = vsel %vm255, %v442, %v446
      %v449 = vshrl.u32 %v188, 16
      %v451 = vrot.slane %v449, 4
      %v452 = vshll.u32 %v188, 16
      %v454 = vrot.slane %v452, 5
      %v455 = vor.u32 %v451, %v454
      %v456 = vrot.slane %v455, 4
      %v458 = vshll.u32 %v189, 16
      %v460 = vrot.slane %v458, 5
      %v461 = vsel %vm255, %v456, %v460
      %v462 = vshrl.u32 %v189, 16
      %v464 = vrot.slane %v462, 4
      %v465 = vor.u32 %v464, %v460
      %v466 = vrot.slane %v465, 4
      %v468 = vshll.u32 %v245, 16
      %v470 = vrot.slane %v468, 5
      %v471 = vsel %vm255, %v466, %v470
      %v473 = vshrl.u32 %v190, 16
      %v475 = vrot.slane %v473, 4
      %v476 = vshll.u32 %v190, 16
      %v478 = vrot.slane %v476, 5
      %v479 = vor.u32 %v475, %v478
      %v480 = vrot.slane %v479, 4
      %v482 = vshll.u32 %v191, 16
      %v484 = vrot.slane %v482, 5
      %v485 = vsel %vm255, %v480, %v484
      %v486 = vshrl.u32 %v191, 16
      %v488 = vrot.slane %v486, 4
      %v489 = vor.u32 %v488, %v484
      %v490 = vrot.slane %v489, 4
      %v492 = vshll.u32 %v246, 16
      %v494 = vrot.slane %v492, 5
      %v495 = vsel %vm255, %v490, %v494
      %v497 = vshrl.u32 %v192, 16
      %v499 = vrot.slane %v497, 4
      %v500 = vshll.u32 %v192, 16
      %v502 = vrot.slane %v500, 5
      %v503 = vor.u32 %v499, %v502
      %v504 = vrot.slane %v503, 4
      %v506 = vshll.u32 %v193, 16
      %v508 = vrot.slane %v506, 5
      %v509 = vsel %vm255, %v504, %v508
      %v510 = vshrl.u32 %v193, 16
      %v512 = vrot.slane %v510, 4
      %v513 = vor.u32 %v512, %v508
      %v514 = vrot.slane %v513, 4
      %v516 = vshll.u32 %v247, 16
      %v518 = vrot.slane %v516, 5
      %v519 = vsel %vm255, %v514, %v518
      %v521 = vshrl.u32 %v194, 16
      %v523 = vrot.slane %v521, 4
      %v524 = vshll.u32 %v194, 16
      %v526 = vrot.slane %v524, 5
      %v527 = vor.u32 %v523, %v526
      %v528 = vrot.slane %v527, 4
      %v530 = vshll.u32 %v195, 16
      %v532 = vrot.slane %v530, 5
      %v533 = vsel %vm255, %v528, %v532
      %v534 = vshrl.u32 %v195, 16
      %v536 = vrot.slane %v534, 4
      %v537 = vor.u32 %v536, %v532
      %v538 = vrot.slane %v537, 4
      %v540 = vshll.u32 %v248, 16
      %v542 = vrot.slane %v540, 5
      %v543 = vsel %vm255, %v538, %v542
      %v545 = vshrl.u32 %v196, 16
      %v547 = vrot.slane %v545, 4
      %v548 = vshll.u32 %v196, 16
      %v550 = vrot.slane %v548, 5
      %v551 = vor.u32 %v547, %v550
      %v552 = vrot.slane %v551, 4
      %v554 = vshll.u32 %v197, 16
      %v556 = vrot.slane %v554, 5
      %v557 = vsel %vm255, %v552, %v556
      %v558 = vshrl.u32 %v197, 16
      %v560 = vrot.slane %v558, 4
      %v561 = vor.u32 %v560, %v556
      %v562 = vrot.slane %v561, 4
      %v564 = vshll.u32 %v249, 16
      %v566 = vrot.slane %v564, 5
      %v567 = vsel %vm255, %v562, %v566
      %v569 = vshrl.u32 %v198, 16
      %v571 = vrot.slane %v569, 4
      %v572 = vshll.u32 %v198, 16
      %v574 = vrot.slane %v572, 5
      %v575 = vor.u32 %v571, %v574
      %v576 = vrot.slane %v575, 4
      %v578 = vshll.u32 %v199, 16
      %v580 = vrot.slane %v578, 5
      %v581 = vsel %vm255, %v576, %v580
      %v582 = vshrl.u32 %v199, 16
      %v584 = vrot.slane %v582, 4
      %v585 = vor.u32 %v584, %v580
      %v586 = vrot.slane %v585, 4
      %v588 = vshll.u32 %v250, 16
      %v590 = vrot.slane %v588, 5
      %v591 = vsel %vm255, %v586, %v590
      %v593 = vshrl.u32 %v200, 16
      %v595 = vrot.slane %v593, 4
      %v596 = vshll.u32 %v200, 16
      %v598 = vrot.slane %v596, 5
      %v599 = vor.u32 %v595, %v598
      %v600 = vrot.slane %v599, 4
      %v602 = vshll.u32 %v201, 16
      %v604 = vrot.slane %v602, 5
      %v605 = vsel %vm255, %v600, %v604
      %v606 = vshrl.u32 %v201, 16
      %v608 = vrot.slane %v606, 4
      %v609 = vor.u32 %v608, %v604
      %v610 = vrot.slane %v609, 4
      %v612 = vshll.u32 %v251, 16
      %v614 = vrot.slane %v612, 5
      %v615 = vsel %vm255, %v610, %v614
      %v617 = vshrl.u32 %v202, 16
      %v619 = vrot.slane %v617, 4
      %v620 = vshll.u32 %v202, 16
      %v622 = vrot.slane %v620, 5
      %v623 = vor.u32 %v619, %v622
      %v624 = vrot.slane %v623, 4
      %v626 = vshll.u32 %v203, 16
      %v628 = vrot.slane %v626, 5
      %v629 = vsel %vm255, %v624, %v628
      %v630 = vshrl.u32 %v203, 16
      %v632 = vrot.slane %v630, 4
      %v633 = vor.u32 %v632, %v628
      %v634 = vrot.slane %v633, 4
      %v636 = vshll.u32 %v252, 16
      %v638 = vrot.slane %v636, 5
      %v639 = vsel %vm255, %v634, %v638
      %s640 = scalar_lea.vmem %s165, 408
      %v641 = vld [vmem:[%s640] sm:$0xf]
      %v642 = vld [vmem:[%s640 + $0x4] sm:$0xf]
      %v643 = vld [vmem:[%s640 + $0xc] sm:$0xf]
      %v644 = vld [vmem:[%s640 + $0x10] sm:$0xf]
      %v645 = vld [vmem:[%s640 + $0x18] sm:$0xf]
      %v646 = vld [vmem:[%s640 + $0x1c] sm:$0xf]
      %v647 = vld [vmem:[%s640 + $0x24] sm:$0xf]
      %v648 = vld [vmem:[%s640 + $0x28] sm:$0xf]
      %v649 = vld [vmem:[%s640 + $0x30] sm:$0xf]
      %v650 = vld [vmem:[%s640 + $0x34] sm:$0xf]
      %v651 = vld [vmem:[%s640 + $0x3c] sm:$0xf]
      %v652 = vld [vmem:[%s640 + $0x40] sm:$0xf]
      %v653 = vld [vmem:[%s640 + $0x48] sm:$0xf]
      %v654 = vld [vmem:[%s640 + $0x4c] sm:$0xf]
      %v655 = vld [vmem:[%s640 + $0x54] sm:$0xf]
      %v656 = vld [vmem:[%s640 + $0x58] sm:$0xf]
      %v657 = vld [vmem:[%s640 + $0x60] sm:$0xf]
      %v658 = vld [vmem:[%s640 + $0x64] sm:$0xf]
      %v659 = vld [vmem:[%s640 + $0x6c] sm:$0xf]
      %v660 = vld [vmem:[%s640 + $0x70] sm:$0xf]
      %v661 = vld [vmem:[%s640 + $0x78] sm:$0xf]
      %v662 = vld [vmem:[%s640 + $0x7c] sm:$0xf]
      %v663 = vld [vmem:[%s640 + $0x84] sm:$0xf]
      %v664 = vld [vmem:[%s640 + $0x88] sm:$0xf]
      %v665 = vld [vmem:[%s640 + $0x90] sm:$0xf]
      %v666 = vld [vmem:[%s640 + $0x94] sm:$0xf]
      %v667 = vld [vmem:[%s640 + $0x9c] sm:$0xf]
      %v668 = vld [vmem:[%s640 + $0xa0] sm:$0xf]
      %v669 = vld [vmem:[%s640 + $0xa8] sm:$0xf]
      %v670 = vld [vmem:[%s640 + $0xac] sm:$0xf]
      %v671 = vld [vmem:[%s640 + $0xb4] sm:$0xf]
      %v672 = vld [vmem:[%s640 + $0xb8] sm:$0xf]
      %s673 = scalar_lea.vmem %s165, 612
      %v674 = vld [vmem:[%s673] sm:$0xf]
      %v675 = vld [vmem:[%s673 + $0x4] sm:$0xf]
      %v676 = vld [vmem:[%s673 + $0xc] sm:$0xf]
      %v677 = vld [vmem:[%s673 + $0x10] sm:$0xf]
      %v678 = vld [vmem:[%s673 + $0x18] sm:$0xf]
      %v679 = vld [vmem:[%s673 + $0x1c] sm:$0xf]
      %v680 = vld [vmem:[%s673 + $0x24] sm:$0xf]
      %v681 = vld [vmem:[%s673 + $0x28] sm:$0xf]
      %v682 = vld [vmem:[%s673 + $0x30] sm:$0xf]
      %v683 = vld [vmem:[%s673 + $0x34] sm:$0xf]
      %v684 = vld [vmem:[%s673 + $0x3c] sm:$0xf]
      %v685 = vld [vmem:[%s673 + $0x40] sm:$0xf]
      %v686 = vld [vmem:[%s673 + $0x48] sm:$0xf]
      %v687 = vld [vmem:[%s673 + $0x4c] sm:$0xf]
      %v688 = vld [vmem:[%s673 + $0x54] sm:$0xf]
      %v689 = vld [vmem:[%s673 + $0x58] sm:$0xf]
      %v690 = vld [vmem:[%s673 + $0x60] sm:$0xf]
      %v691 = vld [vmem:[%s673 + $0x64] sm:$0xf]
      %v692 = vld [vmem:[%s673 + $0x6c] sm:$0xf]
      %v693 = vld [vmem:[%s673 + $0x70] sm:$0xf]
      %v694 = vld [vmem:[%s673 + $0x78] sm:$0xf]
      %v695 = vld [vmem:[%s673 + $0x7c] sm:$0xf]
      %v696 = vld [vmem:[%s673 + $0x84] sm:$0xf]
      %v697 = vld [vmem:[%s673 + $0x88] sm:$0xf]
      %v698 = vld [vmem:[%s673 + $0x90] sm:$0xf]
      %v699 = vld [vmem:[%s673 + $0x94] sm:$0xf]
      %v700 = vld [vmem:[%s673 + $0x9c] sm:$0xf]
      %v701 = vld [vmem:[%s673 + $0xa0] sm:$0xf]
      %v702 = vld [vmem:[%s673 + $0xa8] sm:$0xf]
      %v703 = vld [vmem:[%s673 + $0xac] sm:$0xf]
      %v704 = vld [vmem:[%s673 + $0xb4] sm:$0xf]
      %v705 = vld [vmem:[%s673 + $0xb8] sm:$0xf]
      %v706 = vld [vmem:[%s640 + $0x8] sm:$0x1]
      %v707 = vld [vmem:[%s640 + $0x14] sm:$0x1]
      %v708 = vld [vmem:[%s640 + $0x20] sm:$0x1]
      %v709 = vld [vmem:[%s640 + $0x2c] sm:$0x1]
      %v710 = vld [vmem:[%s640 + $0x38] sm:$0x1]
      %v711 = vld [vmem:[%s640 + $0x44] sm:$0x1]
      %v712 = vld [vmem:[%s640 + $0x50] sm:$0x1]
      %v713 = vld [vmem:[%s640 + $0x5c] sm:$0x1]
      %v714 = vld [vmem:[%s640 + $0x68] sm:$0x1]
      %v715 = vld [vmem:[%s640 + $0x74] sm:$0x1]
      %v716 = vld [vmem:[%s640 + $0x80] sm:$0x1]
      %v717 = vld [vmem:[%s640 + $0x8c] sm:$0x1]
      %v718 = vld [vmem:[%s640 + $0x98] sm:$0x1]
      %v719 = vld [vmem:[%s640 + $0xa4] sm:$0x1]
      %v720 = vld [vmem:[%s640 + $0xb0] sm:$0x1]
      %v721 = vld [vmem:[%s640 + $0xbc] sm:$0x1]
      %v723 = vshrl.u32 %v641, 16
      %v725 = vrot.slane %v723, 4
      %v726 = vshll.u32 %v641, 16
      %v728 = vrot.slane %v726, 5
      %v729 = vor.u32 %v725, %v728
      %v730 = vrot.slane %v729, 4
      %v732 = vshll.u32 %v642, 16
      %v734 = vrot.slane %v732, 5
      %v735 = vsel %vm255, %v730, %v734
      %v736 = vshrl.u32 %v642, 16
      %v738 = vrot.slane %v736, 4
      %v739 = vor.u32 %v738, %v734
      %v740 = vrot.slane %v739, 4
      %v742 = vshll.u32 %v706, 16
      %v744 = vrot.slane %v742, 5
      %v745 = vsel %vm255, %v740, %v744
      %v747 = vshrl.u32 %v643, 16
      %v749 = vrot.slane %v747, 4
      %v750 = vshll.u32 %v643, 16
      %v752 = vrot.slane %v750, 5
      %v753 = vor.u32 %v749, %v752
      %v754 = vrot.slane %v753, 4
      %v756 = vshll.u32 %v644, 16
      %v758 = vrot.slane %v756, 5
      %v759 = vsel %vm255, %v754, %v758
      %v760 = vshrl.u32 %v644, 16
      %v762 = vrot.slane %v760, 4
      %v763 = vor.u32 %v762, %v758
      %v764 = vrot.slane %v763, 4
      %v766 = vshll.u32 %v707, 16
      %v768 = vrot.slane %v766, 5
      %v769 = vsel %vm255, %v764, %v768
      %v771 = vshrl.u32 %v645, 16
      %v773 = vrot.slane %v771, 4
      %v774 = vshll.u32 %v645, 16
      %v776 = vrot.slane %v774, 5
      %v777 = vor.u32 %v773, %v776
      %v778 = vrot.slane %v777, 4
      %v780 = vshll.u32 %v646, 16
      %v782 = vrot.slane %v780, 5
      %v783 = vsel %vm255, %v778, %v782
      %v784 = vshrl.u32 %v646, 16
      %v786 = vrot.slane %v784, 4
      %v787 = vor.u32 %v786, %v782
      %v788 = vrot.slane %v787, 4
      %v790 = vshll.u32 %v708, 16
      %v792 = vrot.slane %v790, 5
      %v793 = vsel %vm255, %v788, %v792
      %v795 = vshrl.u32 %v647, 16
      %v797 = vrot.slane %v795, 4
      %v798 = vshll.u32 %v647, 16
      %v800 = vrot.slane %v798, 5
      %v801 = vor.u32 %v797, %v800
      %v802 = vrot.slane %v801, 4
      %v804 = vshll.u32 %v648, 16
      %v806 = vrot.slane %v804, 5
      %v807 = vsel %vm255, %v802, %v806
      %v808 = vshrl.u32 %v648, 16
      %v810 = vrot.slane %v808, 4
      %v811 = vor.u32 %v810, %v806
      %v812 = vrot.slane %v811, 4
      %v814 = vshll.u32 %v709, 16
      %v816 = vrot.slane %v814, 5
      %v817 = vsel %vm255, %v812, %v816
      %v819 = vshrl.u32 %v649, 16
      %v821 = vrot.slane %v819, 4
      %v822 = vshll.u32 %v649, 16
      %v824 = vrot.slane %v822, 5
      %v825 = vor.u32 %v821, %v824
      %v826 = vrot.slane %v825, 4
      %v828 = vshll.u32 %v650, 16
      %v830 = vrot.slane %v828, 5
      %v831 = vsel %vm255, %v826, %v830
      %v832 = vshrl.u32 %v650, 16
      %v834 = vrot.slane %v832, 4
      %v835 = vor.u32 %v834, %v830
      %v836 = vrot.slane %v835, 4
      %v838 = vshll.u32 %v710, 16
      %v840 = vrot.slane %v838, 5
      %v841 = vsel %vm255, %v836, %v840
      %v843 = vshrl.u32 %v651, 16
      %v845 = vrot.slane %v843, 4
      %v846 = vshll.u32 %v651, 16
      %v848 = vrot.slane %v846, 5
      %v849 = vor.u32 %v845, %v848
      %v850 = vrot.slane %v849, 4
      %v852 = vshll.u32 %v652, 16
      %v854 = vrot.slane %v852, 5
      %v855 = vsel %vm255, %v850, %v854
      %v856 = vshrl.u32 %v652, 16
      %v858 = vrot.slane %v856, 4
      %v859 = vor.u32 %v858, %v854
      %v860 = vrot.slane %v859, 4
      %v862 = vshll.u32 %v711, 16
      %v864 = vrot.slane %v862, 5
      %v865 = vsel %vm255, %v860, %v864
      %v867 = vshrl.u32 %v653, 16
      %v869 = vrot.slane %v867, 4
      %v870 = vshll.u32 %v653, 16
      %v872 = vrot.slane %v870, 5
      %v873 = vor.u32 %v869, %v872
      %v874 = vrot.slane %v873, 4
      %v876 = vshll.u32 %v654, 16
      %v878 = vrot.slane %v876, 5
      %v879 = vsel %vm255, %v874, %v878
      %v880 = vshrl.u32 %v654, 16
      %v882 = vrot.slane %v880, 4
      %v883 = vor.u32 %v882, %v878
      %v884 = vrot.slane %v883, 4
      %v886 = vshll.u32 %v712, 16
      %v888 = vrot.slane %v886, 5
      %v889 = vsel %vm255, %v884, %v888
      %v891 = vshrl.u32 %v655, 16
      %v893 = vrot.slane %v891, 4
      %v894 = vshll.u32 %v655, 16
      %v896 = vrot.slane %v894, 5
      %v897 = vor.u32 %v893, %v896
      %v898 = vrot.slane %v897, 4
      %v900 = vshll.u32 %v656, 16
      %v902 = vrot.slane %v900, 5
      %v903 = vsel %vm255, %v898, %v902
      %v904 = vshrl.u32 %v656, 16
      %v906 = vrot.slane %v904, 4
      %v907 = vor.u32 %v906, %v902
      %v908 = vrot.slane %v907, 4
      %v910 = vshll.u32 %v713, 16
      %v912 = vrot.slane %v910, 5
      %v913 = vsel %vm255, %v908, %v912
      %v915 = vshrl.u32 %v657, 16
      %v917 = vrot.slane %v915, 4
      %v918 = vshll.u32 %v657, 16
      %v920 = vrot.slane %v918, 5
      %v921 = vor.u32 %v917, %v920
      %v922 = vrot.slane %v921, 4
      %v924 = vshll.u32 %v658, 16
      %v926 = vrot.slane %v924, 5
      %v927 = vsel %vm255, %v922, %v926
      %v928 = vshrl.u32 %v658, 16
      %v930 = vrot.slane %v928, 4
      %v931 = vor.u32 %v930, %v926
      %v932 = vrot.slane %v931, 4
      %v934 = vshll.u32 %v714, 16
      %v936 = vrot.slane %v934, 5
      %v937 = vsel %vm255, %v932, %v936
      %v939 = vshrl.u32 %v659, 16
      %v941 = vrot.slane %v939, 4
      %v942 = vshll.u32 %v659, 16
      %v944 = vrot.slane %v942, 5
      %v945 = vor.u32 %v941, %v944
      %v946 = vrot.slane %v945, 4
      %v948 = vshll.u32 %v660, 16
      %v950 = vrot.slane %v948, 5
      %v951 = vsel %vm255, %v946, %v950
      %v952 = vshrl.u32 %v660, 16
      %v954 = vrot.slane %v952, 4
      %v955 = vor.u32 %v954, %v950
      %v956 = vrot.slane %v955, 4
      %v958 = vshll.u32 %v715, 16
      %v960 = vrot.slane %v958, 5
      %v961 = vsel %vm255, %v956, %v960
      %v963 = vshrl.u32 %v661, 16
      %v965 = vrot.slane %v963, 4
      %v966 = vshll.u32 %v661, 16
      %v968 = vrot.slane %v966, 5
      %v969 = vor.u32 %v965, %v968
      %v970 = vrot.slane %v969, 4
      %v972 = vshll.u32 %v662, 16
      %v974 = vrot.slane %v972, 5
      %v975 = vsel %vm255, %v970, %v974
      %v976 = vshrl.u32 %v662, 16
      %v978 = vrot.slane %v976, 4
      %v979 = vor.u32 %v978, %v974
      %v980 = vrot.slane %v979, 4
      %v982 = vshll.u32 %v716, 16
      %v984 = vrot.slane %v982, 5
      %v985 = vsel %vm255, %v980, %v984
      %v987 = vshrl.u32 %v663, 16
      %v989 = vrot.slane %v987, 4
      %v990 = vshll.u32 %v663, 16
      %v992 = vrot.slane %v990, 5
      %v993 = vor.u32 %v989, %v992
      %v994 = vrot.slane %v993, 4
      %v996 = vshll.u32 %v664, 16
      %v998 = vrot.slane %v996, 5
      %v999 = vsel %vm255, %v994, %v998
      %v1000 = vshrl.u32 %v664, 16
      %v1002 = vrot.slane %v1000, 4
      %v1003 = vor.u32 %v1002, %v998
      %v1004 = vrot.slane %v1003, 4
      %v1006 = vshll.u32 %v717, 16
      %v1008 = vrot.slane %v1006, 5
      %v1009 = vsel %vm255, %v1004, %v1008
      %v1011 = vshrl.u32 %v665, 16
      %v1013 = vrot.slane %v1011, 4
      %v1014 = vshll.u32 %v665, 16
      %v1016 = vrot.slane %v1014, 5
      %v1017 = vor.u32 %v1013, %v1016
      %v1018 = vrot.slane %v1017, 4
      %v1020 = vshll.u32 %v666, 16
      %v1022 = vrot.slane %v1020, 5
      %v1023 = vsel %vm255, %v1018, %v1022
      %v1024 = vshrl.u32 %v666, 16
      %v1026 = vrot.slane %v1024, 4
      %v1027 = vor.u32 %v1026, %v1022
      %v1028 = vrot.slane %v1027, 4
      %v1030 = vshll.u32 %v718, 16
      %v1032 = vrot.slane %v1030, 5
      %v1033 = vsel %vm255, %v1028, %v1032
      %v1035 = vshrl.u32 %v667, 16
      %v1037 = vrot.slane %v1035, 4
      %v1038 = vshll.u32 %v667, 16
      %v1040 = vrot.slane %v1038, 5
      %v1041 = vor.u32 %v1037, %v1040
      %v1042 = vrot.slane %v1041, 4
      %v1044 = vshll.u32 %v668, 16
      %v1046 = vrot.slane %v1044, 5
      %v1047 = vsel %vm255, %v1042, %v1046
      %v1048 = vshrl.u32 %v668, 16
      %v1050 = vrot.slane %v1048, 4
      %v1051 = vor.u32 %v1050, %v1046
      %v1052 = vrot.slane %v1051, 4
      %v1054 = vshll.u32 %v719, 16
      %v1056 = vrot.slane %v1054, 5
      %v1057 = vsel %vm255, %v1052, %v1056
      %v1059 = vshrl.u32 %v669, 16
      %v1061 = vrot.slane %v1059, 4
      %v1062 = vshll.u32 %v669, 16
      %v1064 = vrot.slane %v1062, 5
      %v1065 = vor.u32 %v1061, %v1064
      %v1066 = vrot.slane %v1065, 4
      %v1068 = vshll.u32 %v670, 16
      %v1070 = vrot.slane %v1068, 5
      %v1071 = vsel %vm255, %v1066, %v1070
      %v1072 = vshrl.u32 %v670, 16
      %v1074 = vrot.slane %v1072, 4
      %v1075 = vor.u32 %v1074, %v1070
      %v1076 = vrot.slane %v1075, 4
      %v1078 = vshll.u32 %v720, 16
      %v1080 = vrot.slane %v1078, 5
      %v1081 = vsel %vm255, %v1076, %v1080
      %v1083 = vshrl.u32 %v671, 16
      %v1085 = vrot.slane %v1083, 4
      %v1086 = vshll.u32 %v671, 16
      %v1088 = vrot.slane %v1086, 5
      %v1089 = vor.u32 %v1085, %v1088
      %v1090 = vrot.slane %v1089, 4
      %v1092 = vshll.u32 %v672, 16
      %v1094 = vrot.slane %v1092, 5
      %v1095 = vsel %vm255, %v1090, %v1094
      %v1096 = vshrl.u32 %v672, 16
      %v1098 = vrot.slane %v1096, 4
      %v1099 = vor.u32 %v1098, %v1094
      %v1100 = vrot.slane %v1099, 4
      %v1102 = vshll.u32 %v721, 16
      %v1104 = vrot.slane %v1102, 5
      %v1105 = vsel %vm255, %v1100, %v1104
      %s1106 = scalar_lea.vmem %s165, 12
      %v1107 = vld [vmem:[%s1106] sm:$0xf]
      %v1108 = vld [vmem:[%s1106 + $0x4] sm:$0xf]
      %v1109 = vld [vmem:[%s1106 + $0xc] sm:$0xf]
      %v1110 = vld [vmem:[%s1106 + $0x10] sm:$0xf]
      %v1111 = vld [vmem:[%s1106 + $0x18] sm:$0xf]
      %v1112 = vld [vmem:[%s1106 + $0x1c] sm:$0xf]
      %v1113 = vld [vmem:[%s1106 + $0x24] sm:$0xf]
      %v1114 = vld [vmem:[%s1106 + $0x28] sm:$0xf]
      %v1115 = vld [vmem:[%s1106 + $0x30] sm:$0xf]
      %v1116 = vld [vmem:[%s1106 + $0x34] sm:$0xf]
      %v1117 = vld [vmem:[%s1106 + $0x3c] sm:$0xf]
      %v1118 = vld [vmem:[%s1106 + $0x40] sm:$0xf]
      %v1119 = vld [vmem:[%s1106 + $0x48] sm:$0xf]
      %v1120 = vld [vmem:[%s1106 + $0x4c] sm:$0xf]
      %v1121 = vld [vmem:[%s1106 + $0x54] sm:$0xf]
      %v1122 = vld [vmem:[%s1106 + $0x58] sm:$0xf]
      %v1123 = vld [vmem:[%s1106 + $0x60] sm:$0xf]
      %v1124 = vld [vmem:[%s1106 + $0x64] sm:$0xf]
      %v1125 = vld [vmem:[%s1106 + $0x6c] sm:$0xf]
      %v1126 = vld [vmem:[%s1106 + $0x70] sm:$0xf]
      %v1127 = vld [vmem:[%s1106 + $0x78] sm:$0xf]
      %v1128 = vld [vmem:[%s1106 + $0x7c] sm:$0xf]
      %v1129 = vld [vmem:[%s1106 + $0x84] sm:$0xf]
      %v1130 = vld [vmem:[%s1106 + $0x88] sm:$0xf]
      %v1131 = vld [vmem:[%s1106 + $0x90] sm:$0xf]
      %v1132 = vld [vmem:[%s1106 + $0x94] sm:$0xf]
      %v1133 = vld [vmem:[%s1106 + $0x9c] sm:$0xf]
      %v1134 = vld [vmem:[%s1106 + $0xa0] sm:$0xf]
      %v1135 = vld [vmem:[%s1106 + $0xa8] sm:$0xf]
      %v1136 = vld [vmem:[%s1106 + $0xac] sm:$0xf]
      %v1137 = vld [vmem:[%s1106 + $0xb4] sm:$0xf]
      %v1138 = vld [vmem:[%s1106 + $0xb8] sm:$0xf]
      %s1139 = scalar_lea.vmem %s165, 216
      %v1140 = vld [vmem:[%s1139] sm:$0xf]
      %v1141 = vld [vmem:[%s1139 + $0x4] sm:$0xf]
      %v1142 = vld [vmem:[%s1139 + $0xc] sm:$0xf]
      %v1143 = vld [vmem:[%s1139 + $0x10] sm:$0xf]
      %v1144 = vld [vmem:[%s1139 + $0x18] sm:$0xf]
      %v1145 = vld [vmem:[%s1139 + $0x1c] sm:$0xf]
      %v1146 = vld [vmem:[%s1139 + $0x24] sm:$0xf]
      %v1147 = vld [vmem:[%s1139 + $0x28] sm:$0xf]
      %v1148 = vld [vmem:[%s1139 + $0x30] sm:$0xf]
      %v1149 = vld [vmem:[%s1139 + $0x34] sm:$0xf]
      %v1150 = vld [vmem:[%s1139 + $0x3c] sm:$0xf]
      %v1151 = vld [vmem:[%s1139 + $0x40] sm:$0xf]
      %v1152 = vld [vmem:[%s1139 + $0x48] sm:$0xf]
      %v1153 = vld [vmem:[%s1139 + $0x4c] sm:$0xf]
      %v1154 = vld [vmem:[%s1139 + $0x54] sm:$0xf]
      %v1155 = vld [vmem:[%s1139 + $0x58] sm:$0xf]
      %v1156 = vld [vmem:[%s1139 + $0x60] sm:$0xf]
      %v1157 = vld [vmem:[%s1139 + $0x64] sm:$0xf]
      %v1158 = vld [vmem:[%s1139 + $0x6c] sm:$0xf]
      %v1159 = vld [vmem:[%s1139 + $0x70] sm:$0xf]
      %v1160 = vld [vmem:[%s1139 + $0x78] sm:$0xf]
      %v1161 = vld [vmem:[%s1139 + $0x7c] sm:$0xf]
      %v1162 = vld [vmem:[%s1139 + $0x84] sm:$0xf]
      %v1163 = vld [vmem:[%s1139 + $0x88] sm:$0xf]
      %v1164 = vld [vmem:[%s1139 + $0x90] sm:$0xf]
      %v1165 = vld [vmem:[%s1139 + $0x94] sm:$0xf]
      %v1166 = vld [vmem:[%s1139 + $0x9c] sm:$0xf]
      %v1167 = vld [vmem:[%s1139 + $0xa0] sm:$0xf]
      %v1168 = vld [vmem:[%s1139 + $0xa8] sm:$0xf]
      %v1169 = vld [vmem:[%s1139 + $0xac] sm:$0xf]
      %v1170 = vld [vmem:[%s1139 + $0xb4] sm:$0xf]
      %v1171 = vld [vmem:[%s1139 + $0xb8] sm:$0xf]
      %v1172 = vld [vmem:[%s1106 + $0x8] sm:$0x1]
      %v1173 = vld [vmem:[%s1106 + $0x14] sm:$0x1]
      %v1174 = vld [vmem:[%s1106 + $0x20] sm:$0x1]
      %v1175 = vld [vmem:[%s1106 + $0x2c] sm:$0x1]
      %v1176 = vld [vmem:[%s1106 + $0x38] sm:$0x1]
      %v1177 = vld [vmem:[%s1106 + $0x44] sm:$0x1]
      %v1178 = vld [vmem:[%s1106 + $0x50] sm:$0x1]
      %v1179 = vld [vmem:[%s1106 + $0x5c] sm:$0x1]
      %v1180 = vld [vmem:[%s1106 + $0x68] sm:$0x1]
      %v1181 = vld [vmem:[%s1106 + $0x74] sm:$0x1]
      %v1182 = vld [vmem:[%s1106 + $0x80] sm:$0x1]
      %v1183 = vld [vmem:[%s1106 + $0x8c] sm:$0x1]
      %v1184 = vld [vmem:[%s1106 + $0x98] sm:$0x1]
      %v1185 = vld [vmem:[%s1106 + $0xa4] sm:$0x1]
      %v1186 = vld [vmem:[%s1106 + $0xb0] sm:$0x1]
      %v1187 = vld [vmem:[%s1106 + $0xbc] sm:$0x1]
      %v1189 = vshrl.u32 %v1107, 16
      %v1191 = vrot.slane %v1189, 4
      %v1192 = vshll.u32 %v1107, 16
      %v1194 = vrot.slane %v1192, 5
      %v1195 = vor.u32 %v1191, %v1194
      %v1196 = vrot.slane %v1195, 4
      %v1198 = vshll.u32 %v1108, 16
      %v1200 = vrot.slane %v1198, 5
      %v1201 = vsel %vm255, %v1196, %v1200
      %v1202 = vshrl.u32 %v1108, 16
      %v1204 = vrot.slane %v1202, 4
      %v1205 = vor.u32 %v1204, %v1200
      %v1206 = vrot.slane %v1205, 4
      %v1208 = vshll.u32 %v1172, 16
      %v1210 = vrot.slane %v1208, 5
      %v1211 = vsel %vm255, %v1206, %v1210
      %v1213 = vshrl.u32 %v1109, 16
      %v1215 = vrot.slane %v1213, 4
      %v1216 = vshll.u32 %v1109, 16
      %v1218 = vrot.slane %v1216, 5
      %v1219 = vor.u32 %v1215, %v1218
      %v1220 = vrot.slane %v1219, 4
      %v1222 = vshll.u32 %v1110, 16
      %v1224 = vrot.slane %v1222, 5
      %v1225 = vsel %vm255, %v1220, %v1224
      %v1226 = vshrl.u32 %v1110, 16
      %v1228 = vrot.slane %v1226, 4
      %v1229 = vor.u32 %v1228, %v1224
      %v1230 = vrot.slane %v1229, 4
      %v1232 = vshll.u32 %v1173, 16
      %v1234 = vrot.slane %v1232, 5
      %v1235 = vsel %vm255, %v1230, %v1234
      %v1237 = vshrl.u32 %v1111, 16
      %v1239 = vrot.slane %v1237, 4
      %v1240 = vshll.u32 %v1111, 16
      %v1242 = vrot.slane %v1240, 5
      %v1243 = vor.u32 %v1239, %v1242
      %v1244 = vrot.slane %v1243, 4
      %v1246 = vshll.u32 %v1112, 16
      %v1248 = vrot.slane %v1246, 5
      %v1249 = vsel %vm255, %v1244, %v1248
      %v1250 = vshrl.u32 %v1112, 16
      %v1252 = vrot.slane %v1250, 4
      %v1253 = vor.u32 %v1252, %v1248
      %v1254 = vrot.slane %v1253, 4
      %v1256 = vshll.u32 %v1174, 16
      %v1258 = vrot.slane %v1256, 5
      %v1259 = vsel %vm255, %v1254, %v1258
      %v1261 = vshrl.u32 %v1113, 16
      %v1263 = vrot.slane %v1261, 4
      %v1264 = vshll.u32 %v1113, 16
      %v1266 = vrot.slane %v1264, 5
      %v1267 = vor.u32 %v1263, %v1266
      %v1268 = vrot.slane %v1267, 4
      %v1270 = vshll.u32 %v1114, 16
      %v1272 = vrot.slane %v1270, 5
      %v1273 = vsel %vm255, %v1268, %v1272
      %v1274 = vshrl.u32 %v1114, 16
      %v1276 = vrot.slane %v1274, 4
      %v1277 = vor.u32 %v1276, %v1272
      %v1278 = vrot.slane %v1277, 4
      %v1280 = vshll.u32 %v1175, 16
      %v1282 = vrot.slane %v1280, 5
      %v1283 = vsel %vm255, %v1278, %v1282
      %v1285 = vshrl.u32 %v1115, 16
      %v1287 = vrot.slane %v1285, 4
      %v1288 = vshll.u32 %v1115, 16
      %v1290 = vrot.slane %v1288, 5
      %v1291 = vor.u32 %v1287, %v1290
      %v1292 = vrot.slane %v1291, 4
      %v1294 = vshll.u32 %v1116, 16
      %v1296 = vrot.slane %v1294, 5
      %v1297 = vsel %vm255, %v1292, %v1296
      %v1298 = vshrl.u32 %v1116, 16
      %v1300 = vrot.slane %v1298, 4
      %v1301 = vor.u32 %v1300, %v1296
      %v1302 = vrot.slane %v1301, 4
      %v1304 = vshll.u32 %v1176, 16
      %v1306 = vrot.slane %v1304, 5
      %v1307 = vsel %vm255, %v1302, %v1306
      %v1309 = vshrl.u32 %v1117, 16
      %v1311 = vrot.slane %v1309, 4
      %v1312 = vshll.u32 %v1117, 16
      %v1314 = vrot.slane %v1312, 5
      %v1315 = vor.u32 %v1311, %v1314
      %v1316 = vrot.slane %v1315, 4
      %v1318 = vshll.u32 %v1118, 16
      %v1320 = vrot.slane %v1318, 5
      %v1321 = vsel %vm255, %v1316, %v1320
      %v1322 = vshrl.u32 %v1118, 16
      %v1324 = vrot.slane %v1322, 4
      %v1325 = vor.u32 %v1324, %v1320
      %v1326 = vrot.slane %v1325, 4
      %v1328 = vshll.u32 %v1177, 16
      %v1330 = vrot.slane %v1328, 5
      %v1331 = vsel %vm255, %v1326, %v1330
      %v1333 = vshrl.u32 %v1119, 16
      %v1335 = vrot.slane %v1333, 4
      %v1336 = vshll.u32 %v1119, 16
      %v1338 = vrot.slane %v1336, 5
      %v1339 = vor.u32 %v1335, %v1338
      %v1340 = vrot.slane %v1339, 4
      %v1342 = vshll.u32 %v1120, 16
      %v1344 = vrot.slane %v1342, 5
      %v1345 = vsel %vm255, %v1340, %v1344
      %v1346 = vshrl.u32 %v1120, 16
      %v1348 = vrot.slane %v1346, 4
      %v1349 = vor.u32 %v1348, %v1344
      %v1350 = vrot.slane %v1349, 4
      %v1352 = vshll.u32 %v1178, 16
      %v1354 = vrot.slane %v1352, 5
      %v1355 = vsel %vm255, %v1350, %v1354
      %v1357 = vshrl.u32 %v1121, 16
      %v1359 = vrot.slane %v1357, 4
      %v1360 = vshll.u32 %v1121, 16
      %v1362 = vrot.slane %v1360, 5
      %v1363 = vor.u32 %v1359, %v1362
      %v1364 = vrot.slane %v1363, 4
      %v1366 = vshll.u32 %v1122, 16
      %v1368 = vrot.slane %v1366, 5
      %v1369 = vsel %vm255, %v1364, %v1368
      %v1370 = vshrl.u32 %v1122, 16
      %v1372 = vrot.slane %v1370, 4
      %v1373 = vor.u32 %v1372, %v1368
      %v1374 = vrot.slane %v1373, 4
      %v1376 = vshll.u32 %v1179, 16
      %v1378 = vrot.slane %v1376, 5
      %v1379 = vsel %vm255, %v1374, %v1378
      %v1381 = vshrl.u32 %v1123, 16
      %v1383 = vrot.slane %v1381, 4
      %v1384 = vshll.u32 %v1123, 16
      %v1386 = vrot.slane %v1384, 5
      %v1387 = vor.u32 %v1383, %v1386
      %v1388 = vrot.slane %v1387, 4
      %v1390 = vshll.u32 %v1124, 16
      %v1392 = vrot.slane %v1390, 5
      %v1393 = vsel %vm255, %v1388, %v1392
      %v1394 = vshrl.u32 %v1124, 16
      %v1396 = vrot.slane %v1394, 4
      %v1397 = vor.u32 %v1396, %v1392
      %v1398 = vrot.slane %v1397, 4
      %v1400 = vshll.u32 %v1180, 16
      %v1402 = vrot.slane %v1400, 5
      %v1403 = vsel %vm255, %v1398, %v1402
      %v1405 = vshrl.u32 %v1125, 16
      %v1407 = vrot.slane %v1405, 4
      %v1408 = vshll.u32 %v1125, 16
      %v1410 = vrot.slane %v1408, 5
      %v1411 = vor.u32 %v1407, %v1410
      %v1412 = vrot.slane %v1411, 4
      %v1414 = vshll.u32 %v1126, 16
      %v1416 = vrot.slane %v1414, 5
      %v1417 = vsel %vm255, %v1412, %v1416
      %v1418 = vshrl.u32 %v1126, 16
      %v1420 = vrot.slane %v1418, 4
      %v1421 = vor.u32 %v1420, %v1416
      %v1422 = vrot.slane %v1421, 4
      %v1424 = vshll.u32 %v1181, 16
      %v1426 = vrot.slane %v1424, 5
      %v1427 = vsel %vm255, %v1422, %v1426
      %v1429 = vshrl.u32 %v1127, 16
      %v1431 = vrot.slane %v1429, 4
      %v1432 = vshll.u32 %v1127, 16
      %v1434 = vrot.slane %v1432, 5
      %v1435 = vor.u32 %v1431, %v1434
      %v1436 = vrot.slane %v1435, 4
      %v1438 = vshll.u32 %v1128, 16
      %v1440 = vrot.slane %v1438, 5
      %v1441 = vsel %vm255, %v1436, %v1440
      %v1442 = vshrl.u32 %v1128, 16
      %v1444 = vrot.slane %v1442, 4
      %v1445 = vor.u32 %v1444, %v1440
      %v1446 = vrot.slane %v1445, 4
      %v1448 = vshll.u32 %v1182, 16
      %v1450 = vrot.slane %v1448, 5
      %v1451 = vsel %vm255, %v1446, %v1450
      %v1453 = vshrl.u32 %v1129, 16
      %v1455 = vrot.slane %v1453, 4
      %v1456 = vshll.u32 %v1129, 16
      %v1458 = vrot.slane %v1456, 5
      %v1459 = vor.u32 %v1455, %v1458
      %v1460 = vrot.slane %v1459, 4
      %v1462 = vshll.u32 %v1130, 16
      %v1464 = vrot.slane %v1462, 5
      %v1465 = vsel %vm255, %v1460, %v1464
      %v1466 = vshrl.u32 %v1130, 16
      %v1468 = vrot.slane %v1466, 4
      %v1469 = vor.u32 %v1468, %v1464
      %v1470 = vrot.slane %v1469, 4
      %v1472 = vshll.u32 %v1183, 16
      %v1474 = vrot.slane %v1472, 5
      %v1475 = vsel %vm255, %v1470, %v1474
      %v1477 = vshrl.u32 %v1131, 16
      %v1479 = vrot.slane %v1477, 4
      %v1480 = vshll.u32 %v1131, 16
      %v1482 = vrot.slane %v1480, 5
      %v1483 = vor.u32 %v1479, %v1482
      %v1484 = vrot.slane %v1483, 4
      %v1486 = vshll.u32 %v1132, 16
      %v1488 = vrot.slane %v1486, 5
      %v1489 = vsel %vm255, %v1484, %v1488
      %v1490 = vshrl.u32 %v1132, 16
      %v1492 = vrot.slane %v1490, 4
      %v1493 = vor.u32 %v1492, %v1488
      %v1494 = vrot.slane %v1493, 4
      %v1496 = vshll.u32 %v1184, 16
      %v1498 = vrot.slane %v1496, 5
      %v1499 = vsel %vm255, %v1494, %v1498
      %v1501 = vshrl.u32 %v1133, 16
      %v1503 = vrot.slane %v1501, 4
      %v1504 = vshll.u32 %v1133, 16
      %v1506 = vrot.slane %v1504, 5
      %v1507 = vor.u32 %v1503, %v1506
      %v1508 = vrot.slane %v1507, 4
      %v1510 = vshll.u32 %v1134, 16
      %v1512 = vrot.slane %v1510, 5
      %v1513 = vsel %vm255, %v1508, %v1512
      %v1514 = vshrl.u32 %v1134, 16
      %v1516 = vrot.slane %v1514, 4
      %v1517 = vor.u32 %v1516, %v1512
      %v1518 = vrot.slane %v1517, 4
      %v1520 = vshll.u32 %v1185, 16
      %v1522 = vrot.slane %v1520, 5
      %v1523 = vsel %vm255, %v1518, %v1522
      %v1525 = vshrl.u32 %v1135, 16
      %v1527 = vrot.slane %v1525, 4
      %v1528 = vshll.u32 %v1135, 16
      %v1530 = vrot.slane %v1528, 5
      %v1531 = vor.u32 %v1527, %v1530
      %v1532 = vrot.slane %v1531, 4
      %v1534 = vshll.u32 %v1136, 16
      %v1536 = vrot.slane %v1534, 5
      %v1537 = vsel %vm255, %v1532, %v1536
      %v1538 = vshrl.u32 %v1136, 16
      %v1540 = vrot.slane %v1538, 4
      %v1541 = vor.u32 %v1540, %v1536
      %v1542 = vrot.slane %v1541, 4
      %v1544 = vshll.u32 %v1186, 16
      %v1546 = vrot.slane %v1544, 5
      %v1547 = vsel %vm255, %v1542, %v1546
      %v1549 = vshrl.u32 %v1137, 16
      %v1551 = vrot.slane %v1549, 4
      %v1552 = vshll.u32 %v1137, 16
      %v1554 = vrot.slane %v1552, 5
      %v1555 = vor.u32 %v1551, %v1554
      %v1556 = vrot.slane %v1555, 4
      %v1558 = vshll.u32 %v1138, 16
      %v1560 = vrot.slane %v1558, 5
      %v1561 = vsel %vm255, %v1556, %v1560
      %v1562 = vshrl.u32 %v1138, 16
      %v1564 = vrot.slane %v1562, 4
      %v1565 = vor.u32 %v1564, %v1560
      %v1566 = vrot.slane %v1565, 4
      %v1568 = vshll.u32 %v1187, 16
      %v1570 = vrot.slane %v1568, 5
      %v1571 = vsel %vm255, %v1566, %v1570
      %v1604 = vunpack.c.l.b16 %v172
      %v1605 = vunpack.c.l.b16 %v173
      %v1606 = vunpack.c.l.b16 %v174
      %v1607 = vunpack.c.l.b16 %v175
      %v1608 = vunpack.c.l.b16 %v176
      %v1609 = vunpack.c.l.b16 %v177
      %v1610 = vunpack.c.l.b16 %v178
      %v1611 = vunpack.c.l.b16 %v179
      %v1612 = vunpack.c.l.b16 %v180
      %v1613 = vunpack.c.l.b16 %v181
      %v1614 = vunpack.c.l.b16 %v182
      %v1615 = vunpack.c.l.b16 %v183
      %v1616 = vunpack.c.l.b16 %v184
      %v1617 = vunpack.c.l.b16 %v185
      %v1618 = vunpack.c.l.b16 %v186
      %v1619 = vunpack.c.l.b16 %v187
      %v1620 = vunpack.c.l.b16 %v188
      %v1621 = vunpack.c.l.b16 %v189
      %v1622 = vunpack.c.l.b16 %v190
      %v1623 = vunpack.c.l.b16 %v191
      %v1624 = vunpack.c.l.b16 %v192
      %v1625 = vunpack.c.l.b16 %v193
      %v1626 = vunpack.c.l.b16 %v194
      %v1627 = vunpack.c.l.b16 %v195
      %v1628 = vunpack.c.l.b16 %v196
      %v1629 = vunpack.c.l.b16 %v197
      %v1630 = vunpack.c.l.b16 %v198
      %v1631 = vunpack.c.l.b16 %v199
      %v1632 = vunpack.c.l.b16 %v200
      %v1633 = vunpack.c.l.b16 %v201
      %v1634 = vunpack.c.l.b16 %v202
      %v1635 = vunpack.c.l.b16 %v203
      %v1636 = vpack.c.b16 %v1605, %v1604
      %v1637 = vpack.c.b16 %v1607, %v1606
      %v1638 = vpack.c.b16 %v1609, %v1608
      %v1639 = vpack.c.b16 %v1611, %v1610
      %v1640 = vpack.c.b16 %v1613, %v1612
      %v1641 = vpack.c.b16 %v1615, %v1614
      %v1642 = vpack.c.b16 %v1617, %v1616
      %v1643 = vpack.c.b16 %v1619, %v1618
      %v1644 = vpack.c.b16 %v1621, %v1620
      %v1645 = vpack.c.b16 %v1623, %v1622
      %v1646 = vpack.c.b16 %v1625, %v1624
      %v1647 = vpack.c.b16 %v1627, %v1626
      %v1648 = vpack.c.b16 %v1629, %v1628
      %v1649 = vpack.c.b16 %v1631, %v1630
      %v1650 = vpack.c.b16 %v1633, %v1632
      %v1651 = vpack.c.b16 %v1635, %v1634
      %v1684 = vunpack.c.l.b16 %v205
      %v1685 = vunpack.c.l.b16 %v206
      %v1686 = vunpack.c.l.b16 %v207
      %v1687 = vunpack.c.l.b16 %v208
      %v1688 = vunpack.c.l.b16 %v209
      %v1689 = vunpack.c.l.b16 %v210
      %v1690 = vunpack.c.l.b16 %v211
      %v1691 = vunpack.c.l.b16 %v212
      %v1692 = vunpack.c.l.b16 %v213
      %v1693 = vunpack.c.l.b16 %v214
      %v1694 = vunpack.c.l.b16 %v215
      %v1695 = vunpack.c.l.b16 %v216
      %v1696 = vunpack.c.l.b16 %v217
      %v1697 = vunpack.c.l.b16 %v218
      %v1698 = vunpack.c.l.b16 %v219
      %v1699 = vunpack.c.l.b16 %v220
      %v1700 = vunpack.c.l.b16 %v221
      %v1701 = vunpack.c.l.b16 %v222
      %v1702 = vunpack.c.l.b16 %v223
      %v1703 = vunpack.c.l.b16 %v224
      %v1704 = vunpack.c.l.b16 %v225
      %v1705 = vunpack.c.l.b16 %v226
      %v1706 = vunpack.c.l.b16 %v227
      %v1707 = vunpack.c.l.b16 %v228
      %v1708 = vunpack.c.l.b16 %v229
      %v1709 = vunpack.c.l.b16 %v230
      %v1710 = vunpack.c.l.b16 %v231
      %v1711 = vunpack.c.l.b16 %v232
      %v1712 = vunpack.c.l.b16 %v233
      %v1713 = vunpack.c.l.b16 %v234
      %v1714 = vunpack.c.l.b16 %v235
      %v1715 = vunpack.c.l.b16 %v236
      %v1716 = vpack.c.b16 %v1685, %v1684
      %v1717 = vpack.c.b16 %v1687, %v1686
      %v1718 = vpack.c.b16 %v1689, %v1688
      %v1719 = vpack.c.b16 %v1691, %v1690
      %v1720 = vpack.c.b16 %v1693, %v1692
      %v1721 = vpack.c.b16 %v1695, %v1694
      %v1722 = vpack.c.b16 %v1697, %v1696
      %v1723 = vpack.c.b16 %v1699, %v1698
      %v1724 = vpack.c.b16 %v1701, %v1700
      %v1725 = vpack.c.b16 %v1703, %v1702
      %v1726 = vpack.c.b16 %v1705, %v1704
      %v1727 = vpack.c.b16 %v1707, %v1706
      %v1728 = vpack.c.b16 %v1709, %v1708
      %v1729 = vpack.c.b16 %v1711, %v1710
      %v1730 = vpack.c.b16 %v1713, %v1712
      %v1731 = vpack.c.b16 %v1715, %v1714
      %1732 = vrot.lane.b32.xlu0 %v1716, 8
      %v1733 = vpop.permute.xlu0 %1732
      %1734 = vrot.lane.b32.xlu0 %v1717, 8
      %v1735 = vpop.permute.xlu0 %1734
      %1736 = vrot.lane.b32.xlu0 %v1718, 8
      %v1737 = vpop.permute.xlu0 %1736
      %1738 = vrot.lane.b32.xlu0 %v1719, 8
      %v1739 = vpop.permute.xlu0 %1738
      %1740 = vrot.lane.b32.xlu0 %v1720, 8
      %v1741 = vpop.permute.xlu0 %1740
      %1742 = vrot.lane.b32.xlu0 %v1721, 8
      %v1743 = vpop.permute.xlu0 %1742
      %1744 = vrot.lane.b32.xlu0 %v1722, 8
      %v1745 = vpop.permute.xlu0 %1744
      %1746 = vrot.lane.b32.xlu0 %v1723, 8
      %v1747 = vpop.permute.xlu0 %1746
      %1748 = vrot.lane.b32.xlu0 %v1724, 8
      %v1749 = vpop.permute.xlu0 %1748
      %1750 = vrot.lane.b32.xlu0 %v1725, 8
      %v1751 = vpop.permute.xlu0 %1750
      %1752 = vrot.lane.b32.xlu0 %v1726, 8
      %v1753 = vpop.permute.xlu0 %1752
      %1754 = vrot.lane.b32.xlu0 %v1727, 8
      %v1755 = vpop.permute.xlu0 %1754
      %1756 = vrot.lane.b32.xlu0 %v1728, 8
      %v1757 = vpop.permute.xlu0 %1756
      %1758 = vrot.lane.b32.xlu0 %v1729, 8
      %v1759 = vpop.permute.xlu0 %1758
      %1760 = vrot.lane.b32.xlu0 %v1730, 8
      %v1761 = vpop.permute.xlu0 %1760
      %1762 = vrot.lane.b32.xlu0 %v1731, 8
      %v1763 = vpop.permute.xlu0 %1762
      %v1764 = vunpack.c.l.b16 %v269
      %v1765 = vunpack.c.l.b16 %v279
      %v1766 = vunpack.c.l.b16 %v293
      %v1767 = vunpack.c.l.b16 %v303
      %v1768 = vunpack.c.l.b16 %v317
      %v1769 = vunpack.c.l.b16 %v327
      %v1770 = vunpack.c.l.b16 %v341
      %v1771 = vunpack.c.l.b16 %v351
      %v1772 = vunpack.c.l.b16 %v365
      %v1773 = vunpack.c.l.b16 %v375
      %v1774 = vunpack.c.l.b16 %v389
      %v1775 = vunpack.c.l.b16 %v399
      %v1776 = vunpack.c.l.b16 %v413
      %v1777 = vunpack.c.l.b16 %v423
      %v1778 = vunpack.c.l.b16 %v437
      %v1779 = vunpack.c.l.b16 %v447
      %v1780 = vunpack.c.l.b16 %v461
      %v1781 = vunpack.c.l.b16 %v471
      %v1782 = vunpack.c.l.b16 %v485
      %v1783 = vunpack.c.l.b16 %v495
      %v1784 = vunpack.c.l.b16 %v509
      %v1785 = vunpack.c.l.b16 %v519
      %v1786 = vunpack.c.l.b16 %v533
      %v1787 = vunpack.c.l.b16 %v543
      %v1788 = vunpack.c.l.b16 %v557
      %v1789 = vunpack.c.l.b16 %v567
      %v1790 = vunpack.c.l.b16 %v581
      %v1791 = vunpack.c.l.b16 %v591
      %v1792 = vunpack.c.l.b16 %v605
      %v1793 = vunpack.c.l.b16 %v615
      %v1794 = vunpack.c.l.b16 %v629
      %v1795 = vunpack.c.l.b16 %v639
      %v1796 = vpack.c.b16 %v1765, %v1764
      %v1797 = vpack.c.b16 %v1767, %v1766
      %v1798 = vpack.c.b16 %v1769, %v1768
      %v1799 = vpack.c.b16 %v1771, %v1770
      %v1800 = vpack.c.b16 %v1773, %v1772
      %v1801 = vpack.c.b16 %v1775, %v1774
      %v1802 = vpack.c.b16 %v1777, %v1776
      %v1803 = vpack.c.b16 %v1779, %v1778
      %v1804 = vpack.c.b16 %v1781, %v1780
      %v1805 = vpack.c.b16 %v1783, %v1782
      %v1806 = vpack.c.b16 %v1785, %v1784
      %v1807 = vpack.c.b16 %v1787, %v1786
      %v1808 = vpack.c.b16 %v1789, %v1788
      %v1809 = vpack.c.b16 %v1791, %v1790
      %v1810 = vpack.c.b16 %v1793, %v1792
      %v1811 = vpack.c.b16 %v1795, %v1794
      %1812 = vrot.lane.b32.xlu0 %v1796, 16
      %v1813 = vpop.permute.xlu0 %1812
      %1814 = vrot.lane.b32.xlu0 %v1797, 16
      %v1815 = vpop.permute.xlu0 %1814
      %1816 = vrot.lane.b32.xlu0 %v1798, 16
      %v1817 = vpop.permute.xlu0 %1816
      %1818 = vrot.lane.b32.xlu0 %v1799, 16
      %v1819 = vpop.permute.xlu0 %1818
      %1820 = vrot.lane.b32.xlu0 %v1800, 16
      %v1821 = vpop.permute.xlu0 %1820
      %1822 = vrot.lane.b32.xlu0 %v1801, 16
      %v1823 = vpop.permute.xlu0 %1822
      %1824 = vrot.lane.b32.xlu0 %v1802, 16
      %v1825 = vpop.permute.xlu0 %1824
      %1826 = vrot.lane.b32.xlu0 %v1803, 16
      %v1827 = vpop.permute.xlu0 %1826
      %1828 = vrot.lane.b32.xlu0 %v1804, 16
      %v1829 = vpop.permute.xlu0 %1828
      %1830 = vrot.lane.b32.xlu0 %v1805, 16
      %v1831 = vpop.permute.xlu0 %1830
      %1832 = vrot.lane.b32.xlu0 %v1806, 16
      %v1833 = vpop.permute.xlu0 %1832
      %1834 = vrot.lane.b32.xlu0 %v1807, 16
      %v1835 = vpop.permute.xlu0 %1834
      %1836 = vrot.lane.b32.xlu0 %v1808, 16
      %v1837 = vpop.permute.xlu0 %1836
      %1838 = vrot.lane.b32.xlu0 %v1809, 16
      %v1839 = vpop.permute.xlu0 %1838
      %1840 = vrot.lane.b32.xlu0 %v1810, 16
      %v1841 = vpop.permute.xlu0 %1840
      %1842 = vrot.lane.b32.xlu0 %v1811, 16
      %v1843 = vpop.permute.xlu0 %1842
      %v1876 = vunpack.c.l.b16 %v641
      %v1877 = vunpack.c.l.b16 %v642
      %v1878 = vunpack.c.l.b16 %v643
      %v1879 = vunpack.c.l.b16 %v644
      %v1880 = vunpack.c.l.b16 %v645
      %v1881 = vunpack.c.l.b16 %v646
      %v1882 = vunpack.c.l.b16 %v647
      %v1883 = vunpack.c.l.b16 %v648
      %v1884 = vunpack.c.l.b16 %v649
      %v1885 = vunpack.c.l.b16 %v650
      %v1886 = vunpack.c.l.b16 %v651
      %v1887 = vunpack.c.l.b16 %v652
      %v1888 = vunpack.c.l.b16 %v653
      %v1889 = vunpack.c.l.b16 %v654
      %v1890 = vunpack.c.l.b16 %v655
      %v1891 = vunpack.c.l.b16 %v656
      %v1892 = vunpack.c.l.b16 %v657
      %v1893 = vunpack.c.l.b16 %v658
      %v1894 = vunpack.c.l.b16 %v659
      %v1895 = vunpack.c.l.b16 %v660
      %v1896 = vunpack.c.l.b16 %v661
      %v1897 = vunpack.c.l.b16 %v662
      %v1898 = vunpack.c.l.b16 %v663
      %v1899 = vunpack.c.l.b16 %v664
      %v1900 = vunpack.c.l.b16 %v665
      %v1901 = vunpack.c.l.b16 %v666
      %v1902 = vunpack.c.l.b16 %v667
      %v1903 = vunpack.c.l.b16 %v668
      %v1904 = vunpack.c.l.b16 %v669
      %v1905 = vunpack.c.l.b16 %v670
      %v1906 = vunpack.c.l.b16 %v671
      %v1907 = vunpack.c.l.b16 %v672
      %v1908 = vpack.c.b16 %v1877, %v1876
      %v1909 = vpack.c.b16 %v1879, %v1878
      %v1910 = vpack.c.b16 %v1881, %v1880
      %v1911 = vpack.c.b16 %v1883, %v1882
      %v1912 = vpack.c.b16 %v1885, %v1884
      %v1913 = vpack.c.b16 %v1887, %v1886
      %v1914 = vpack.c.b16 %v1889, %v1888
      %v1915 = vpack.c.b16 %v1891, %v1890
      %v1916 = vpack.c.b16 %v1893, %v1892
      %v1917 = vpack.c.b16 %v1895, %v1894
      %v1918 = vpack.c.b16 %v1897, %v1896
      %v1919 = vpack.c.b16 %v1899, %v1898
      %v1920 = vpack.c.b16 %v1901, %v1900
      %v1921 = vpack.c.b16 %v1903, %v1902
      %v1922 = vpack.c.b16 %v1905, %v1904
      %v1923 = vpack.c.b16 %v1907, %v1906
      %1924 = vrot.lane.b32.xlu0 %v1908, 24
      %v1925 = vpop.permute.xlu0 %1924
      %1926 = vrot.lane.b32.xlu0 %v1909, 24
      %v1927 = vpop.permute.xlu0 %1926
      %1928 = vrot.lane.b32.xlu0 %v1910, 24
      %v1929 = vpop.permute.xlu0 %1928
      %1930 = vrot.lane.b32.xlu0 %v1911, 24
      %v1931 = vpop.permute.xlu0 %1930
      %1932 = vrot.lane.b32.xlu0 %v1912, 24
      %v1933 = vpop.permute.xlu0 %1932
      %1934 = vrot.lane.b32.xlu0 %v1913, 24
      %v1935 = vpop.permute.xlu0 %1934
      %1936 = vrot.lane.b32.xlu0 %v1914, 24
      %v1937 = vpop.permute.xlu0 %1936
      %1938 = vrot.lane.b32.xlu0 %v1915, 24
      %v1939 = vpop.permute.xlu0 %1938
      %1940 = vrot.lane.b32.xlu0 %v1916, 24
      %v1941 = vpop.permute.xlu0 %1940
      %1942 = vrot.lane.b32.xlu0 %v1917, 24
      %v1943 = vpop.permute.xlu0 %1942
      %1944 = vrot.lane.b32.xlu0 %v1918, 24
      %v1945 = vpop.permute.xlu0 %1944
      %1946 = vrot.lane.b32.xlu0 %v1919, 24
      %v1947 = vpop.permute.xlu0 %1946
      %1948 = vrot.lane.b32.xlu0 %v1920, 24
      %v1949 = vpop.permute.xlu0 %1948
      %1950 = vrot.lane.b32.xlu0 %v1921, 24
      %v1951 = vpop.permute.xlu0 %1950
      %1952 = vrot.lane.b32.xlu0 %v1922, 24
      %v1953 = vpop.permute.xlu0 %1952
      %1954 = vrot.lane.b32.xlu0 %v1923, 24
      %v1955 = vpop.permute.xlu0 %1954
      %v1988 = vunpack.c.l.b16 %v674
      %v1989 = vunpack.c.l.b16 %v675
      %v1990 = vunpack.c.l.b16 %v676
      %v1991 = vunpack.c.l.b16 %v677
      %v1992 = vunpack.c.l.b16 %v678
      %v1993 = vunpack.c.l.b16 %v679
      %v1994 = vunpack.c.l.b16 %v680
      %v1995 = vunpack.c.l.b16 %v681
      %v1996 = vunpack.c.l.b16 %v682
      %v1997 = vunpack.c.l.b16 %v683
      %v1998 = vunpack.c.l.b16 %v684
      %v1999 = vunpack.c.l.b16 %v685
      %v2000 = vunpack.c.l.b16 %v686
      %v2001 = vunpack.c.l.b16 %v687
      %v2002 = vunpack.c.l.b16 %v688
      %v2003 = vunpack.c.l.b16 %v689
      %v2004 = vunpack.c.l.b16 %v690
      %v2005 = vunpack.c.l.b16 %v691
      %v2006 = vunpack.c.l.b16 %v692
      %v2007 = vunpack.c.l.b16 %v693
      %v2008 = vunpack.c.l.b16 %v694
      %v2009 = vunpack.c.l.b16 %v695
      %v2010 = vunpack.c.l.b16 %v696
      %v2011 = vunpack.c.l.b16 %v697
      %v2012 = vunpack.c.l.b16 %v698
      %v2013 = vunpack.c.l.b16 %v699
      %v2014 = vunpack.c.l.b16 %v700
      %v2015 = vunpack.c.l.b16 %v701
      %v2016 = vunpack.c.l.b16 %v702
      %v2017 = vunpack.c.l.b16 %v703
      %v2018 = vunpack.c.l.b16 %v704
      %v2019 = vunpack.c.l.b16 %v705
      %v2020 = vpack.c.b16 %v1989, %v1988
      %v2021 = vpack.c.b16 %v1991, %v1990
      %v2022 = vpack.c.b16 %v1993, %v1992
      %v2023 = vpack.c.b16 %v1995, %v1994
      %v2024 = vpack.c.b16 %v1997, %v1996
      %v2025 = vpack.c.b16 %v1999, %v1998
      %v2026 = vpack.c.b16 %v2001, %v2000
      %v2027 = vpack.c.b16 %v2003, %v2002
      %v2028 = vpack.c.b16 %v2005, %v2004
      %v2029 = vpack.c.b16 %v2007, %v2006
      %v2030 = vpack.c.b16 %v2009, %v2008
      %v2031 = vpack.c.b16 %v2011, %v2010
      %v2032 = vpack.c.b16 %v2013, %v2012
      %v2033 = vpack.c.b16 %v2015, %v2014
      %v2034 = vpack.c.b16 %v2017, %v2016
      %v2035 = vpack.c.b16 %v2019, %v2018
      %2036 = vrot.lane.b32.xlu0 %v2020, 32
      %v2037 = vpop.permute.xlu0 %2036
      %2038 = vrot.lane.b32.xlu0 %v2021, 32
      %v2039 = vpop.permute.xlu0 %2038
      %2040 = vrot.lane.b32.xlu0 %v2022, 32
      %v2041 = vpop.permute.xlu0 %2040
      %2042 = vrot.lane.b32.xlu0 %v2023, 32
      %v2043 = vpop.permute.xlu0 %2042
      %2044 = vrot.lane.b32.xlu0 %v2024, 32
      %v2045 = vpop.permute.xlu0 %2044
      %2046 = vrot.lane.b32.xlu0 %v2025, 32
      %v2047 = vpop.permute.xlu0 %2046
      %2048 = vrot.lane.b32.xlu0 %v2026, 32
      %v2049 = vpop.permute.xlu0 %2048
      %2050 = vrot.lane.b32.xlu0 %v2027, 32
      %v2051 = vpop.permute.xlu0 %2050
      %2052 = vrot.lane.b32.xlu0 %v2028, 32
      %v2053 = vpop.permute.xlu0 %2052
      %2054 = vrot.lane.b32.xlu0 %v2029, 32
      %v2055 = vpop.permute.xlu0 %2054
      %2056 = vrot.lane.b32.xlu0 %v2030, 32
      %v2057 = vpop.permute.xlu0 %2056
      %2058 = vrot.lane.b32.xlu0 %v2031, 32
      %v2059 = vpop.permute.xlu0 %2058
      %2060 = vrot.lane.b32.xlu0 %v2032, 32
      %v2061 = vpop.permute.xlu0 %2060
      %2062 = vrot.lane.b32.xlu0 %v2033, 32
      %v2063 = vpop.permute.xlu0 %2062
      %2064 = vrot.lane.b32.xlu0 %v2034, 32
      %v2065 = vpop.permute.xlu0 %2064
      %2066 = vrot.lane.b32.xlu0 %v2035, 32
      %v2067 = vpop.permute.xlu0 %2066
      %v2068 = vunpack.c.l.b16 %v735
      %v2069 = vunpack.c.l.b16 %v745
      %v2070 = vunpack.c.l.b16 %v759
      %v2071 = vunpack.c.l.b16 %v769
      %v2072 = vunpack.c.l.b16 %v783
      %v2073 = vunpack.c.l.b16 %v793
      %v2074 = vunpack.c.l.b16 %v807
      %v2075 = vunpack.c.l.b16 %v817
      %v2076 = vunpack.c.l.b16 %v831
      %v2077 = vunpack.c.l.b16 %v841
      %v2078 = vunpack.c.l.b16 %v855
      %v2079 = vunpack.c.l.b16 %v865
      %v2080 = vunpack.c.l.b16 %v879
      %v2081 = vunpack.c.l.b16 %v889
      %v2082 = vunpack.c.l.b16 %v903
      %v2083 = vunpack.c.l.b16 %v913
      %v2084 = vunpack.c.l.b16 %v927
      %v2085 = vunpack.c.l.b16 %v937
      %v2086 = vunpack.c.l.b16 %v951
      %v2087 = vunpack.c.l.b16 %v961
      %v2088 = vunpack.c.l.b16 %v975
      %v2089 = vunpack.c.l.b16 %v985
      %v2090 = vunpack.c.l.b16 %v999
      %v2091 = vunpack.c.l.b16 %v1009
      %v2092 = vunpack.c.l.b16 %v1023
      %v2093 = vunpack.c.l.b16 %v1033
      %v2094 = vunpack.c.l.b16 %v1047
      %v2095 = vunpack.c.l.b16 %v1057
      %v2096 = vunpack.c.l.b16 %v1071
      %v2097 = vunpack.c.l.b16 %v1081
      %v2098 = vunpack.c.l.b16 %v1095
      %v2099 = vunpack.c.l.b16 %v1105
      %v2100 = vpack.c.b16 %v2069, %v2068
      %v2101 = vpack.c.b16 %v2071, %v2070
      %v2102 = vpack.c.b16 %v2073, %v2072
      %v2103 = vpack.c.b16 %v2075, %v2074
      %v2104 = vpack.c.b16 %v2077, %v2076
      %v2105 = vpack.c.b16 %v2079, %v2078
      %v2106 = vpack.c.b16 %v2081, %v2080
      %v2107 = vpack.c.b16 %v2083, %v2082
      %v2108 = vpack.c.b16 %v2085, %v2084
      %v2109 = vpack.c.b16 %v2087, %v2086
      %v2110 = vpack.c.b16 %v2089, %v2088
      %v2111 = vpack.c.b16 %v2091, %v2090
      %v2112 = vpack.c.b16 %v2093, %v2092
      %v2113 = vpack.c.b16 %v2095, %v2094
      %v2114 = vpack.c.b16 %v2097, %v2096
      %v2115 = vpack.c.b16 %v2099, %v2098
      %2116 = vrot.lane.b32.xlu0 %v2100, 40
      %v2117 = vpop.permute.xlu0 %2116
      %2118 = vrot.lane.b32.xlu0 %v2101, 40
      %v2119 = vpop.permute.xlu0 %2118
      %2120 = vrot.lane.b32.xlu0 %v2102, 40
      %v2121 = vpop.permute.xlu0 %2120
      %2122 = vrot.lane.b32.xlu0 %v2103, 40
      %v2123 = vpop.permute.xlu0 %2122
      %2124 = vrot.lane.b32.xlu0 %v2104, 40
      %v2125 = vpop.permute.xlu0 %2124
      %2126 = vrot.lane.b32.xlu0 %v2105, 40
      %v2127 = vpop.permute.xlu0 %2126
      %2128 = vrot.lane.b32.xlu0 %v2106, 40
      %v2129 = vpop.permute.xlu0 %2128
      %2130 = vrot.lane.b32.xlu0 %v2107, 40
      %v2131 = vpop.permute.xlu0 %2130
      %2132 = vrot.lane.b32.xlu0 %v2108, 40
      %v2133 = vpop.permute.xlu0 %2132
      %2134 = vrot.lane.b32.xlu0 %v2109, 40
      %v2135 = vpop.permute.xlu0 %2134
      %2136 = vrot.lane.b32.xlu0 %v2110, 40
      %v2137 = vpop.permute.xlu0 %2136
      %2138 = vrot.lane.b32.xlu0 %v2111, 40
      %v2139 = vpop.permute.xlu0 %2138
      %2140 = vrot.lane.b32.xlu0 %v2112, 40
      %v2141 = vpop.permute.xlu0 %2140
      %2142 = vrot.lane.b32.xlu0 %v2113, 40
      %v2143 = vpop.permute.xlu0 %2142
      %2144 = vrot.lane.b32.xlu0 %v2114, 40
      %v2145 = vpop.permute.xlu0 %2144
      %2146 = vrot.lane.b32.xlu0 %v2115, 40
      %v2147 = vpop.permute.xlu0 %2146
      %v2180 = vunpack.c.l.b16 %v1107
      %v2181 = vunpack.c.l.b16 %v1108
      %v2182 = vunpack.c.l.b16 %v1109
      %v2183 = vunpack.c.l.b16 %v1110
      %v2184 = vunpack.c.l.b16 %v1111
      %v2185 = vunpack.c.l.b16 %v1112
      %v2186 = vunpack.c.l.b16 %v1113
      %v2187 = vunpack.c.l.b16 %v1114
      %v2188 = vunpack.c.l.b16 %v1115
      %v2189 = vunpack.c.l.b16 %v1116
      %v2190 = vunpack.c.l.b16 %v1117
      %v2191 = vunpack.c.l.b16 %v1118
      %v2192 = vunpack.c.l.b16 %v1119
      %v2193 = vunpack.c.l.b16 %v1120
      %v2194 = vunpack.c.l.b16 %v1121
      %v2195 = vunpack.c.l.b16 %v1122
      %v2196 = vunpack.c.l.b16 %v1123
      %v2197 = vunpack.c.l.b16 %v1124
      %v2198 = vunpack.c.l.b16 %v1125
      %v2199 = vunpack.c.l.b16 %v1126
      %v2200 = vunpack.c.l.b16 %v1127
      %v2201 = vunpack.c.l.b16 %v1128
      %v2202 = vunpack.c.l.b16 %v1129
      %v2203 = vunpack.c.l.b16 %v1130
      %v2204 = vunpack.c.l.b16 %v1131
      %v2205 = vunpack.c.l.b16 %v1132
      %v2206 = vunpack.c.l.b16 %v1133
      %v2207 = vunpack.c.l.b16 %v1134
      %v2208 = vunpack.c.l.b16 %v1135
      %v2209 = vunpack.c.l.b16 %v1136
      %v2210 = vunpack.c.l.b16 %v1137
      %v2211 = vunpack.c.l.b16 %v1138
      %v2212 = vpack.c.b16 %v2181, %v2180
      %v2213 = vpack.c.b16 %v2183, %v2182
      %v2214 = vpack.c.b16 %v2185, %v2184
      %v2215 = vpack.c.b16 %v2187, %v2186
      %v2216 = vpack.c.b16 %v2189, %v2188
      %v2217 = vpack.c.b16 %v2191, %v2190
      %v2218 = vpack.c.b16 %v2193, %v2192
      %v2219 = vpack.c.b16 %v2195, %v2194
      %v2220 = vpack.c.b16 %v2197, %v2196
      %v2221 = vpack.c.b16 %v2199, %v2198
      %v2222 = vpack.c.b16 %v2201, %v2200
      %v2223 = vpack.c.b16 %v2203, %v2202
      %v2224 = vpack.c.b16 %v2205, %v2204
      %v2225 = vpack.c.b16 %v2207, %v2206
      %v2226 = vpack.c.b16 %v2209, %v2208
      %v2227 = vpack.c.b16 %v2211, %v2210
      %2228 = vrot.lane.b32.xlu0 %v2212, 48
      %v2229 = vpop.permute.xlu0 %2228
      %2230 = vrot.lane.b32.xlu0 %v2213, 48
      %v2231 = vpop.permute.xlu0 %2230
      %2232 = vrot.lane.b32.xlu0 %v2214, 48
      %v2233 = vpop.permute.xlu0 %2232
      %2234 = vrot.lane.b32.xlu0 %v2215, 48
      %v2235 = vpop.permute.xlu0 %2234
      %2236 = vrot.lane.b32.xlu0 %v2216, 48
      %v2237 = vpop.permute.xlu0 %2236
      %2238 = vrot.lane.b32.xlu0 %v2217, 48
      %v2239 = vpop.permute.xlu0 %2238
      %2240 = vrot.lane.b32.xlu0 %v2218, 48
      %v2241 = vpop.permute.xlu0 %2240
      %2242 = vrot.lane.b32.xlu0 %v2219, 48
      %v2243 = vpop.permute.xlu0 %2242
      %2244 = vrot.lane.b32.xlu0 %v2220, 48
      %v2245 = vpop.permute.xlu0 %2244
      %2246 = vrot.lane.b32.xlu0 %v2221, 48
      %v2247 = vpop.permute.xlu0 %2246
      %2248 = vrot.lane.b32.xlu0 %v2222, 48
      %v2249 = vpop.permute.xlu0 %2248
      %2250 = vrot.lane.b32.xlu0 %v2223, 48
      %v2251 = vpop.permute.xlu0 %2250
      %2252 = vrot.lane.b32.xlu0 %v2224, 48
      %v2253 = vpop.permute.xlu0 %2252
      %2254 = vrot.lane.b32.xlu0 %v2225, 48
      %v2255 = vpop.permute.xlu0 %2254
      %2256 = vrot.lane.b32.xlu0 %v2226, 48
      %v2257 = vpop.permute.xlu0 %2256
      %2258 = vrot.lane.b32.xlu0 %v2227, 48
      %v2259 = vpop.permute.xlu0 %2258
      %v2292 = vunpack.c.l.b16 %v1140
      %v2293 = vunpack.c.l.b16 %v1141
      %v2294 = vunpack.c.l.b16 %v1142
      %v2295 = vunpack.c.l.b16 %v1143
      %v2296 = vunpack.c.l.b16 %v1144
      %v2297 = vunpack.c.l.b16 %v1145
      %v2298 = vunpack.c.l.b16 %v1146
      %v2299 = vunpack.c.l.b16 %v1147
      %v2300 = vunpack.c.l.b16 %v1148
      %v2301 = vunpack.c.l.b16 %v1149
      %v2302 = vunpack.c.l.b16 %v1150
      %v2303 = vunpack.c.l.b16 %v1151
      %v2304 = vunpack.c.l.b16 %v1152
      %v2305 = vunpack.c.l.b16 %v1153
      %v2306 = vunpack.c.l.b16 %v1154
      %v2307 = vunpack.c.l.b16 %v1155
      %v2308 = vunpack.c.l.b16 %v1156
      %v2309 = vunpack.c.l.b16 %v1157
      %v2310 = vunpack.c.l.b16 %v1158
      %v2311 = vunpack.c.l.b16 %v1159
      %v2312 = vunpack.c.l.b16 %v1160
      %v2313 = vunpack.c.l.b16 %v1161
      %v2314 = vunpack.c.l.b16 %v1162
      %v2315 = vunpack.c.l.b16 %v1163
      %v2316 = vunpack.c.l.b16 %v1164
      %v2317 = vunpack.c.l.b16 %v1165
      %v2318 = vunpack.c.l.b16 %v1166
      %v2319 = vunpack.c.l.b16 %v1167
      %v2320 = vunpack.c.l.b16 %v1168
      %v2321 = vunpack.c.l.b16 %v1169
      %v2322 = vunpack.c.l.b16 %v1170
      %v2323 = vunpack.c.l.b16 %v1171
      %v2324 = vpack.c.b16 %v2293, %v2292
      %v2325 = vpack.c.b16 %v2295, %v2294
      %v2326 = vpack.c.b16 %v2297, %v2296
      %v2327 = vpack.c.b16 %v2299, %v2298
      %v2328 = vpack.c.b16 %v2301, %v2300
      %v2329 = vpack.c.b16 %v2303, %v2302
      %v2330 = vpack.c.b16 %v2305, %v2304
      %v2331 = vpack.c.b16 %v2307, %v2306
      %v2332 = vpack.c.b16 %v2309, %v2308
      %v2333 = vpack.c.b16 %v2311, %v2310
      %v2334 = vpack.c.b16 %v2313, %v2312
      %v2335 = vpack.c.b16 %v2315, %v2314
      %v2336 = vpack.c.b16 %v2317, %v2316
      %v2337 = vpack.c.b16 %v2319, %v2318
      %v2338 = vpack.c.b16 %v2321, %v2320
      %v2339 = vpack.c.b16 %v2323, %v2322
      %2340 = vrot.lane.b32.xlu0 %v2324, 56
      %v2341 = vpop.permute.xlu0 %2340
      %2342 = vrot.lane.b32.xlu0 %v2325, 56
      %v2343 = vpop.permute.xlu0 %2342
      %2344 = vrot.lane.b32.xlu0 %v2326, 56
      %v2345 = vpop.permute.xlu0 %2344
      %2346 = vrot.lane.b32.xlu0 %v2327, 56
      %v2347 = vpop.permute.xlu0 %2346
      %2348 = vrot.lane.b32.xlu0 %v2328, 56
      %v2349 = vpop.permute.xlu0 %2348
      %2350 = vrot.lane.b32.xlu0 %v2329, 56
      %v2351 = vpop.permute.xlu0 %2350
      %2352 = vrot.lane.b32.xlu0 %v2330, 56
      %v2353 = vpop.permute.xlu0 %2352
      %2354 = vrot.lane.b32.xlu0 %v2331, 56
      %v2355 = vpop.permute.xlu0 %2354
      %2356 = vrot.lane.b32.xlu0 %v2332, 56
      %v2357 = vpop.permute.xlu0 %2356
      %2358 = vrot.lane.b32.xlu0 %v2333, 56
      %v2359 = vpop.permute.xlu0 %2358
      %2360 = vrot.lane.b32.xlu0 %v2334, 56
      %v2361 = vpop.permute.xlu0 %2360
      %2362 = vrot.lane.b32.xlu0 %v2335, 56
      %v2363 = vpop.permute.xlu0 %2362
      %2364 = vrot.lane.b32.xlu0 %v2336, 56
      %v2365 = vpop.permute.xlu0 %2364
      %2366 = vrot.lane.b32.xlu0 %v2337, 56
      %v2367 = vpop.permute.xlu0 %2366
      %2368 = vrot.lane.b32.xlu0 %v2338, 56
      %v2369 = vpop.permute.xlu0 %2368
      %2370 = vrot.lane.b32.xlu0 %v2339, 56
      %v2371 = vpop.permute.xlu0 %2370
      %v2372 = vunpack.c.l.b16 %v1201
      %v2373 = vunpack.c.l.b16 %v1211
      %v2374 = vunpack.c.l.b16 %v1225
      %v2375 = vunpack.c.l.b16 %v1235
      %v2376 = vunpack.c.l.b16 %v1249
      %v2377 = vunpack.c.l.b16 %v1259
      %v2378 = vunpack.c.l.b16 %v1273
      %v2379 = vunpack.c.l.b16 %v1283
      %v2380 = vunpack.c.l.b16 %v1297
      %v2381 = vunpack.c.l.b16 %v1307
      %v2382 = vunpack.c.l.b16 %v1321
      %v2383 = vunpack.c.l.b16 %v1331
      %v2384 = vunpack.c.l.b16 %v1345
      %v2385 = vunpack.c.l.b16 %v1355
      %v2386 = vunpack.c.l.b16 %v1369
      %v2387 = vunpack.c.l.b16 %v1379
      %v2388 = vunpack.c.l.b16 %v1393
      %v2389 = vunpack.c.l.b16 %v1403
      %v2390 = vunpack.c.l.b16 %v1417
      %v2391 = vunpack.c.l.b16 %v1427
      %v2392 = vunpack.c.l.b16 %v1441
      %v2393 = vunpack.c.l.b16 %v1451
      %v2394 = vunpack.c.l.b16 %v1465
      %v2395 = vunpack.c.l.b16 %v1475
      %v2396 = vunpack.c.l.b16 %v1489
      %v2397 = vunpack.c.l.b16 %v1499
      %v2398 = vunpack.c.l.b16 %v1513
      %v2399 = vunpack.c.l.b16 %v1523
      %v2400 = vunpack.c.l.b16 %v1537
      %v2401 = vunpack.c.l.b16 %v1547
      %v2402 = vunpack.c.l.b16 %v1561
      %v2403 = vunpack.c.l.b16 %v1571
      %v2404 = vpack.c.b16 %v2373, %v2372
      %v2405 = vpack.c.b16 %v2375, %v2374
      %v2406 = vpack.c.b16 %v2377, %v2376
      %v2407 = vpack.c.b16 %v2379, %v2378
      %v2408 = vpack.c.b16 %v2381, %v2380
      %v2409 = vpack.c.b16 %v2383, %v2382
      %v2410 = vpack.c.b16 %v2385, %v2384
      %v2411 = vpack.c.b16 %v2387, %v2386
      %v2412 = vpack.c.b16 %v2389, %v2388
      %v2413 = vpack.c.b16 %v2391, %v2390
      %v2414 = vpack.c.b16 %v2393, %v2392
      %v2415 = vpack.c.b16 %v2395, %v2394
      %v2416 = vpack.c.b16 %v2397, %v2396
      %v2417 = vpack.c.b16 %v2399, %v2398
      %v2418 = vpack.c.b16 %v2401, %v2400
      %v2419 = vpack.c.b16 %v2403, %v2402
      %2420 = vrot.lane.b32.xlu0 %v2404, 64
      %v2421 = vpop.permute.xlu0 %2420
      %2422 = vrot.lane.b32.xlu0 %v2405, 64
      %v2423 = vpop.permute.xlu0 %2422
      %2424 = vrot.lane.b32.xlu0 %v2406, 64
      %v2425 = vpop.permute.xlu0 %2424
      %2426 = vrot.lane.b32.xlu0 %v2407, 64
      %v2427 = vpop.permute.xlu0 %2426
      %2428 = vrot.lane.b32.xlu0 %v2408, 64
      %v2429 = vpop.permute.xlu0 %2428
      %2430 = vrot.lane.b32.xlu0 %v2409, 64
      %v2431 = vpop.permute.xlu0 %2430
      %2432 = vrot.lane.b32.xlu0 %v2410, 64
      %v2433 = vpop.permute.xlu0 %2432
      %2434 = vrot.lane.b32.xlu0 %v2411, 64
      %v2435 = vpop.permute.xlu0 %2434
      %2436 = vrot.lane.b32.xlu0 %v2412, 64
      %v2437 = vpop.permute.xlu0 %2436
      %2438 = vrot.lane.b32.xlu0 %v2413, 64
      %v2439 = vpop.permute.xlu0 %2438
      %2440 = vrot.lane.b32.xlu0 %v2414, 64
      %v2441 = vpop.permute.xlu0 %2440
      %2442 = vrot.lane.b32.xlu0 %v2415, 64
      %v2443 = vpop.permute.xlu0 %2442
      %2444 = vrot.lane.b32.xlu0 %v2416, 64
      %v2445 = vpop.permute.xlu0 %2444
      %2446 = vrot.lane.b32.xlu0 %v2417, 64
      %v2447 = vpop.permute.xlu0 %2446
      %2448 = vrot.lane.b32.xlu0 %v2418, 64
      %v2449 = vpop.permute.xlu0 %2448
      %2450 = vrot.lane.b32.xlu0 %v2419, 64
      %v2451 = vpop.permute.xlu0 %2450
      %vm2452 = vcmask 64512
      %v2455 = vsel %vm2452, %v1636, %v1733
      %v2458 = vsel %vm2452, %v1637, %v1735
      %v2461 = vsel %vm2452, %v1638, %v1737
      %v2464 = vsel %vm2452, %v1639, %v1739
      %v2467 = vsel %vm2452, %v1640, %v1741
      %v2470 = vsel %vm2452, %v1641, %v1743
      %v2473 = vsel %vm2452, %v1642, %v1745
      %v2476 = vsel %vm2452, %v1643, %v1747
      %v2479 = vsel %vm2452, %v1644, %v1749
      %v2482 = vsel %vm2452, %v1645, %v1751
      %v2485 = vsel %vm2452, %v1646, %v1753
      %v2488 = vsel %vm2452, %v1647, %v1755
      %v2491 = vsel %vm2452, %v1648, %v1757
      %v2494 = vsel %vm2452, %v1649, %v1759
      %v2497 = vsel %vm2452, %v1650, %v1761
      %v2500 = vsel %vm2452, %v1651, %v1763
      %vm2501 = vcmask 130048
      %v2503 = vsel %vm2501, %v2455, %v1813
      %v2505 = vsel %vm2501, %v2458, %v1815
      %v2507 = vsel %vm2501, %v2461, %v1817
      %v2509 = vsel %vm2501, %v2464, %v1819
      %v2511 = vsel %vm2501, %v2467, %v1821
      %v2513 = vsel %vm2501, %v2470, %v1823
      %v2515 = vsel %vm2501, %v2473, %v1825
      %v2517 = vsel %vm2501, %v2476, %v1827
      %v2519 = vsel %vm2501, %v2479, %v1829
      %v2521 = vsel %vm2501, %v2482, %v1831
      %v2523 = vsel %vm2501, %v2485, %v1833
      %v2525 = vsel %vm2501, %v2488, %v1835
      %v2527 = vsel %vm2501, %v2491, %v1837
      %v2529 = vsel %vm2501, %v2494, %v1839
      %v2531 = vsel %vm2501, %v2497, %v1841
      %v2533 = vsel %vm2501, %v2500, %v1843
      %vm2534 = vcmask 195584
      %v2536 = vsel %vm2534, %v2503, %v1925
      %v2538 = vsel %vm2534, %v2505, %v1927
      %v2540 = vsel %vm2534, %v2507, %v1929
      %v2542 = vsel %vm2534, %v2509, %v1931
      %v2544 = vsel %vm2534, %v2511, %v1933
      %v2546 = vsel %vm2534, %v2513, %v1935
      %v2548 = vsel %vm2534, %v2515, %v1937
      %v2550 = vsel %vm2534, %v2517, %v1939
      %v2552 = vsel %vm2534, %v2519, %v1941
      %v2554 = vsel %vm2534, %v2521, %v1943
      %v2556 = vsel %vm2534, %v2523, %v1945
      %v2558 = vsel %vm2534, %v2525, %v1947
      %v2560 = vsel %vm2534, %v2527, %v1949
      %v2562 = vsel %vm2534, %v2529, %v1951
      %v2564 = vsel %vm2534, %v2531, %v1953
      %v2566 = vsel %vm2534, %v2533, %v1955
      %vm2567 = vcmask 261120
      %v2569 = vsel %vm2567, %v2536, %v2037
      %v2571 = vsel %vm2567, %v2538, %v2039
      %v2573 = vsel %vm2567, %v2540, %v2041
      %v2575 = vsel %vm2567, %v2542, %v2043
      %v2577 = vsel %vm2567, %v2544, %v2045
      %v2579 = vsel %vm2567, %v2546, %v2047
      %v2581 = vsel %vm2567, %v2548, %v2049
      %v2583 = vsel %vm2567, %v2550, %v2051
      %v2585 = vsel %vm2567, %v2552, %v2053
      %v2587 = vsel %vm2567, %v2554, %v2055
      %v2589 = vsel %vm2567, %v2556, %v2057
      %v2591 = vsel %vm2567, %v2558, %v2059
      %v2593 = vsel %vm2567, %v2560, %v2061
      %v2595 = vsel %vm2567, %v2562, %v2063
      %v2597 = vsel %vm2567, %v2564, %v2065
      %v2599 = vsel %vm2567, %v2566, %v2067
      %vm2600 = vcmask 326656
      %v2602 = vsel %vm2600, %v2569, %v2117
      %v2604 = vsel %vm2600, %v2571, %v2119
      %v2606 = vsel %vm2600, %v2573, %v2121
      %v2608 = vsel %vm2600, %v2575, %v2123
      %v2610 = vsel %vm2600, %v2577, %v2125
      %v2612 = vsel %vm2600, %v2579, %v2127
      %v2614 = vsel %vm2600, %v2581, %v2129
      %v2616 = vsel %vm2600, %v2583, %v2131
      %v2618 = vsel %vm2600, %v2585, %v2133
      %v2620 = vsel %vm2600, %v2587, %v2135
      %v2622 = vsel %vm2600, %v2589, %v2137
      %v2624 = vsel %vm2600, %v2591, %v2139
      %v2626 = vsel %vm2600, %v2593, %v2141
      %v2628 = vsel %vm2600, %v2595, %v2143
      %v2630 = vsel %vm2600, %v2597, %v2145
      %v2632 = vsel %vm2600, %v2599, %v2147
      %vm2633 = vcmask 392192
      %v2635 = vsel %vm2633, %v2602, %v2229
      %v2637 = vsel %vm2633, %v2604, %v2231
      %v2639 = vsel %vm2633, %v2606, %v2233
      %v2641 = vsel %vm2633, %v2608, %v2235
      %v2643 = vsel %vm2633, %v2610, %v2237
      %v2645 = vsel %vm2633, %v2612, %v2239
      %v2647 = vsel %vm2633, %v2614, %v2241
      %v2649 = vsel %vm2633, %v2616, %v2243
      %v2651 = vsel %vm2633, %v2618, %v2245
      %v2653 = vsel %vm2633, %v2620, %v2247
      %v2655 = vsel %vm2633, %v2622, %v2249
      %v2657 = vsel %vm2633, %v2624, %v2251
      %v2659 = vsel %vm2633, %v2626, %v2253
      %v2661 = vsel %vm2633, %v2628, %v2255
      %v2663 = vsel %vm2633, %v2630, %v2257
      %v2665 = vsel %vm2633, %v2632, %v2259
      %vm2666 = vcmask 457728
      %v2668 = vsel %vm2666, %v2635, %v2341
      %v2670 = vsel %vm2666, %v2637, %v2343
      %v2672 = vsel %vm2666, %v2639, %v2345
      %v2674 = vsel %vm2666, %v2641, %v2347
      %v2676 = vsel %vm2666, %v2643, %v2349
      %v2678 = vsel %vm2666, %v2645, %v2351
      %v2680 = vsel %vm2666, %v2647, %v2353
      %v2682 = vsel %vm2666, %v2649, %v2355
      %v2684 = vsel %vm2666, %v2651, %v2357
      %v2686 = vsel %vm2666, %v2653, %v2359
      %v2688 = vsel %vm2666, %v2655, %v2361
      %v2690 = vsel %vm2666, %v2657, %v2363
      %v2692 = vsel %vm2666, %v2659, %v2365
      %v2694 = vsel %vm2666, %v2661, %v2367
      %v2696 = vsel %vm2666, %v2663, %v2369
      %v2698 = vsel %vm2666, %v2665, %v2371
      %vm2699 = vcmask 523264
      %v2701 = vsel %vm2699, %v2668, %v2421
      %v2703 = vsel %vm2699, %v2670, %v2423
      %v2705 = vsel %vm2699, %v2672, %v2425
      %v2707 = vsel %vm2699, %v2674, %v2427
      %v2709 = vsel %vm2699, %v2676, %v2429
      %v2711 = vsel %vm2699, %v2678, %v2431
      %v2713 = vsel %vm2699, %v2680, %v2433
      %v2715 = vsel %vm2699, %v2682, %v2435
      %v2717 = vsel %vm2699, %v2684, %v2437
      %v2719 = vsel %vm2699, %v2686, %v2439
      %v2721 = vsel %vm2699, %v2688, %v2441
      %v2723 = vsel %vm2699, %v2690, %v2443
      %v2725 = vsel %vm2699, %v2692, %v2445
      %v2727 = vsel %vm2699, %v2694, %v2447
      %v2729 = vsel %vm2699, %v2696, %v2449
      %v2731 = vsel %vm2699, %v2698, %v2451
      %v2732 = vld [vmem:[%s1] sm:$0xf]
      %v2733 = vld [vmem:[%s1 + $0x4] sm:$0xf]
      %v2734 = vld [vmem:[%s1 + $0x8] sm:$0xf]
      %v2735 = vld [vmem:[%s1 + $0xc] sm:$0xf]
      %v2736 = vld [vmem:[%s1 + $0x10] sm:$0xf]
      %v2737 = vld [vmem:[%s1 + $0x14] sm:$0xf]
      %v2738 = vld [vmem:[%s1 + $0x18] sm:$0xf]
      %v2739 = vld [vmem:[%s1 + $0x1c] sm:$0xf]
      %v2740 = vld [vmem:[%s1 + $0x20] sm:$0xf]
      %v2741 = vld [vmem:[%s2] sm:$0x1]
      %v2743 = vlaneseq
      %v2744 = vshrl.u32 %v2743, 7
      %v2745 = vsub.s32 0, %v2744
      %v2746 = vrot.slane %v2741, %v2745
      %v2757 = vunpack.c.l.b16 %v2732
      %v2758 = vunpack.c.l.b16 %v2733
      %v2759 = vunpack.c.l.b16 %v2734
      %v2760 = vunpack.c.l.b16 %v2735
      %v2761 = vunpack.c.l.b16 %v2736
      %v2762 = vunpack.c.l.b16 %v2737
      %v2763 = vunpack.c.l.b16 %v2738
      %v2764 = vunpack.c.l.b16 %v2739
      %v2765 = vunpack.c.l.b16 %v2740
      %v2766 = vpack.c.b16 %v2758, %v2757
      %v2767 = vpack.c.b16 %v2760, %v2759
      %v2768 = vpack.c.b16 %v2762, %v2761
      %v2769 = vpack.c.b16 %v2764, %v2763
      %v2770 = vpack.c.b16 %v2765, %v2765
      %vm2775 = vcmask 588800
      %v2776 = vsel %vm2775, %v2701, 0
      %v2778 = vsel %vm2775, %v2703, 0
      %v2780 = vsel %vm2775, %v2705, 0
      %v2782 = vsel %vm2775, %v2707, 0
      %v2784 = vsel %vm2775, %v2709, 0
      %v2786 = vsel %vm2775, %v2711, 0
      %v2788 = vsel %vm2775, %v2713, 0
      %v2790 = vsel %vm2775, %v2715, 0
      %v2792 = vsel %vm2775, %v2717, 0
      %v2794 = vsel %vm2775, %v2719, 0
      %v2796 = vsel %vm2775, %v2721, 0
      %v2798 = vsel %vm2775, %v2723, 0
      %v2800 = vsel %vm2775, %v2725, 0
      %v2802 = vsel %vm2775, %v2727, 0
      %v2804 = vsel %vm2775, %v2729, 0
      %v2806 = vsel %vm2775, %v2731, 0
      %vm2808 = vcmask 1043456
      %v2810 = vsel %vm2808, %v2770, 0
      %2812 = vmatprep.subr.bf16.mxu0 0
      %2813 = vmatpush1.bf16.msra.mxu0 0
      %2814 = vmatprep.subr.bf16.mxu0 0
      %2815 = vmatpush1.bf16.msra.mxu0 0
      %2816 = vmatprep.subr.bf16.mxu0 0
      %2817 = vmatpush1.bf16.msra.mxu0 0
      %2818 = vmatprep.subr.bf16.mxu0 0
      %2819 = vmatpush1.bf16.msra.mxu0 %v2810
      %2820 = vmatprep.subr.bf16.mxu0 0
      %2821 = vmatpush1.bf16.msra.mxu0 %v2769
      %2822 = vmatprep.subr.bf16.mxu0 0
      %2823 = vmatpush1.bf16.msra.mxu0 %v2768
      %2824 = vmatprep.subr.bf16.mxu0 0
      %2825 = vmatpush1.bf16.msra.mxu0 %v2767
      %2826 = vmatprep.subr.bf16.mxu0 0
      %2827 = vmatpush1.bf16.msra.mxu0 %v2766
      %2828 = vmatprep.subr.bf16.mxu0 0
      %2829 = vmatpush2.bf16.msra.mxu0 0
      %2830 = vmatprep.subr.bf16.mxu0 0
      %2831 = vmatpush2.bf16.msra.mxu0 0
      %2832 = vmatprep.subr.bf16.mxu0 0
      %2833 = vmatpush2.bf16.msra.mxu0 0
      %2834 = vmatprep.subr.bf16.mxu0 0
      %2835 = vmatpush2.bf16.msra.mxu0 0
      %2836 = vmatprep.subr.bf16.mxu0 0
      %2837 = vmatpush2.bf16.msra.mxu0 0
      %2838 = vmatprep.subr.bf16.mxu0 0
      %2839 = vmatpush2.bf16.msra.mxu0 0
      %2840 = vmatprep.subr.bf16.mxu0 0
      %2841 = vmatpush2.bf16.msra.mxu0 0
      %2842 = vmatprep.subr.bf16.mxu0 0
      %2843 = vmatpush2.bf16.msra.mxu0 0
      %2844 = vmatprep.mubr.bf16.mxu0 0
      %2845 = vmatmul.mubr.bf16.gmra.mxu0 %v2776
      %v2846 = vpop.f32.mrf.mxu0
      %v2847 = vadd.f32 %v2746, %v2846
      %v2848 = vpop.f32.mrf.mxu0
      %v2849 = vpop.f32.mrf.mxu0
      %v2850 = vadd.f32 %v2746, %v2849
      %v2851 = vpop.f32.mrf.mxu0
      %2852 = vmatprep.mubr.bf16.mxu0 0
      %2853 = vmatmul.mubr.bf16.gmra.mxu0 %v2778
      %v2854 = vpop.f32.mrf.mxu0
      %v2855 = vadd.f32 %v2746, %v2854
      %v2856 = vpop.f32.mrf.mxu0
      %v2857 = vpop.f32.mrf.mxu0
      %v2858 = vadd.f32 %v2746, %v2857
      %v2859 = vpop.f32.mrf.mxu0
      %2860 = vmatprep.mubr.bf16.mxu0 0
      %2861 = vmatmul.mubr.bf16.gmra.mxu0 %v2780
      %v2862 = vpop.f32.mrf.mxu0
      %v2863 = vadd.f32 %v2746, %v2862
      %v2864 = vpop.f32.mrf.mxu0
      %v2865 = vpop.f32.mrf.mxu0
      %v2866 = vadd.f32 %v2746, %v2865
      %v2867 = vpop.f32.mrf.mxu0
      %2868 = vmatprep.mubr.bf16.mxu0 0
      %2869 = vmatmul.mubr.bf16.gmra.mxu0 %v2782
      %v2870 = vpop.f32.mrf.mxu0
      %v2871 = vadd.f32 %v2746, %v2870
      %v2872 = vpop.f32.mrf.mxu0
      %v2873 = vpop.f32.mrf.mxu0
      %v2874 = vadd.f32 %v2746, %v2873
      %v2875 = vpop.f32.mrf.mxu0
      %2876 = vmatprep.mubr.bf16.mxu0 0
      %2877 = vmatmul.mubr.bf16.gmra.mxu0 %v2784
      %v2878 = vpop.f32.mrf.mxu0
      %v2879 = vadd.f32 %v2746, %v2878
      %v2880 = vpop.f32.mrf.mxu0
      %v2881 = vpop.f32.mrf.mxu0
      %v2882 = vadd.f32 %v2746, %v2881
      %v2883 = vpop.f32.mrf.mxu0
      %2884 = vmatprep.mubr.bf16.mxu0 0
      %2885 = vmatmul.mubr.bf16.gmra.mxu0 %v2786
      %v2886 = vpop.f32.mrf.mxu0
      %v2887 = vadd.f32 %v2746, %v2886
      %v2888 = vpop.f32.mrf.mxu0
      %v2889 = vpop.f32.mrf.mxu0
      %v2890 = vadd.f32 %v2746, %v2889
      %v2891 = vpop.f32.mrf.mxu0
      %2892 = vmatprep.mubr.bf16.mxu0 0
      %2893 = vmatmul.mubr.bf16.gmra.mxu0 %v2788
      %v2894 = vpop.f32.mrf.mxu0
      %v2895 = vadd.f32 %v2746, %v2894
      %v2896 = vpop.f32.mrf.mxu0
      %v2897 = vpop.f32.mrf.mxu0
      %v2898 = vadd.f32 %v2746, %v2897
      %v2899 = vpop.f32.mrf.mxu0
      %2900 = vmatprep.mubr.bf16.mxu0 0
      %2901 = vmatmul.mubr.bf16.gmra.mxu0 %v2790
      %v2902 = vpop.f32.mrf.mxu0
      %v2903 = vadd.f32 %v2746, %v2902
      %v2904 = vpop.f32.mrf.mxu0
      %v2905 = vpop.f32.mrf.mxu0
      %v2906 = vadd.f32 %v2746, %v2905
      %v2907 = vpop.f32.mrf.mxu0
      %2908 = vmatprep.mubr.bf16.mxu0 0
      %2909 = vmatmul.mubr.bf16.gmra.mxu0 %v2792
      %v2910 = vpop.f32.mrf.mxu0
      %v2911 = vadd.f32 %v2746, %v2910
      %v2912 = vpop.f32.mrf.mxu0
      %v2913 = vpop.f32.mrf.mxu0
      %v2914 = vadd.f32 %v2746, %v2913
      %v2915 = vpop.f32.mrf.mxu0
      %2916 = vmatprep.mubr.bf16.mxu0 0
      %2917 = vmatmul.mubr.bf16.gmra.mxu0 %v2794
      %v2918 = vpop.f32.mrf.mxu0
      %v2919 = vadd.f32 %v2746, %v2918
      %v2920 = vpop.f32.mrf.mxu0
      %v2921 = vpop.f32.mrf.mxu0
      %v2922 = vadd.f32 %v2746, %v2921
      %v2923 = vpop.f32.mrf.mxu0
      %2924 = vmatprep.mubr.bf16.mxu0 0
      %2925 = vmatmul.mubr.bf16.gmra.mxu0 %v2796
      %v2926 = vpop.f32.mrf.mxu0
      %v2927 = vadd.f32 %v2746, %v2926
      %v2928 = vpop.f32.mrf.mxu0
      %v2929 = vpop.f32.mrf.mxu0
      %v2930 = vadd.f32 %v2746, %v2929
      %v2931 = vpop.f32.mrf.mxu0
      %2932 = vmatprep.mubr.bf16.mxu0 0
      %2933 = vmatmul.mubr.bf16.gmra.mxu0 %v2798
      %v2934 = vpop.f32.mrf.mxu0
      %v2935 = vadd.f32 %v2746, %v2934
      %v2936 = vpop.f32.mrf.mxu0
      %v2937 = vpop.f32.mrf.mxu0
      %v2938 = vadd.f32 %v2746, %v2937
      %v2939 = vpop.f32.mrf.mxu0
      %2940 = vmatprep.mubr.bf16.mxu0 0
      %2941 = vmatmul.mubr.bf16.gmra.mxu0 %v2800
      %v2942 = vpop.f32.mrf.mxu0
      %v2943 = vadd.f32 %v2746, %v2942
      %v2944 = vpop.f32.mrf.mxu0
      %v2945 = vpop.f32.mrf.mxu0
      %v2946 = vadd.f32 %v2746, %v2945
      %v2947 = vpop.f32.mrf.mxu0
      %2948 = vmatprep.mubr.bf16.mxu0 0
      %2949 = vmatmul.mubr.bf16.gmra.mxu0 %v2802
      %v2950 = vpop.f32.mrf.mxu0
      %v2951 = vadd.f32 %v2746, %v2950
      %v2952 = vpop.f32.mrf.mxu0
      %v2953 = vpop.f32.mrf.mxu0
      %v2954 = vadd.f32 %v2746, %v2953
      %v2955 = vpop.f32.mrf.mxu0
      %2956 = vmatprep.mubr.bf16.mxu0 0
      %2957 = vmatmul.mubr.bf16.gmra.mxu0 %v2804
      %v2958 = vpop.f32.mrf.mxu0
      %v2959 = vadd.f32 %v2746, %v2958
      %v2960 = vpop.f32.mrf.mxu0
      %v2961 = vpop.f32.mrf.mxu0
      %v2962 = vadd.f32 %v2746, %v2961
      %v2963 = vpop.f32.mrf.mxu0
      %2964 = vmatprep.mubr.bf16.mxu0 0
      %2965 = vmatmul.mubr.bf16.gmra.mxu0 %v2806
      %v2966 = vpop.f32.mrf.mxu0
      %v2967 = vadd.f32 %v2746, %v2966
      %v2968 = vpop.f32.mrf.mxu0
      %v2969 = vpop.f32.mrf.mxu0
      %v2970 = vadd.f32 %v2746, %v2969
      %v2971 = vpop.f32.mrf.mxu0
      %2972 = vdwg.mxu0
      %v2973 = vxor.u32 %v2847, 2147483648
      %v2974 = vxor.u32 %v2850, 2147483648
      %v2975 = vxor.u32 %v2855, 2147483648
      %v2976 = vxor.u32 %v2858, 2147483648
      %v2977 = vxor.u32 %v2863, 2147483648
      %v2978 = vxor.u32 %v2866, 2147483648
      %v2979 = vxor.u32 %v2871, 2147483648
      %v2980 = vxor.u32 %v2874, 2147483648
      %v2981 = vxor.u32 %v2879, 2147483648
      %v2982 = vxor.u32 %v2882, 2147483648
      %v2983 = vxor.u32 %v2887, 2147483648
      %v2984 = vxor.u32 %v2890, 2147483648
      %v2985 = vxor.u32 %v2895, 2147483648
      %v2986 = vxor.u32 %v2898, 2147483648
      %v2987 = vxor.u32 %v2903, 2147483648
      %v2988 = vxor.u32 %v2906, 2147483648
      %v2989 = vxor.u32 %v2911, 2147483648
      %v2990 = vxor.u32 %v2914, 2147483648
      %v2991 = vxor.u32 %v2919, 2147483648
      %v2992 = vxor.u32 %v2922, 2147483648
      %v2993 = vxor.u32 %v2927, 2147483648
      %v2994 = vxor.u32 %v2930, 2147483648
      %v2995 = vxor.u32 %v2935, 2147483648
      %v2996 = vxor.u32 %v2938, 2147483648
      %v2997 = vxor.u32 %v2943, 2147483648
      %v2998 = vxor.u32 %v2946, 2147483648
      %v2999 = vxor.u32 %v2951, 2147483648
      %v3000 = vxor.u32 %v2954, 2147483648
      %v3001 = vxor.u32 %v2959, 2147483648
      %v3002 = vxor.u32 %v2962, 2147483648
      %v3003 = vxor.u32 %v2967, 2147483648
      %v3004 = vxor.u32 %v2970, 2147483648
      %v3005 = vmul.f32 %v2973, 1.442695
      %v3006 = vpow.pop %v3005
      %v3007 = vmul.f32 %v2974, 1.442695
      %v3008 = vpow.pop %v3007
      %v3009 = vmul.f32 %v2975, 1.442695
      %v3010 = vpow.pop %v3009
      %v3011 = vmul.f32 %v2976, 1.442695
      %v3012 = vpow.pop %v3011
      %v3013 = vmul.f32 %v2977, 1.442695
      %v3014 = vpow.pop %v3013
      %v3015 = vmul.f32 %v2978, 1.442695
      %v3016 = vpow.pop %v3015
      %v3017 = vmul.f32 %v2979, 1.442695
      %v3018 = vpow.pop %v3017
      %v3019 = vmul.f32 %v2980, 1.442695
      %v3020 = vpow.pop %v3019
      %v3021 = vmul.f32 %v2981, 1.442695
      %v3022 = vpow.pop %v3021
      %v3023 = vmul.f32 %v2982, 1.442695
      %v3024 = vpow.pop %v3023
      %v3025 = vmul.f32 %v2983, 1.442695
      %v3026 = vpow.pop %v3025
      %v3027 = vmul.f32 %v2984, 1.442695
      %v3028 = vpow.pop %v3027
      %v3029 = vmul.f32 %v2985, 1.442695
      %v3030 = vpow.pop %v3029
      %v3031 = vmul.f32 %v2986, 1.442695
      %v3032 = vpow.pop %v3031
      %v3033 = vmul.f32 %v2987, 1.442695
      %v3034 = vpow.pop %v3033
      %v3035 = vmul.f32 %v2988, 1.442695
      %v3036 = vpow.pop %v3035
      %v3037 = vmul.f32 %v2989, 1.442695
      %v3038 = vpow.pop %v3037
      %v3039 = vmul.f32 %v2990, 1.442695
      %v3040 = vpow.pop %v3039
      %v3041 = vmul.f32 %v2991, 1.442695
      %v3042 = vpow.pop %v3041
      %v3043 = vmul.f32 %v2992, 1.442695
      %v3044 = vpow.pop %v3043
      %v3045 = vmul.f32 %v2993, 1.442695
      %v3046 = vpow.pop %v3045
      %v3047 = vmul.f32 %v2994, 1.442695
      %v3048 = vpow.pop %v3047
      %v3049 = vmul.f32 %v2995, 1.442695
      %v3050 = vpow.pop %v3049
      %v3051 = vmul.f32 %v2996, 1.442695
      %v3052 = vpow.pop %v3051
      %v3053 = vmul.f32 %v2997, 1.442695
      %v3054 = vpow.pop %v3053
      %v3055 = vmul.f32 %v2998, 1.442695
      %v3056 = vpow.pop %v3055
      %v3057 = vmul.f32 %v2999, 1.442695
      %v3058 = vpow.pop %v3057
      %v3059 = vmul.f32 %v3000, 1.442695
      %v3060 = vpow.pop %v3059
      %v3061 = vmul.f32 %v3001, 1.442695
      %v3062 = vpow.pop %v3061
      %v3063 = vmul.f32 %v3002, 1.442695
      %v3064 = vpow.pop %v3063
      %v3065 = vmul.f32 %v3003, 1.442695
      %v3066 = vpow.pop %v3065
      %v3067 = vmul.f32 %v3004, 1.442695
      %v3068 = vpow.pop %v3067
      %v3069 = vadd.f32 %v3006, 1.0
      %v3070 = vadd.f32 %v3008, 1.0
      %v3071 = vadd.f32 %v3010, 1.0
      %v3072 = vadd.f32 %v3012, 1.0
      %v3073 = vadd.f32 %v3014, 1.0
      %v3074 = vadd.f32 %v3016, 1.0
      %v3075 = vadd.f32 %v3018, 1.0
      %v3076 = vadd.f32 %v3020, 1.0
      %v3077 = vadd.f32 %v3022, 1.0
      %v3078 = vadd.f32 %v3024, 1.0
      %v3079 = vadd.f32 %v3026, 1.0
      %v3080 = vadd.f32 %v3028, 1.0
      %v3081 = vadd.f32 %v3030, 1.0
      %v3082 = vadd.f32 %v3032, 1.0
      %v3083 = vadd.f32 %v3034, 1.0
      %v3084 = vadd.f32 %v3036, 1.0
      %v3085 = vadd.f32 %v3038, 1.0
      %v3086 = vadd.f32 %v3040, 1.0
      %v3087 = vadd.f32 %v3042, 1.0
      %v3088 = vadd.f32 %v3044, 1.0
      %v3089 = vadd.f32 %v3046, 1.0
      %v3090 = vadd.f32 %v3048, 1.0
      %v3091 = vadd.f32 %v3050, 1.0
      %v3092 = vadd.f32 %v3052, 1.0
      %v3093 = vadd.f32 %v3054, 1.0
      %v3094 = vadd.f32 %v3056, 1.0
      %v3095 = vadd.f32 %v3058, 1.0
      %v3096 = vadd.f32 %v3060, 1.0
      %v3097 = vadd.f32 %v3062, 1.0
      %v3098 = vadd.f32 %v3064, 1.0
      %v3099 = vadd.f32 %v3066, 1.0
      %v3100 = vadd.f32 %v3068, 1.0
      %v3101 = vrcp.pop %v3069
      %v3102 = vmul.f32 1.0, %v3101
      %v3103 = vrcp.pop %v3070
      %v3104 = vmul.f32 1.0, %v3103
      %v3105 = vrcp.pop %v3071
      %v3106 = vmul.f32 1.0, %v3105
      %v3107 = vrcp.pop %v3072
      %v3108 = vmul.f32 1.0, %v3107
      %v3109 = vrcp.pop %v3073
      %v3110 = vmul.f32 1.0, %v3109
      %v3111 = vrcp.pop %v3074
      %v3112 = vmul.f32 1.0, %v3111
      %v3113 = vrcp.pop %v3075
      %v3114 = vmul.f32 1.0, %v3113
      %v3115 = vrcp.pop %v3076
      %v3116 = vmul.f32 1.0, %v3115
      %v3117 = vrcp.pop %v3077
      %v3118 = vmul.f32 1.0, %v3117
      %v3119 = vrcp.pop %v3078
      %v3120 = vmul.f32 1.0, %v3119
      %v3121 = vrcp.pop %v3079
      %v3122 = vmul.f32 1.0, %v3121
      %v3123 = vrcp.pop %v3080
      %v3124 = vmul.f32 1.0, %v3123
      %v3125 = vrcp.pop %v3081
      %v3126 = vmul.f32 1.0, %v3125
      %v3127 = vrcp.pop %v3082
      %v3128 = vmul.f32 1.0, %v3127
      %v3129 = vrcp.pop %v3083
      %v3130 = vmul.f32 1.0, %v3129
      %v3131 = vrcp.pop %v3084
      %v3132 = vmul.f32 1.0, %v3131
      %v3133 = vrcp.pop %v3085
      %v3134 = vmul.f32 1.0, %v3133
      %v3135 = vrcp.pop %v3086
      %v3136 = vmul.f32 1.0, %v3135
      %v3137 = vrcp.pop %v3087
      %v3138 = vmul.f32 1.0, %v3137
      %v3139 = vrcp.pop %v3088
      %v3140 = vmul.f32 1.0, %v3139
      %v3141 = vrcp.pop %v3089
      %v3142 = vmul.f32 1.0, %v3141
      %v3143 = vrcp.pop %v3090
      %v3144 = vmul.f32 1.0, %v3143
      %v3145 = vrcp.pop %v3091
      %v3146 = vmul.f32 1.0, %v3145
      %v3147 = vrcp.pop %v3092
      %v3148 = vmul.f32 1.0, %v3147
      %v3149 = vrcp.pop %v3093
      %v3150 = vmul.f32 1.0, %v3149
      %v3151 = vrcp.pop %v3094
      %v3152 = vmul.f32 1.0, %v3151
      %v3153 = vrcp.pop %v3095
      %v3154 = vmul.f32 1.0, %v3153
      %v3155 = vrcp.pop %v3096
      %v3156 = vmul.f32 1.0, %v3155
      %v3157 = vrcp.pop %v3097
      %v3158 = vmul.f32 1.0, %v3157
      %v3159 = vrcp.pop %v3098
      %v3160 = vmul.f32 1.0, %v3159
      %v3161 = vrcp.pop %v3099
      %v3162 = vmul.f32 1.0, %v3161
      %v3163 = vrcp.pop %v3100
      %v3164 = vmul.f32 1.0, %v3163
      %v3165 = vmul.f32 %v2847, %v3102
      %v3166 = vmul.f32 %v2850, %v3104
      %v3167 = vmul.f32 %v2855, %v3106
      %v3168 = vmul.f32 %v2858, %v3108
      %v3169 = vmul.f32 %v2863, %v3110
      %v3170 = vmul.f32 %v2866, %v3112
      %v3171 = vmul.f32 %v2871, %v3114
      %v3172 = vmul.f32 %v2874, %v3116
      %v3173 = vmul.f32 %v2879, %v3118
      %v3174 = vmul.f32 %v2882, %v3120
      %v3175 = vmul.f32 %v2887, %v3122
      %v3176 = vmul.f32 %v2890, %v3124
      %v3177 = vmul.f32 %v2895, %v3126
      %v3178 = vmul.f32 %v2898, %v3128
      %v3179 = vmul.f32 %v2903, %v3130
      %v3180 = vmul.f32 %v2906, %v3132
      %v3181 = vmul.f32 %v2911, %v3134
      %v3182 = vmul.f32 %v2914, %v3136
      %v3183 = vmul.f32 %v2919, %v3138
      %v3184 = vmul.f32 %v2922, %v3140
      %v3185 = vmul.f32 %v2927, %v3142
      %v3186 = vmul.f32 %v2930, %v3144
      %v3187 = vmul.f32 %v2935, %v3146
      %v3188 = vmul.f32 %v2938, %v3148
      %v3189 = vmul.f32 %v2943, %v3150
      %v3190 = vmul.f32 %v2946, %v3152
      %v3191 = vmul.f32 %v2951, %v3154
      %v3192 = vmul.f32 %v2954, %v3156
      %v3193 = vmul.f32 %v2959, %v3158
      %v3194 = vmul.f32 %v2962, %v3160
      %v3195 = vmul.f32 %v2967, %v3162
      %v3196 = vmul.f32 %v2970, %v3164
      %v3197 = vpack.c.bf16 %v3166, %v3165
      %v3198 = vpack.c.bf16 %v3168, %v3167
      %v3199 = vpack.c.bf16 %v3170, %v3169
      %v3200 = vpack.c.bf16 %v3172, %v3171
      %v3201 = vpack.c.bf16 %v3174, %v3173
      %v3202 = vpack.c.bf16 %v3176, %v3175
      %v3203 = vpack.c.bf16 %v3178, %v3177
      %v3204 = vpack.c.bf16 %v3180, %v3179
      %v3205 = vpack.c.bf16 %v3182, %v3181
      %v3206 = vpack.c.bf16 %v3184, %v3183
      %v3207 = vpack.c.bf16 %v3186, %v3185
      %v3208 = vpack.c.bf16 %v3188, %v3187
      %v3209 = vpack.c.bf16 %v3190, %v3189
      %v3210 = vpack.c.bf16 %v3192, %v3191
      %v3211 = vpack.c.bf16 %v3194, %v3193
      %v3212 = vpack.c.bf16 %v3196, %v3195
      %v3229 = vunpack.c.l.b16 %v3197
      %v3230 = vunpack.c.h.b16 %v3197
      %v3231 = vunpack.c.l.b16 %v3198
      %v3232 = vunpack.c.h.b16 %v3198
      %v3233 = vunpack.c.l.b16 %v3199
      %v3234 = vunpack.c.h.b16 %v3199
      %v3235 = vunpack.c.l.b16 %v3200
      %v3236 = vunpack.c.h.b16 %v3200
      %v3237 = vunpack.c.l.b16 %v3201
      %v3238 = vunpack.c.h.b16 %v3201
      %v3239 = vunpack.c.l.b16 %v3202
      %v3240 = vunpack.c.h.b16 %v3202
      %v3241 = vunpack.c.l.b16 %v3203
      %v3242 = vunpack.c.h.b16 %v3203
      %v3243 = vunpack.c.l.b16 %v3204
      %v3244 = vunpack.c.h.b16 %v3204
      %v3245 = vunpack.c.l.b16 %v3205
      %v3246 = vunpack.c.h.b16 %v3205
      %v3247 = vunpack.c.l.b16 %v3206
      %v3248 = vunpack.c.h.b16 %v3206
      %v3249 = vunpack.c.l.b16 %v3207
      %v3250 = vunpack.c.h.b16 %v3207
      %v3251 = vunpack.c.l.b16 %v3208
      %v3252 = vunpack.c.h.b16 %v3208
      %v3253 = vunpack.c.l.b16 %v3209
      %v3254 = vunpack.c.h.b16 %v3209
      %v3255 = vunpack.c.l.b16 %v3210
      %v3256 = vunpack.c.h.b16 %v3210
      %v3257 = vunpack.c.l.b16 %v3211
      %v3258 = vunpack.c.h.b16 %v3211
      %v3259 = vunpack.c.l.b16 %v3212
      %v3260 = vunpack.c.h.b16 %v3212
      %v3261 = vpack.c.b16 %v3229, %v3229
      %v3262 = vpack.c.b16 %v3230, %v3230
      %v3263 = vpack.c.b16 %v3231, %v3231
      %v3264 = vpack.c.b16 %v3232, %v3232
      %v3265 = vpack.c.b16 %v3233, %v3233
      %v3266 = vpack.c.b16 %v3234, %v3234
      %v3267 = vpack.c.b16 %v3235, %v3235
      %v3268 = vpack.c.b16 %v3236, %v3236
      %v3269 = vpack.c.b16 %v3237, %v3237
      %v3270 = vpack.c.b16 %v3238, %v3238
      %v3271 = vpack.c.b16 %v3239, %v3239
      %v3272 = vpack.c.b16 %v3240, %v3240
      %v3273 = vpack.c.b16 %v3241, %v3241
      %v3274 = vpack.c.b16 %v3242, %v3242
      %v3275 = vpack.c.b16 %v3243, %v3243
      %v3276 = vpack.c.b16 %v3244, %v3244
      %v3277 = vpack.c.b16 %v3245, %v3245
      %v3278 = vpack.c.b16 %v3246, %v3246
      %v3279 = vpack.c.b16 %v3247, %v3247
      %v3280 = vpack.c.b16 %v3248, %v3248
      %v3281 = vpack.c.b16 %v3249, %v3249
      %v3282 = vpack.c.b16 %v3250, %v3250
      %v3283 = vpack.c.b16 %v3251, %v3251
      %v3284 = vpack.c.b16 %v3252, %v3252
      %v3285 = vpack.c.b16 %v3253, %v3253
      %v3286 = vpack.c.b16 %v3254, %v3254
      %v3287 = vpack.c.b16 %v3255, %v3255
      %v3288 = vpack.c.b16 %v3256, %v3256
      %v3289 = vpack.c.b16 %v3257, %v3257
      %v3290 = vpack.c.b16 %v3258, %v3258
      %v3291 = vpack.c.b16 %v3259, %v3259
      %v3292 = vpack.c.b16 %v3260, %v3260
      %vm3325 = vcmask 125952
      %3326 = vst.msk [vmem:[%s170] sm:$0xf] %vm3325, %v3261
      %3327 = vst.msk [vmem:[%s170 + $0x4] sm:$0xf] %vm3325, %v3262
      %3328 = vst.msk [vmem:[%s170 + $0x8] sm:$0xf] %vm3325, %v3263
      %3329 = vst.msk [vmem:[%s170 + $0xc] sm:$0xf] %vm3325, %v3264
      %3330 = vst.msk [vmem:[%s170 + $0x10] sm:$0xf] %vm3325, %v3265
      %3331 = vst.msk [vmem:[%s170 + $0x14] sm:$0xf] %vm3325, %v3266
      %3332 = vst.msk [vmem:[%s170 + $0x18] sm:$0xf] %vm3325, %v3267
      %3333 = vst.msk [vmem:[%s170 + $0x1c] sm:$0xf] %vm3325, %v3268
      %3334 = vst.msk [vmem:[%s170 + $0x20] sm:$0xf] %vm3325, %v3269
      %3335 = vst.msk [vmem:[%s170 + $0x24] sm:$0xf] %vm3325, %v3270
      %3336 = vst.msk [vmem:[%s170 + $0x28] sm:$0xf] %vm3325, %v3271
      %3337 = vst.msk [vmem:[%s170 + $0x2c] sm:$0xf] %vm3325, %v3272
      %3338 = vst.msk [vmem:[%s170 + $0x30] sm:$0xf] %vm3325, %v3273
      %3339 = vst.msk [vmem:[%s170 + $0x34] sm:$0xf] %vm3325, %v3274
      %3340 = vst.msk [vmem:[%s170 + $0x38] sm:$0xf] %vm3325, %v3275
      %3341 = vst.msk [vmem:[%s170 + $0x3c] sm:$0xf] %vm3325, %v3276
      %3342 = vst.msk [vmem:[%s170 + $0x40] sm:$0xf] %vm3325, %v3277
      %3343 = vst.msk [vmem:[%s170 + $0x44] sm:$0xf] %vm3325, %v3278
      %3344 = vst.msk [vmem:[%s170 + $0x48] sm:$0xf] %vm3325, %v3279
      %3345 = vst.msk [vmem:[%s170 + $0x4c] sm:$0xf] %vm3325, %v3280
      %3346 = vst.msk [vmem:[%s170 + $0x50] sm:$0xf] %vm3325, %v3281
      %3347 = vst.msk [vmem:[%s170 + $0x54] sm:$0xf] %vm3325, %v3282
      %3348 = vst.msk [vmem:[%s170 + $0x58] sm:$0xf] %vm3325, %v3283
      %3349 = vst.msk [vmem:[%s170 + $0x5c] sm:$0xf] %vm3325, %v3284
      %3350 = vst.msk [vmem:[%s170 + $0x60] sm:$0xf] %vm3325, %v3285
      %3351 = vst.msk [vmem:[%s170 + $0x64] sm:$0xf] %vm3325, %v3286
      %3352 = vst.msk [vmem:[%s170 + $0x68] sm:$0xf] %vm3325, %v3287
      %3353 = vst.msk [vmem:[%s170 + $0x6c] sm:$0xf] %vm3325, %v3288
      %3354 = vst.msk [vmem:[%s170 + $0x70] sm:$0xf] %vm3325, %v3289
      %3355 = vst.msk [vmem:[%s170 + $0x74] sm:$0xf] %vm3325, %v3290
      %3356 = vst.msk [vmem:[%s170 + $0x78] sm:$0xf] %vm3325, %v3291
      %3357 = vst.msk [vmem:[%s170 + $0x7c] sm:$0xf] %vm3325, %v3292
      %p3358 = scmp.lt.s32.totalorder %s14, 1
      %s3359 = scalar_select %p3358, %s14, 1
      %s3360 = smul.addr %s3359, 32
      %s3361 = smul.addr %s3360, 4
      %s3362 = scalar_lea.vmem %s3, %s3361
      // Predicated region
      $region33: #{yolov5_forward.3} parent=31 // pred_check
        %p3363 = pneg %p100
      $region34: #{yolov5_forward.3} parent=31 // pred_check_branch
        %3365 = sbr.rel (%p3363) target = $region36
      $region35: #{yolov5_forward.3} parent=31 // pred_region
        _
      $region36: #{yolov5_forward.3} parent=31 // pred_fallthru
        _
    $region32: #{yolov5_forward.3} parent=5 // pred_fallthru
      _
    %p3366 = scmp.le.s32.totalorder 2, %s9
    // Predicated region
    $region37: #{yolov5_forward.3} parent=5 // pred_check
      %p3367 = pneg %p3366
    $region38: #{yolov5_forward.3} parent=5 // pred_check_branch
      %3369 = sbr.rel (%p3367) target = $region40
    $region39: #{yolov5_forward.3} parent=5 // pred_region
      %s3370 = ssub.s32 %s9, 2
      // Predicated region
      $region41: #{yolov5_forward.3} parent=39 // pred_check
        %p3371 = pneg %p106
      $region42: #{yolov5_forward.3} parent=39 // pred_check_branch
        %3373 = sbr.rel (%p3371) target = $region44
      $region43: #{yolov5_forward.3} parent=39 // pred_region
        %p3374 = scmp.lt.s32.totalorder %s15, 1
        %s3375 = scalar_select %p3374, %s15, 1
        %s3376 = smul.addr %s3375, 32
        %s3377 = smul.addr %s3376, 4
        %s3378 = scalar_lea.vmem %s3, %s3377
      $region44: #{yolov5_forward.3} parent=39 // pred_fallthru
        _
    $region40: #{yolov5_forward.3} parent=5 // pred_fallthru
      _
  $region6: #{yolov5_forward.3} parent=0 // loop_footer
    %s13 = sadd.s32 1, %s9
  $region7: #{yolov5_forward.3} parent=0 // loop_footer_branch
    %8 = sbr.rel target = $region3
  $region8: #{yolov5_forward.3} parent=0 // loop_exit
    _

// kernel: yolov5_forward.5
$region0: #{yolov5_forward.5}
  #allocation0 [shape = 'u32[]', space=smem, size = 0x4, offset = 0x4, fixed_abs, tag = 'smem constant byte address 0x4 - core index']
  #allocation1 [shape = 'u32[144,128]{1,0:T(1,128)}', space=vmem, size = 0x12000, scoped, tag = 'internal scratch']
  #allocation2 [shape = 'bf16[10,10,16]{2,1,0:T(8,128)(2,1)}', space=vmem, size = 0xa000, scoped, tag = 'scratch operand']
  %s0 = inlined_call_operand.vmem [shape: bf16[2,64,32], index: 0, kind: input, shape index: {}]
  %s1 = inlined_call_operand.vmem [shape: bf16[32,16], index: 1, kind: input, shape index: {}]
  %s2 = inlined_call_operand.vmem [shape: f32[1,16], index: 2, kind: input, shape index: {}]
  %s3 = inlined_call_operand.vmem [shape: bf16[32,16], index: 3, kind: input, shape index: {}]
  %s4 = inlined_call_operand.vmem [shape: f32[1,16], index: 4, kind: input, shape index: {}]
  %s5 = inlined_call_operand.vmem [shape: bf16[16,16], index: 5, kind: input, shape index: {}]
  %s6 = inlined_call_operand.vmem [shape: f32[1,16], index: 6, kind: input, shape index: {}]
  %s7 = inlined_call_operand.vmem [shape: bf16[144,16], index: 7, kind: input, shape index: {}]
  %s8 = inlined_call_operand.vmem [shape: f32[1,16], index: 8, kind: input, shape index: {}]
  %s9 = inlined_call_operand.vmem [shape: bf16[16,32], index: 9, kind: input, shape index: {}]
  %s10 = inlined_call_operand.vmem [shape: bf16[16,32], index: 10, kind: input, shape index: {}]
  %s11 = inlined_call_operand.vmem [shape: f32[1,32], index: 11, kind: input, shape index: {}]
  %s12 = inlined_call_operand.vmem [shape: f32[32,128], index: 12, kind: input, shape index: {}]
  %s13 = inlined_call_operand.vmem [shape: f32[1,128], index: 13, kind: input, shape index: {}]
  %s14 = inlined_call_operand.hbm [shape: f32[2,1,128], index: 14, kind: output, shape index: {}]
  %s15 = sld [smem:[#allocation0]]
  $region89: #{yolov5_forward.5} parent=0
    _
  %s17 = ssub.s32 1, %s15
  %s18 = scalar_select 0, %s17, %s15
  $region1: #{yolov5_forward.5} parent=0
    #allocation3 [shape = 'u8[1024]{0}', space=vmem, size = 0x400, scoped, tag = 'output window, operand 0']
    #allocation4 [shape = 's32[2]{0}', space=sflag, size = 0x8, scoped, tag = 'scoped memory for yolov5_forward.5']
    %19 = vsyncpa [#allocation4], 0
    %s20 = scalar_lea.sflag [#allocation4], 1
    %21 = vsyncpa %s20, 0
    loop: start=0, step=1, limit=4
    $region2: #{yolov5_forward.5} parent=1 // loop_pre_header
      _
    $region3: #{yolov5_forward.5} parent=1 // loop_header
      %s23 = sphi 0, %s27
      %p24 = scmp.ge.s32.totalorder %s23, 4
      %s33 = sphi 0, %s35
      %s36 = sphi 0, %s33
      %s37 = sphi 0, %s36
      %s53 = sphi 0, %s37
      %s57 = sphi 0, %s57
      %s59 = sphi 0, %s57
      %s60 = sphi 0, %s59
      %s74 = sphi 0, %s60
      %s78 = sphi 0, %s78
      %s80 = sphi 0, %s78
      %s81 = sphi 0, %s80
      %s95 = sphi 0, %s81
      %s99 = sphi 0, %s99
      %s101 = sphi 0, %s99
      %s102 = sphi 0, %s101
      %s116 = sphi 0, %s102
      %s120 = sphi 0, %s120
      %s122 = sphi 0, %s120
      %s123 = sphi 0, %s122
      %s137 = sphi 0, %s123
      %s141 = sphi 0, %s141
      %s143 = sphi 0, %s141
      %s144 = sphi 0, %s143
      %s158 = sphi 0, %s144
      %s162 = sphi 0, %s162
      %s164 = sphi 0, %s162
      %s165 = sphi 0, %s164
      %s179 = sphi 0, %s165
      %s183 = sphi 0, %s183
      %s185 = sphi 0, %s183
      %s186 = sphi 0, %s185
      %s200 = sphi 0, %s186
      %s204 = sphi 0, %s204
      %s206 = sphi 0, %s204
      %s207 = sphi 0, %s206
      %s221 = sphi 0, %s207
      %s225 = sphi 0, %s225
      %s227 = sphi 0, %s225
      %s228 = sphi 0, %s227
      %s242 = sphi 0, %s228
      %s246 = sphi 0, %s246
      %s248 = sphi 0, %s246
      %s249 = sphi 0, %s248
      %s263 = sphi 0, %s249
      %s267 = sphi 0, %s267
      %s269 = sphi 0, %s267
      %s270 = sphi 0, %s269
      %s284 = sphi 0, %s270
      %s288 = sphi 0, %s288
      %s290 = sphi 0, %s288
      %s291 = sphi 0, %s290
      %s305 = sphi 0, %s291
      %s309 = sphi 0, %s309
      %s311 = sphi 0, %s309
      %s312 = sphi 0, %s311
      %s326 = sphi 0, %s312
      %s332 = sphi 0, %s334
      %s335 = sphi 0, %s332
      %s336 = sphi 0, %s335
      %s352 = sphi 0, %s336
    $region4: #{yolov5_forward.5} parent=1 // loop_header_branch
      %26 = sbr.rel (%p24) target = $region8
    $region5: #{yolov5_forward.5} parent=1 // loop_body
      %s28 = ssub.s32 %s23, 1
      %s29 = ssub.s32 %s23, 2
      %s30 = sadd.s32 %s23, 1
      %s31 = ssub.s32 %s23, %s30
      %p32 = scmp.eq.s32.totalorder %s31, 0
      %s34 = sadd.s32 %s33, 1
      %s35 = scalar_select %p32, %s33, %s34
      %p38 = pneg %p32
      %p39 = scmp.eq.s32.totalorder %s23, 1
      %p40 = por %p38, %p39
      %p41 = scmp.ne.s32.totalorder %s33, %s36
      %p42 = scmp.eq.s32.totalorder %s23, 0
      %p43 = por %p41, %p42
      %p44 = scmp.ne.s32.totalorder %s33, %s36
      %p45 = scmp.eq.s32.totalorder %s28, 1
      %p46 = por %p44, %p45
      %p47 = scmp.ne.s32.totalorder %s36, %s37
      %p48 = scmp.eq.s32.totalorder %s28, 0
      %p49 = por %p47, %p48
      %p50 = scmp.ne.s32.totalorder %s36, %s37
      %p51 = scmp.eq.s32.totalorder %s29, 1
      %p52 = por %p50, %p51
      %p54 = scmp.ne.s32.totalorder %s37, %s53
      %p55 = scmp.eq.s32.totalorder %s29, 0
      %p56 = por %p54, %p55
      %s58 = sadd.s32 %s57, 1
      %p61 = scmp.eq.s32.totalorder %s23, 1
      %p62 = scmp.ne.s32.totalorder %s57, %s59
      %p63 = scmp.eq.s32.totalorder %s23, 0
      %p64 = por %p62, %p63
      %p65 = scmp.ne.s32.totalorder %s57, %s59
      %p66 = scmp.eq.s32.totalorder %s28, 1
      %p67 = por %p65, %p66
      %p68 = scmp.ne.s32.totalorder %s59, %s60
      %p69 = scmp.eq.s32.totalorder %s28, 0
      %p70 = por %p68, %p69
      %p71 = scmp.ne.s32.totalorder %s59, %s60
      %p72 = scmp.eq.s32.totalorder %s29, 1
      %p73 = por %p71, %p72
      %p75 = scmp.ne.s32.totalorder %s60, %s74
      %p76 = scmp.eq.s32.totalorder %s29, 0
      %p77 = por %p75, %p76
      %s79 = sadd.s32 %s78, 1
      %p82 = scmp.eq.s32.totalorder %s23, 1
      %p83 = scmp.ne.s32.totalorder %s78, %s80
      %p84 = scmp.eq.s32.totalorder %s23, 0
      %p85 = por %p83, %p84
      %p86 = scmp.ne.s32.totalorder %s78, %s80
      %p87 = scmp.eq.s32.totalorder %s28, 1
      %p88 = por %p86, %p87
      %p89 = scmp.ne.s32.totalorder %s80, %s81
      %p90 = scmp.eq.s32.totalorder %s28, 0
      %p91 = por %p89, %p90
      %p92 = scmp.ne.s32.totalorder %s80, %s81
      %p93 = scmp.eq.s32.totalorder %s29, 1
      %p94 = por %p92, %p93
      %p96 = scmp.ne.s32.totalorder %s81, %s95
      %p97 = scmp.eq.s32.totalorder %s29, 0
      %p98 = por %p96, %p97
      %s100 = sadd.s32 %s99, 1
      %p103 = scmp.eq.s32.totalorder %s23, 1
      %p104 = scmp.ne.s32.totalorder %s99, %s101
      %p105 = scmp.eq.s32.totalorder %s23, 0
      %p106 = por %p104, %p105
      %p107 = scmp.ne.s32.totalorder %s99, %s101
      %p108 = scmp.eq.s32.totalorder %s28, 1
      %p109 = por %p107, %p108
      %p110 = scmp.ne.s32.totalorder %s101, %s102
      %p111 = scmp.eq.s32.totalorder %s28, 0
      %p112 = por %p110, %p111
      %p113 = scmp.ne.s32.totalorder %s101, %s102
      %p114 = scmp.eq.s32.totalorder %s29, 1
      %p115 = por %p113, %p114
      %p117 = scmp.ne.s32.totalorder %s102, %s116
      %p118 = scmp.eq.s32.totalorder %s29, 0
      %p119 = por %p117, %p118
      %s121 = sadd.s32 %s120, 1
      %p124 = scmp.eq.s32.totalorder %s23, 1
      %p125 = scmp.ne.s32.totalorder %s120, %s122
      %p126 = scmp.eq.s32.totalorder %s23, 0
      %p127 = por %p125, %p126
      %p128 = scmp.ne.s32.totalorder %s120, %s122
      %p129 = scmp.eq.s32.totalorder %s28, 1
      %p130 = por %p128, %p129
      %p131 = scmp.ne.s32.totalorder %s122, %s123
      %p132 = scmp.eq.s32.totalorder %s28, 0
      %p133 = por %p131, %p132
      %p134 = scmp.ne.s32.totalorder %s122, %s123
      %p135 = scmp.eq.s32.totalorder %s29, 1
      %p136 = por %p134, %p135
      %p138 = scmp.ne.s32.totalorder %s123, %s137
      %p139 = scmp.eq.s32.totalorder %s29, 0
      %p140 = por %p138, %p139
      %s142 = sadd.s32 %s141, 1
      %p145 = scmp.eq.s32.totalorder %s23, 1
      %p146 = scmp.ne.s32.totalorder %s141, %s143
      %p147 = scmp.eq.s32.totalorder %s23, 0
      %p148 = por %p146, %p147
      %p149 = scmp.ne.s32.totalorder %s141, %s143
      %p150 = scmp.eq.s32.totalorder %s28, 1
      %p151 = por %p149, %p150
      %p152 = scmp.ne.s32.totalorder %s143, %s144
      %p153 = scmp.eq.s32.totalorder %s28, 0
      %p154 = por %p152, %p153
      %p155 = scmp.ne.s32.totalorder %s143, %s144
      %p156 = scmp.eq.s32.totalorder %s29, 1
      %p157 = por %p155, %p156
      %p159 = scmp.ne.s32.totalorder %s144, %s158
      %p160 = scmp.eq.s32.totalorder %s29, 0
      %p161 = por %p159, %p160
      %s163 = sadd.s32 %s162, 1
      %p166 = scmp.eq.s32.totalorder %s23, 1
      %p167 = scmp.ne.s32.totalorder %s162, %s164
      %p168 = scmp.eq.s32.totalorder %s23, 0
      %p169 = por %p167, %p168
      %p170 = scmp.ne.s32.totalorder %s162, %s164
      %p171 = scmp.eq.s32.totalorder %s28, 1
      %p172 = por %p170, %p171
      %p173 = scmp.ne.s32.totalorder %s164, %s165
      %p174 = scmp.eq.s32.totalorder %s28, 0
      %p175 = por %p173, %p174
      %p176 = scmp.ne.s32.totalorder %s164, %s165
      %p177 = scmp.eq.s32.totalorder %s29, 1
      %p178 = por %p176, %p177
      %p180 = scmp.ne.s32.totalorder %s165, %s179
      %p181 = scmp.eq.s32.totalorder %s29, 0
      %p182 = por %p180, %p181
      %s184 = sadd.s32 %s183, 1
      %p187 = scmp.eq.s32.totalorder %s23, 1
      %p188 = scmp.ne.s32.totalorder %s183, %s185
      %p189 = scmp.eq.s32.totalorder %s23, 0
      %p190 = por %p188, %p189
      %p191 = scmp.ne.s32.totalorder %s183, %s185
      %p192 = scmp.eq.s32.totalorder %s28, 1
      %p193 = por %p191, %p192
      %p194 = scmp.ne.s32.totalorder %s185, %s186
      %p195 = scmp.eq.s32.totalorder %s28, 0
      %p196 = por %p194, %p195
      %p197 = scmp.ne.s32.totalorder %s185, %s186
      %p198 = scmp.eq.s32.totalorder %s29, 1
      %p199 = por %p197, %p198
      %p201 = scmp.ne.s32.totalorder %s186, %s200
      %p202 = scmp.eq.s32.totalorder %s29, 0
      %p203 = por %p201, %p202
      %s205 = sadd.s32 %s204, 1
      %p208 = scmp.eq.s32.totalorder %s23, 1
      %p209 = scmp.ne.s32.totalorder %s204, %s206
      %p210 = scmp.eq.s32.totalorder %s23, 0
      %p211 = por %p209, %p210
      %p212 = scmp.ne.s32.totalorder %s204, %s206
      %p213 = scmp.eq.s32.totalorder %s28, 1
      %p214 = por %p212, %p213
      %p215 = scmp.ne.s32.totalorder %s206, %s207
      %p216 = scmp.eq.s32.totalorder %s28, 0
      %p217 = por %p215, %p216
      %p218 = scmp.ne.s32.totalorder %s206, %s207
      %p219 = scmp.eq.s32.totalorder %s29, 1
      %p220 = por %p218, %p219
      %p222 = scmp.ne.s32.totalorder %s207, %s221
      %p223 = scmp.eq.s32.totalorder %s29, 0
      %p224 = por %p222, %p223
      %s226 = sadd.s32 %s225, 1
      %p229 = scmp.eq.s32.totalorder %s23, 1
      %p230 = scmp.ne.s32.totalorder %s225, %s227
      %p231 = scmp.eq.s32.totalorder %s23, 0
      %p232 = por %p230, %p231
      %p233 = scmp.ne.s32.totalorder %s225, %s227
      %p234 = scmp.eq.s32.totalorder %s28, 1
      %p235 = por %p233, %p234
      %p236 = scmp.ne.s32.totalorder %s227, %s228
      %p237 = scmp.eq.s32.totalorder %s28, 0
      %p238 = por %p236, %p237
      %p239 = scmp.ne.s32.totalorder %s227, %s228
      %p240 = scmp.eq.s32.totalorder %s29, 1
      %p241 = por %p239, %p240
      %p243 = scmp.ne.s32.totalorder %s228, %s242
      %p244 = scmp.eq.s32.totalorder %s29, 0
      %p245 = por %p243, %p244
      %s247 = sadd.s32 %s246, 1
      %p250 = scmp.eq.s32.totalorder %s23, 1
      %p251 = scmp.ne.s32.totalorder %s246, %s248
      %p252 = scmp.eq.s32.totalorder %s23, 0
      %p253 = por %p251, %p252
      %p254 = scmp.ne.s32.totalorder %s246, %s248
      %p255 = scmp.eq.s32.totalorder %s28, 1
      %p256 = por %p254, %p255
      %p257 = scmp.ne.s32.totalorder %s248, %s249
      %p258 = scmp.eq.s32.totalorder %s28, 0
      %p259 = por %p257, %p258
      %p260 = scmp.ne.s32.totalorder %s248, %s249
      %p261 = scmp.eq.s32.totalorder %s29, 1
      %p262 = por %p260, %p261
      %p264 = scmp.ne.s32.totalorder %s249, %s263
      %p265 = scmp.eq.s32.totalorder %s29, 0
      %p266 = por %p264, %p265
      %s268 = sadd.s32 %s267, 1
      %p271 = scmp.eq.s32.totalorder %s23, 1
      %p272 = scmp.ne.s32.totalorder %s267, %s269
      %p273 = scmp.eq.s32.totalorder %s23, 0
      %p274 = por %p272, %p273
      %p275 = scmp.ne.s32.totalorder %s267, %s269
      %p276 = scmp.eq.s32.totalorder %s28, 1
      %p277 = por %p275, %p276
      %p278 = scmp.ne.s32.totalorder %s269, %s270
      %p279 = scmp.eq.s32.totalorder %s28, 0
      %p280 = por %p278, %p279
      %p281 = scmp.ne.s32.totalorder %s269, %s270
      %p282 = scmp.eq.s32.totalorder %s29, 1
      %p283 = por %p281, %p282
      %p285 = scmp.ne.s32.totalorder %s270, %s284
      %p286 = scmp.eq.s32.totalorder %s29, 0
      %p287 = por %p285, %p286
      %s289 = sadd.s32 %s288, 1
      %p292 = scmp.eq.s32.totalorder %s23, 1
      %p293 = scmp.ne.s32.totalorder %s288, %s290
      %p294 = scmp.eq.s32.totalorder %s23, 0
      %p295 = por %p293, %p294
      %p296 = scmp.ne.s32.totalorder %s288, %s290
      %p297 = scmp.eq.s32.totalorder %s28, 1
      %p298 = por %p296, %p297
      %p299 = scmp.ne.s32.totalorder %s290, %s291
      %p300 = scmp.eq.s32.totalorder %s28, 0
      %p301 = por %p299, %p300
      %p302 = scmp.ne.s32.totalorder %s290, %s291
      %p303 = scmp.eq.s32.totalorder %s29, 1
      %p304 = por %p302, %p303
      %p306 = scmp.ne.s32.totalorder %s291, %s305
      %p307 = scmp.eq.s32.totalorder %s29, 0
      %p308 = por %p306, %p307
      %s310 = sadd.s32 %s309, 1
      %p313 = scmp.eq.s32.totalorder %s23, 1
      %p314 = scmp.ne.s32.totalorder %s309, %s311
      %p315 = scmp.eq.s32.totalorder %s23, 0
      %p316 = por %p314, %p315
      %p317 = scmp.ne.s32.totalorder %s309, %s311
      %p318 = scmp.eq.s32.totalorder %s28, 1
      %p319 = por %p317, %p318
      %p320 = scmp.ne.s32.totalorder %s311, %s312
      %p321 = scmp.eq.s32.totalorder %s28, 0
      %p322 = por %p320, %p321
      %p323 = scmp.ne.s32.totalorder %s311, %s312
      %p324 = scmp.eq.s32.totalorder %s29, 1
      %p325 = por %p323, %p324
      %p327 = scmp.ne.s32.totalorder %s312, %s326
      %p328 = scmp.eq.s32.totalorder %s29, 0
      %p329 = por %p327, %p328
      %s330 = ssub.s32 %s23, %s30
      %p331 = scmp.eq.s32.totalorder %s330, 0
      %s333 = sadd.s32 %s332, 1
      %s334 = scalar_select %p331, %s332, %s333
      %p337 = pneg %p331
      %p338 = scmp.eq.s32.totalorder %s23, 1
      %p339 = por %p337, %p338
      %p340 = scmp.ne.s32.totalorder %s332, %s335
      %p341 = scmp.eq.s32.totalorder %s23, 0
      %p342 = por %p340, %p341
      %p343 = scmp.ne.s32.totalorder %s332, %s335
      %p344 = scmp.eq.s32.totalorder %s28, 1
      %p345 = por %p343, %p344
      %p346 = scmp.ne.s32.totalorder %s335, %s336
      %p347 = scmp.eq.s32.totalorder %s28, 0
      %p348 = por %p346, %p347
      %p349 = scmp.ne.s32.totalorder %s335, %s336
      %p350 = scmp.eq.s32.totalorder %s29, 1
      %p351 = por %p349, %p350
      %p353 = scmp.ne.s32.totalorder %s336, %s352
      %p354 = scmp.eq.s32.totalorder %s29, 0
      %p355 = por %p353, %p354
      %p356 = scmp.le.s32.totalorder 1, %s23
      %p357 = scmp.lt.s32.totalorder %s23, 3
      %p358 = pnand %p356, %p357
      %p359 = pneg %p358
      // Predicated region
      $region9: #{yolov5_forward.5} parent=5 // pred_check
        _
      $region10: #{yolov5_forward.5} parent=5 // pred_check_branch
        %361 = sbr.rel (%p358) target = $region12
      $region11: #{yolov5_forward.5} parent=5 // pred_region
        %s362 = ssub.s32 %s23, 1
        // Predicated region
        $region13: #{yolov5_forward.5} parent=11 // pred_check
          %p363 = pneg %p70
        $region14: #{yolov5_forward.5} parent=11 // pred_check_branch
          %365 = sbr.rel (%p363) target = $region16
        $region15: #{yolov5_forward.5} parent=11 // pred_region
          _
        $region16: #{yolov5_forward.5} parent=11 // pred_fallthru
          _
        // Predicated region
        $region17: #{yolov5_forward.5} parent=11 // pred_check
          %p366 = pneg %p91
        $region18: #{yolov5_forward.5} parent=11 // pred_check_branch
          %368 = sbr.rel (%p366) target = $region20
        $region19: #{yolov5_forward.5} parent=11 // pred_region
          _
        $region20: #{yolov5_forward.5} parent=11 // pred_fallthru
          _
        // Predicated region
        $region21: #{yolov5_forward.5} parent=11 // pred_check
          %p369 = pneg %p112
        $region22: #{yolov5_forward.5} parent=11 // pred_check_branch
          %371 = sbr.rel (%p369) target = $region24
        $region23: #{yolov5_forward.5} parent=11 // pred_region
          _
        $region24: #{yolov5_forward.5} parent=11 // pred_fallthru
          _
        // Predicated region
        $region25: #{yolov5_forward.5} parent=11 // pred_check
          %p372 = pneg %p133
        $region26: #{yolov5_forward.5} parent=11 // pred_check_branch
          %374 = sbr.rel (%p372) target = $region28
        $region27: #{yolov5_forward.5} parent=11 // pred_region
          _
        $region28: #{yolov5_forward.5} parent=11 // pred_fallthru
          _
        // Predicated region
        $region29: #{yolov5_forward.5} parent=11 // pred_check
          %p375 = pneg %p154
        $region30: #{yolov5_forward.5} parent=11 // pred_check_branch
          %377 = sbr.rel (%p375) target = $region32
        $region31: #{yolov5_forward.5} parent=11 // pred_region
          _
        $region32: #{yolov5_forward.5} parent=11 // pred_fallthru
          _
        // Predicated region
        $region33: #{yolov5_forward.5} parent=11 // pred_check
          %p378 = pneg %p175
        $region34: #{yolov5_forward.5} parent=11 // pred_check_branch
          %380 = sbr.rel (%p378) target = $region36
        $region35: #{yolov5_forward.5} parent=11 // pred_region
          _
        $region36: #{yolov5_forward.5} parent=11 // pred_fallthru
          _
        // Predicated region
        $region37: #{yolov5_forward.5} parent=11 // pred_check
          %p381 = pneg %p196
        $region38: #{yolov5_forward.5} parent=11 // pred_check_branch
          %383 = sbr.rel (%p381) target = $region40
        $region39: #{yolov5_forward.5} parent=11 // pred_region
          _
        $region40: #{yolov5_forward.5} parent=11 // pred_fallthru
          _
        // Predicated region
        $region41: #{yolov5_forward.5} parent=11 // pred_check
          %p384 = pneg %p217
        $region42: #{yolov5_forward.5} parent=11 // pred_check_branch
          %386 = sbr.rel (%p384) target = $region44
        $region43: #{yolov5_forward.5} parent=11 // pred_region
          _
        $region44: #{yolov5_forward.5} parent=11 // pred_fallthru
          _
        // Predicated region
        $region45: #{yolov5_forward.5} parent=11 // pred_check
          %p387 = pneg %p238
        $region46: #{yolov5_forward.5} parent=11 // pred_check_branch
          %389 = sbr.rel (%p387) target = $region48
        $region47: #{yolov5_forward.5} parent=11 // pred_region
          _
        $region48: #{yolov5_forward.5} parent=11 // pred_fallthru
          _
        // Predicated region
        $region49: #{yolov5_forward.5} parent=11 // pred_check
          %p390 = pneg %p259
        $region50: #{yolov5_forward.5} parent=11 // pred_check_branch
          %392 = sbr.rel (%p390) target = $region52
        $region51: #{yolov5_forward.5} parent=11 // pred_region
          _
        $region52: #{yolov5_forward.5} parent=11 // pred_fallthru
          _
        // Predicated region
        $region53: #{yolov5_forward.5} parent=11 // pred_check
          %p393 = pneg %p280
        $region54: #{yolov5_forward.5} parent=11 // pred_check_branch
          %395 = sbr.rel (%p393) target = $region56
        $region55: #{yolov5_forward.5} parent=11 // pred_region
          _
        $region56: #{yolov5_forward.5} parent=11 // pred_fallthru
          _
        // Predicated region
        $region57: #{yolov5_forward.5} parent=11 // pred_check
          %p396 = pneg %p301
        $region58: #{yolov5_forward.5} parent=11 // pred_check_branch
          %398 = sbr.rel (%p396) target = $region60
        $region59: #{yolov5_forward.5} parent=11 // pred_region
          _
        $region60: #{yolov5_forward.5} parent=11 // pred_fallthru
          _
        // Predicated region
        $region61: #{yolov5_forward.5} parent=11 // pred_check
          %p399 = pneg %p322
        $region62: #{yolov5_forward.5} parent=11 // pred_check_branch
          %401 = sbr.rel (%p399) target = $region64
        $region63: #{yolov5_forward.5} parent=11 // pred_region
          _
        $region64: #{yolov5_forward.5} parent=11 // pred_fallthru
          _
      $region12: #{yolov5_forward.5} parent=5 // pred_fallthru
        _
      %p402 = scmp.lt.s32.totalorder %s23, 2
      // Predicated region
      $region65: #{yolov5_forward.5} parent=5 // pred_check
        %p403 = pneg %p402
      $region66: #{yolov5_forward.5} parent=5 // pred_check_branch
        %405 = sbr.rel (%p403) target = $region68
      $region67: #{yolov5_forward.5} parent=5 // pred_region
        // Predicated region
        $region69: #{yolov5_forward.5} parent=67 // pred_check
          %p406 = pneg %p43
        $region70: #{yolov5_forward.5} parent=67 // pred_check_branch
          %408 = sbr.rel (%p406) target = $region72
        $region71: #{yolov5_forward.5} parent=67 // pred_region
          %p409 = scmp.lt.s32.totalorder %s23, 1
          %s410 = scalar_select %p409, %s23, 1
          %s411 = smul.addr %s410, 8
          %s412 = smul.addr %s411, 4
          %s413 = scalar_lea.vmem %s0, %s412
        $region72: #{yolov5_forward.5} parent=67 // pred_fallthru
          _
      $region68: #{yolov5_forward.5} parent=5 // pred_fallthru
        _
      %p414 = scmp.le.s32.totalorder 1, %s23
      %p415 = scmp.lt.s32.totalorder %s23, 3
      %p416 = pnand %p414, %p415
      %p417 = pneg %p416
      // Predicated region
      $region73: #{yolov5_forward.5} parent=5 // pred_check
        _
      $region74: #{yolov5_forward.5} parent=5 // pred_check_branch
        %419 = sbr.rel (%p416) target = $region76
      $region75: #{yolov5_forward.5} parent=5 // pred_region
        %s420 = ssub.s32 %s23, 1
        %p421 = scmp.lt.s32.totalorder %s28, 1
        %s422 = scalar_select %p421, %s28, 1
        %s423 = smul.addr %s422, 8
        %s424 = smul.addr %s423, 4
        %s425 = scalar_lea.vmem %s0, %s424
        %p426 = pneg %p49
        %p427 = pneg %p46
        %p428 = pneg %p70
        %p429 = pneg %p67
        %p430 = pneg %p91
        %p431 = pneg %p88
        %p432 = pneg %p112
        %p433 = pneg %p109
        %p434 = pneg %p133
        %p435 = pneg %p130
        %p436 = pneg %p154
        %p437 = pneg %p151
        %p438 = pneg %p175
        %p439 = pneg %p172
        %p440 = pneg %p196
        %p441 = pneg %p193
        %p442 = pneg %p217
        %p443 = pneg %p214
        %p444 = pneg %p238
        %p445 = pneg %p235
        %p446 = pneg %p259
        %p447 = pneg %p256
        %p448 = pneg %p280
        %p449 = pneg %p277
        %p450 = pneg %p301
        %p451 = pneg %p298
        %p452 = pneg %p322
        %p453 = pneg %p319
        %p454 = pneg %p348
        %p455 = pneg %p345
        %s456 = sand.u32 %s335, 1
        %s457 = scalar_lea.sflag [#allocation4], %s456
        %s458 = sand.u32 %s335, 1
        %s459 = scalar_lea.vmem [#allocation3], %s458
        %p460 = scmp.lt.s32.totalorder %s28, 1
        %s461 = scalar_select %p460, %s28, 1
        %s462 = smul.addr %s461, 8
        %s463 = smul.addr %s462, 4
        %s464 = scalar_lea.vmem %s0, %s463
        %v466 = vld [vmem:[%s464] sm:$0xf]
        %v467 = vld [vmem:[%s464 + $0x4] sm:$0xf]
        %v468 = vld [vmem:[%s464 + $0x8] sm:$0xf]
        %v469 = vld [vmem:[%s464 + $0xc] sm:$0xf]
        %v470 = vld [vmem:[%s464 + $0x10] sm:$0xf]
        %v471 = vld [vmem:[%s464 + $0x14] sm:$0xf]
        %v472 = vld [vmem:[%s464 + $0x18] sm:$0xf]
        %v473 = vld [vmem:[%s464 + $0x1c] sm:$0xf]
        %v474 = vld [vmem:[%s1] sm:$0xf]
        %v475 = vld [vmem:[%s1 + $0x4] sm:$0xf]
        %v476 = vld [vmem:[%s1 + $0x8] sm:$0xf]
        %v477 = vld [vmem:[%s1 + $0xc] sm:$0xf]
        %v478 = vld [vmem:[%s2] sm:$0x1]
        %v480 = vlaneseq
        %v481 = vshrl.u32 %v480, 7
        %v482 = vsub.s32 0, %v481
        %v483 = vrot.slane %v478, %v482
        %v493 = vunpack.c.l.b16 %v466
        %v494 = vunpack.c.l.b16 %v467
        %v495 = vunpack.c.l.b16 %v468
        %v496 = vunpack.c.l.b16 %v469
        %v497 = vunpack.c.l.b16 %v470
        %v498 = vunpack.c.l.b16 %v471
        %v499 = vunpack.c.l.b16 %v472
        %v500 = vunpack.c.l.b16 %v473
        %v501 = vpack.c.b16 %v494, %v493
        %v502 = vpack.c.b16 %v496, %v495
        %v503 = vpack.c.b16 %v498, %v497
        %v504 = vpack.c.b16 %v500, %v499
        %v509 = vunpack.c.l.b16 %v474
        %v510 = vunpack.c.l.b16 %v475
        %v511 = vunpack.c.l.b16 %v476
        %v512 = vunpack.c.l.b16 %v477
        %v513 = vpack.c.b16 %v510, %v509
        %v514 = vpack.c.b16 %v512, %v511
        %vm517 = vcmask 261120
        %v519 = vsel %vm517, %v501, 0
        %v522 = vsel %vm517, %v502, 0
        %v525 = vsel %vm517, %v503, 0
        %v528 = vsel %vm517, %v504, 0
        %530 = vmatprep.subr.bf16.mxu0 0
        %531 = vmatpush1.bf16.msra.mxu0 0
        %532 = vmatprep.subr.bf16.mxu0 0
        %533 = vmatpush1.bf16.msra.mxu0 0
        %534 = vmatprep.subr.bf16.mxu0 0
        %535 = vmatpush1.bf16.msra.mxu0 0
        %536 = vmatprep.subr.bf16.mxu0 0
        %537 = vmatpush1.bf16.msra.mxu0 0
        %538 = vmatprep.subr.bf16.mxu0 0
        %539 = vmatpush1.bf16.msra.mxu0 0
        %540 = vmatprep.subr.bf16.mxu0 0
        %541 = vmatpush1.bf16.msra.mxu0 0
        %542 = vmatprep.subr.bf16.mxu0 0
        %543 = vmatpush1.bf16.msra.mxu0 %v514
        %544 = vmatprep.subr.bf16.mxu0 0
        %545 = vmatpush1.bf16.msra.mxu0 %v513
        %546 = vmatprep.subr.bf16.mxu0 0
        %547 = vmatpush2.bf16.msra.mxu0 0
        %548 = vmatprep.subr.bf16.mxu0 0
        %549 = vmatpush2.bf16.msra.mxu0 0
        %550 = vmatprep.subr.bf16.mxu0 0
        %551 = vmatpush2.bf16.msra.mxu0 0
        %552 = vmatprep.subr.bf16.mxu0 0
        %553 = vmatpush2.bf16.msra.mxu0 0
        %554 = vmatprep.subr.bf16.mxu0 0
        %555 = vmatpush2.bf16.msra.mxu0 0
        %556 = vmatprep.subr.bf16.mxu0 0
        %557 = vmatpush2.bf16.msra.mxu0 0
        %558 = vmatprep.subr.bf16.mxu0 0
        %559 = vmatpush2.bf16.msra.mxu0 0
        %560 = vmatprep.subr.bf16.mxu0 0
        %561 = vmatpush2.bf16.msra.mxu0 0
        %562 = vmatprep.mubr.bf16.mxu0 0
        %563 = vmatmul.mubr.bf16.gmra.mxu0 %v519
        %v564 = vpop.f32.mrf.mxu0
        %v565 = vadd.f32 %v483, %v564
        %v566 = vpop.f32.mrf.mxu0
        %v567 = vpop.f32.mrf.mxu0
        %v568 = vadd.f32 %v483, %v567
        %v569 = vpop.f32.mrf.mxu0
        %570 = vmatprep.mubr.bf16.mxu0 0
        %571 = vmatmul.mubr.bf16.gmra.mxu0 %v522
        %v572 = vpop.f32.mrf.mxu0
        %v573 = vadd.f32 %v483, %v572
        %v574 = vpop.f32.mrf.mxu0
        %v575 = vpop.f32.mrf.mxu0
        %v576 = vadd.f32 %v483, %v575
        %v577 = vpop.f32.mrf.mxu0
        %578 = vmatprep.mubr.bf16.mxu0 0
        %579 = vmatmul.mubr.bf16.gmra.mxu0 %v525
        %v580 = vpop.f32.mrf.mxu0
        %v581 = vadd.f32 %v483, %v580
        %v582 = vpop.f32.mrf.mxu0
        %v583 = vpop.f32.mrf.mxu0
        %v584 = vadd.f32 %v483, %v583
        %v585 = vpop.f32.mrf.mxu0
        %586 = vmatprep.mubr.bf16.mxu0 0
        %587 = vmatmul.mubr.bf16.gmra.mxu0 %v528
        %v588 = vpop.f32.mrf.mxu0
        %v589 = vadd.f32 %v483, %v588
        %v590 = vpop.f32.mrf.mxu0
        %v591 = vpop.f32.mrf.mxu0
        %v592 = vadd.f32 %v483, %v591
        %v593 = vpop.f32.mrf.mxu0
        %594 = vdwg.mxu0
        %v595 = vxor.u32 %v565, 2147483648
        %v596 = vxor.u32 %v568, 2147483648
        %v597 = vxor.u32 %v573, 2147483648
        %v598 = vxor.u32 %v576, 2147483648
        %v599 = vxor.u32 %v581, 2147483648
        %v600 = vxor.u32 %v584, 2147483648
        %v601 = vxor.u32 %v589, 2147483648
        %v602 = vxor.u32 %v592, 2147483648
        %v603 = vmul.f32 %v595, 1.442695
        %v604 = vpow.pop %v603
        %v605 = vmul.f32 %v596, 1.442695
        %v606 = vpow.pop %v605
        %v607 = vmul.f32 %v597, 1.442695
        %v608 = vpow.pop %v607
        %v609 = vmul.f32 %v598, 1.442695
        %v610 = vpow.pop %v609
        %v611 = vmul.f32 %v599, 1.442695
        %v612 = vpow.pop %v611
        %v613 = vmul.f32 %v600, 1.442695
        %v614 = vpow.pop %v613
        %v615 = vmul.f32 %v601, 1.442695
        %v616 = vpow.pop %v615
        %v617 = vmul.f32 %v602, 1.442695
        %v618 = vpow.pop %v617
        %v619 = vadd.f32 %v604, 1.0
        %v620 = vadd.f32 %v606, 1.0
        %v621 = vadd.f32 %v608, 1.0
        %v622 = vadd.f32 %v610, 1.0
        %v623 = vadd.f32 %v612, 1.0
        %v624 = vadd.f32 %v614, 1.0
        %v625 = vadd.f32 %v616, 1.0
        %v626 = vadd.f32 %v618, 1.0
        %v627 = vrcp.pop %v619
        %v628 = vmul.f32 1.0, %v627
        %v629 = vrcp.pop %v620
        %v630 = vmul.f32 1.0, %v629
        %v631 = vrcp.pop %v621
        %v632 = vmul.f32 1.0, %v631
        %v633 = vrcp.pop %v622
        %v634 = vmul.f32 1.0, %v633
        %v635 = vrcp.pop %v623
        %v636 = vmul.f32 1.0, %v635
        %v637 = vrcp.pop %v624
        %v638 = vmul.f32 1.0, %v637
        %v639 = vrcp.pop %v625
        %v640 = vmul.f32 1.0, %v639
        %v641 = vrcp.pop %v626
        %v642 = vmul.f32 1.0, %v641
        %v643 = vmul.f32 %v565, %v628
        %v644 = vmul.f32 %v568, %v630
        %v645 = vmul.f32 %v573, %v632
        %v646 = vmul.f32 %v576, %v634
        %v647 = vmul.f32 %v581, %v636
        %v648 = vmul.f32 %v584, %v638
        %v649 = vmul.f32 %v589, %v640
        %v650 = vmul.f32 %v592, %v642
        %v651 = vld [vmem:[%s3] sm:$0xf]
        %v652 = vld [vmem:[%s3 + $0x4] sm:$0xf]
        %v653 = vld [vmem:[%s3 + $0x8] sm:$0xf]
        %v654 = vld [vmem:[%s3 + $0xc] sm:$0xf]
        %v655 = vld [vmem:[%s4] sm:$0x1]
        %v657 = vlaneseq
        %v658 = vshrl.u32 %v657, 7
        %v659 = vsub.s32 0, %v658
        %v660 = vrot.slane %v655, %v659
        %v666 = vunpack.c.l.b16 %v651
        %v667 = vunpack.c.l.b16 %v652
        %v668 = vunpack.c.l.b16 %v653
        %v669 = vunpack.c.l.b16 %v654
        %v670 = vpack.c.b16 %v667, %v666
        %v671 = vpack.c.b16 %v669, %v668
        %674 = vmatprep.subr.bf16.mxu0 0
        %675 = vmatpush1.bf16.msra.mxu0 0
        %676 = vmatprep.subr.bf16.mxu0 0
        %677 = vmatpush1.bf16.msra.mxu0 0
        %678 = vmatprep.subr.bf16.mxu0 0
        %679 = vmatpush1.bf16.msra.mxu0 0
        %680 = vmatprep.subr.bf16.mxu0 0
        %681 = vmatpush1.bf16.msra.mxu0 0
        %682 = vmatprep.subr.bf16.mxu0 0
        %683 = vmatpush1.bf16.msra.mxu0 0
        %684 = vmatprep.subr.bf16.mxu0 0
        %685 = vmatpush1.bf16.msra.mxu0 0
        %686 = vmatprep.subr.bf16.mxu0 0
        %687 = vmatpush1.bf16.msra.mxu0 %v671
        %688 = vmatprep.subr.bf16.mxu0 0
        %689 = vmatpush1.bf16.msra.mxu0 %v670
        %690 = vmatprep.subr.bf16.mxu0 0
        %691 = vmatpush2.bf16.msra.mxu0 0
        %692 = vmatprep.subr.bf16.mxu0 0
        %693 = vmatpush2.bf16.msra.mxu0 0
        %694 = vmatprep.subr.bf16.mxu0 0
        %695 = vmatpush2.bf16.msra.mxu0 0
        %696 = vmatprep.subr.bf16.mxu0 0
        %697 = vmatpush2.bf16.msra.mxu0 0
        %698 = vmatprep.subr.bf16.mxu0 0
        %699 = vmatpush2.bf16.msra.mxu0 0
        %700 = vmatprep.subr.bf16.mxu0 0
        %701 = vmatpush2.bf16.msra.mxu0 0
        %702 = vmatprep.subr.bf16.mxu0 0
        %703 = vmatpush2.bf16.msra.mxu0 0
        %704 = vmatprep.subr.bf16.mxu0 0
        %705 = vmatpush2.bf16.msra.mxu0 0
        %706 = vmatprep.mubr.bf16.mxu0 0
        %707 = vmatmul.mubr.bf16.gmra.mxu0 %v519
        %v708 = vpop.f32.mrf.mxu0
        %v709 = vadd.f32 %v660, %v708
        %v710 = vpop.f32.mrf.mxu0
        %v711 = vpop.f32.mrf.mxu0
        %v712 = vadd.f32 %v660, %v711
        %v713 = vpop.f32.mrf.mxu0
        %714 = vmatprep.mubr.bf16.mxu0 0
        %715 = vmatmul.mubr.bf16.gmra.mxu0 %v522
        %v716 = vpop.f32.mrf.mxu0
        %v717 = vadd.f32 %v660, %v716
        %v718 = vpop.f32.mrf.mxu0
        %v719 = vpop.f32.mrf.mxu0
        %v720 = vadd.f32 %v660, %v719
        %v721 = vpop.f32.mrf.mxu0
        %722 = vmatprep.mubr.bf16.mxu0 0
        %723 = vmatmul.mubr.bf16.gmra.mxu0 %v525
        %v724 = vpop.f32.mrf.mxu0
        %v725 = vadd.f32 %v660, %v724
        %v726 = vpop.f32.mrf.mxu0
        %v727 = vpop.f32.mrf.mxu0
        %v728 = vadd.f32 %v660, %v727
        %v729 = vpop.f32.mrf.mxu0
        %730 = vmatprep.mubr.bf16.mxu0 0
        %731 = vmatmul.mubr.bf16.gmra.mxu0 %v528
        %v732 = vpop.f32.mrf.mxu0
        %v733 = vadd.f32 %v660, %v732
        %v734 = vpop.f32.mrf.mxu0
        %v735 = vpop.f32.mrf.mxu0
        %v736 = vadd.f32 %v660, %v735
        %v737 = vpop.f32.mrf.mxu0
        %738 = vdwg.mxu0
        %v739 = vxor.u32 %v709, 2147483648
        %v740 = vxor.u32 %v712, 2147483648
        %v741 = vxor.u32 %v717, 2147483648
        %v742 = vxor.u32 %v720, 2147483648
        %v743 = vxor.u32 %v725, 2147483648
        %v744 = vxor.u32 %v728, 2147483648
        %v745 = vxor.u32 %v733, 2147483648
        %v746 = vxor.u32 %v736, 2147483648
        %v747 = vmul.f32 %v739, 1.442695
        %v748 = vpow.pop %v747
        %v749 = vmul.f32 %v740, 1.442695
        %v750 = vpow.pop %v749
        %v751 = vmul.f32 %v741, 1.442695
        %v752 = vpow.pop %v751
        %v753 = vmul.f32 %v742, 1.442695
        %v754 = vpow.pop %v753
        %v755 = vmul.f32 %v743, 1.442695
        %v756 = vpow.pop %v755
        %v757 = vmul.f32 %v744, 1.442695
        %v758 = vpow.pop %v757
        %v759 = vmul.f32 %v745, 1.442695
        %v760 = vpow.pop %v759
        %v761 = vmul.f32 %v746, 1.442695
        %v762 = vpow.pop %v761
        %v763 = vadd.f32 %v748, 1.0
        %v764 = vadd.f32 %v750, 1.0
        %v765 = vadd.f32 %v752, 1.0
        %v766 = vadd.f32 %v754, 1.0
        %v767 = vadd.f32 %v756, 1.0
        %v768 = vadd.f32 %v758, 1.0
        %v769 = vadd.f32 %v760, 1.0
        %v770 = vadd.f32 %v762, 1.0
        %v771 = vrcp.pop %v763
        %v772 = vmul.f32 1.0, %v771
        %v773 = vrcp.pop %v764
        %v774 = vmul.f32 1.0, %v773
        %v775 = vrcp.pop %v765
        %v776 = vmul.f32 1.0, %v775
        %v777 = vrcp.pop %v766
        %v778 = vmul.f32 1.0, %v777
        %v779 = vrcp.pop %v767
        %v780 = vmul.f32 1.0, %v779
        %v781 = vrcp.pop %v768
        %v782 = vmul.f32 1.0, %v781
        %v783 = vrcp.pop %v769
        %v784 = vmul.f32 1.0, %v783
        %v785 = vrcp.pop %v770
        %v786 = vmul.f32 1.0, %v785
        %v787 = vmul.f32 %v709, %v772
        %v788 = vmul.f32 %v712, %v774
        %v789 = vmul.f32 %v717, %v776
        %v790 = vmul.f32 %v720, %v778
        %v791 = vmul.f32 %v725, %v780
        %v792 = vmul.f32 %v728, %v782
        %v793 = vmul.f32 %v733, %v784
        %v794 = vmul.f32 %v736, %v786
        %v795 = vpack.c.bf16 %v644, %v643
        %v796 = vpack.c.bf16 %v646, %v645
        %v797 = vpack.c.bf16 %v648, %v647
        %v798 = vpack.c.bf16 %v650, %v649
        %v799 = vld [vmem:[%s5] sm:$0xf]
        %v800 = vld [vmem:[%s5 + $0x4] sm:$0xf]
        %v801 = vld [vmem:[%s6] sm:$0x1]
        %v803 = vlaneseq
        %v804 = vshrl.u32 %v803, 7
        %v805 = vsub.s32 0, %v804
        %v806 = vrot.slane %v801, %v805
        %v810 = vunpack.c.l.b16 %v799
        %v811 = vunpack.c.l.b16 %v800
        %v812 = vpack.c.b16 %v811, %v810
        %vm814 = vcmask 130048
        %v816 = vsel %vm814, %v795, 0
        %v819 = vsel %vm814, %v796, 0
        %v822 = vsel %vm814, %v797, 0
        %v825 = vsel %vm814, %v798, 0
        %827 = vmatprep.subr.bf16.mxu0 0
        %828 = vmatpush1.bf16.msra.mxu0 0
        %829 = vmatprep.subr.bf16.mxu0 0
        %830 = vmatpush1.bf16.msra.mxu0 0
        %831 = vmatprep.subr.bf16.mxu0 0
        %832 = vmatpush1.bf16.msra.mxu0 0
        %833 = vmatprep.subr.bf16.mxu0 0
        %834 = vmatpush1.bf16.msra.mxu0 0
        %835 = vmatprep.subr.bf16.mxu0 0
        %836 = vmatpush1.bf16.msra.mxu0 0
        %837 = vmatprep.subr.bf16.mxu0 0
        %838 = vmatpush1.bf16.msra.mxu0 0
        %839 = vmatprep.subr.bf16.mxu0 0
        %840 = vmatpush1.bf16.msra.mxu0 0
        %841 = vmatprep.subr.bf16.mxu0 0
        %842 = vmatpush1.bf16.msra.mxu0 %v812
        %843 = vmatprep.subr.bf16.mxu0 0
        %844 = vmatpush2.bf16.msra.mxu0 0
        %845 = vmatprep.subr.bf16.mxu0 0
        %846 = vmatpush2.bf16.msra.mxu0 0
        %847 = vmatprep.subr.bf16.mxu0 0
        %848 = vmatpush2.bf16.msra.mxu0 0
        %849 = vmatprep.subr.bf16.mxu0 0
        %850 = vmatpush2.bf16.msra.mxu0 0
        %851 = vmatprep.subr.bf16.mxu0 0
        %852 = vmatpush2.bf16.msra.mxu0 0
        %853 = vmatprep.subr.bf16.mxu0 0
        %854 = vmatpush2.bf16.msra.mxu0 0
        %855 = vmatprep.subr.bf16.mxu0 0
        %856 = vmatpush2.bf16.msra.mxu0 0
        %857 = vmatprep.subr.bf16.mxu0 0
        %858 = vmatpush2.bf16.msra.mxu0 0
        %859 = vmatprep.mubr.bf16.mxu0 0
        %860 = vmatmul.mubr.bf16.gmra.mxu0 %v816
        %v861 = vpop.f32.mrf.mxu0
        %v862 = vadd.f32 %v806, %v861
        %v863 = vpop.f32.mrf.mxu0
        %v864 = vpop.f32.mrf.mxu0
        %v865 = vadd.f32 %v806, %v864
        %v866 = vpop.f32.mrf.mxu0
        %867 = vmatprep.mubr.bf16.mxu0 0
        %868 = vmatmul.mubr.bf16.gmra.mxu0 %v819
        %v869 = vpop.f32.mrf.mxu0
        %v870 = vadd.f32 %v806, %v869
        %v871 = vpop.f32.mrf.mxu0
        %v872 = vpop.f32.mrf.mxu0
        %v873 = vadd.f32 %v806, %v872
        %v874 = vpop.f32.mrf.mxu0
        %875 = vmatprep.mubr.bf16.mxu0 0
        %876 = vmatmul.mubr.bf16.gmra.mxu0 %v822
        %v877 = vpop.f32.mrf.mxu0
        %v878 = vadd.f32 %v806, %v877
        %v879 = vpop.f32.mrf.mxu0
        %v880 = vpop.f32.mrf.mxu0
        %v881 = vadd.f32 %v806, %v880
        %v882 = vpop.f32.mrf.mxu0
        %883 = vmatprep.mubr.bf16.mxu0 0
        %884 = vmatmul.mubr.bf16.gmra.mxu0 %v825
        %v885 = vpop.f32.mrf.mxu0
        %v886 = vadd.f32 %v806, %v885
        %v887 = vpop.f32.mrf.mxu0
        %v888 = vpop.f32.mrf.mxu0
        %v889 = vadd.f32 %v806, %v888
        %v890 = vpop.f32.mrf.mxu0
        %891 = vdwg.mxu0
        %v892 = vxor.u32 %v862, 2147483648
        %v893 = vxor.u32 %v865, 2147483648
        %v894 = vxor.u32 %v870, 2147483648
        %v895 = vxor.u32 %v873, 2147483648
        %v896 = vxor.u32 %v878, 2147483648
        %v897 = vxor.u32 %v881, 2147483648
        %v898 = vxor.u32 %v886, 2147483648
        %v899 = vxor.u32 %v889, 2147483648
        %v900 = vmul.f32 %v892, 1.442695
        %v901 = vpow.pop %v900
        %v902 = vmul.f32 %v893, 1.442695
        %v903 = vpow.pop %v902
        %v904 = vmul.f32 %v894, 1.442695
        %v905 = vpow.pop %v904
        %v906 = vmul.f32 %v895, 1.442695
        %v907 = vpow.pop %v906
        %v908 = vmul.f32 %v896, 1.442695
        %v909 = vpow.pop %v908
        %v910 = vmul.f32 %v897, 1.442695
        %v911 = vpow.pop %v910
        %v912 = vmul.f32 %v898, 1.442695
        %v913 = vpow.pop %v912
        %v914 = vmul.f32 %v899, 1.442695
        %v915 = vpow.pop %v914
        %v916 = vadd.f32 %v901, 1.0
        %v917 = vadd.f32 %v903, 1.0
        %v918 = vadd.f32 %v905, 1.0
        %v919 = vadd.f32 %v907, 1.0
        %v920 = vadd.f32 %v909, 1.0
        %v921 = vadd.f32 %v911, 1.0
        %v922 = vadd.f32 %v913, 1.0
        %v923 = vadd.f32 %v915, 1.0
        %v924 = vrcp.pop %v916
        %v925 = vmul.f32 1.0, %v924
        %v926 = vrcp.pop %v917
        %v927 = vmul.f32 1.0, %v926
        %v928 = vrcp.pop %v918
        %v929 = vmul.f32 1.0, %v928
        %v930 = vrcp.pop %v919
        %v931 = vmul.f32 1.0, %v930
        %v932 = vrcp.pop %v920
        %v933 = vmul.f32 1.0, %v932
        %v934 = vrcp.pop %v921
        %v935 = vmul.f32 1.0, %v934
        %v936 = vrcp.pop %v922
        %v937 = vmul.f32 1.0, %v936
        %v938 = vrcp.pop %v923
        %v939 = vmul.f32 1.0, %v938
        %v940 = vmul.f32 %v862, %v925
        %v941 = vmul.f32 %v865, %v927
        %v942 = vmul.f32 %v870, %v929
        %v943 = vmul.f32 %v873, %v931
        %v944 = vmul.f32 %v878, %v933
        %v945 = vmul.f32 %v881, %v935
        %v946 = vmul.f32 %v886, %v937
        %v947 = vmul.f32 %v889, %v939
        %vm948 = vcmask 125952
        %949 = vst.msk [vmem:[#allocation2] sm:$0xf] %vm948, 0
        %vm950 = vcmask 122880
        %951 = vst.msk [vmem:[#allocation2 + $0x4] sm:$0x1] %vm950, 0
        %952 = vst.msk [vmem:[#allocation2 + $0x8] sm:$0xf] %vm948, 0
        %953 = vst.msk [vmem:[#allocation2 + $0xc] sm:$0x1] %vm950, 0
        %954 = vst.msk [vmem:[#allocation2 + $0x10] sm:$0xf] %vm948, 0
        %955 = vst.msk [vmem:[#allocation2 + $0x14] sm:$0x1] %vm950, 0
        %956 = vst.msk [vmem:[#allocation2 + $0x18] sm:$0xf] %vm948, 0
        %957 = vst.msk [vmem:[#allocation2 + $0x1c] sm:$0x1] %vm950, 0
        %958 = vst.msk [vmem:[#allocation2 + $0x20] sm:$0xf] %vm948, 0
        %959 = vst.msk [vmem:[#allocation2 + $0x24] sm:$0x1] %vm950, 0
        %960 = vst.msk [vmem:[#allocation2 + $0x28] sm:$0xf] %vm948, 0
        %961 = vst.msk [vmem:[#allocation2 + $0x2c] sm:$0x1] %vm950, 0
        %962 = vst.msk [vmem:[#allocation2 + $0x30] sm:$0xf] %vm948, 0
        %963 = vst.msk [vmem:[#allocation2 + $0x34] sm:$0x1] %vm950, 0
        %964 = vst.msk [vmem:[#allocation2 + $0x38] sm:$0xf] %vm948, 0
        %965 = vst.msk [vmem:[#allocation2 + $0x3c] sm:$0x1] %vm950, 0
        %966 = vst.msk [vmem:[#allocation2 + $0x40] sm:$0xf] %vm948, 0
        %967 = vst.msk [vmem:[#allocation2 + $0x44] sm:$0x1] %vm950, 0
        %968 = vst.msk [vmem:[#allocation2 + $0x48] sm:$0xf] %vm948, 0
        %969 = vst.msk [vmem:[#allocation2 + $0x4c] sm:$0x1] %vm950, 0
        %v970 = vpack.c.bf16 %v940, %v940
        %v971 = vpack.c.bf16 %v941, %v941
        %v972 = vpack.c.bf16 %v942, %v942
        %v973 = vpack.c.bf16 %v943, %v943
        %v974 = vpack.c.bf16 %v944, %v944
        %v975 = vpack.c.bf16 %v945, %v945
        %v976 = vpack.c.bf16 %v946, %v946
        %v977 = vpack.c.bf16 %v947, %v947
        %v986 = vunpack.c.l.b16 %v970
        %v987 = vunpack.c.l.b16 %v971
        %v988 = vunpack.c.l.b16 %v972
        %v989 = vunpack.c.l.b16 %v973
        %v990 = vunpack.c.l.b16 %v974
        %v991 = vunpack.c.l.b16 %v975
        %v992 = vunpack.c.l.b16 %v976
        %v993 = vunpack.c.l.b16 %v977
        %v994 = vpack.c.b16 %v986, %v986
        %v995 = vpack.c.b16 %v987, %v987
        %v996 = vpack.c.b16 %v988, %v988
        %v997 = vpack.c.b16 %v989, %v989
        %v998 = vpack.c.b16 %v990, %v990
        %v999 = vpack.c.b16 %v991, %v991
        %v1000 = vpack.c.b16 %v992, %v992
        %v1001 = vpack.c.b16 %v993, %v993
        %v1003 = vshrl.u32 %v994, 16
        %v1005 = vrot.slane %v1003, 7
        %v1006 = vshll.u32 %v994, 16
        %v1008 = vor.u32 %v1005, %v1006
        %v1009 = vrot.slane %v1005, 4
        %v1011 = vshrl.u32 %v995, 16
        %v1013 = vrot.slane %v1011, 7
        %v1014 = vshll.u32 %v995, 16
        %v1016 = vor.u32 %v1013, %v1014
        %v1017 = vrot.slane %v1013, 4
        %v1019 = vshrl.u32 %v996, 16
        %v1021 = vrot.slane %v1019, 7
        %v1022 = vshll.u32 %v996, 16
        %v1024 = vor.u32 %v1021, %v1022
        %v1025 = vrot.slane %v1021, 4
        %v1027 = vshrl.u32 %v997, 16
        %v1029 = vrot.slane %v1027, 7
        %v1030 = vshll.u32 %v997, 16
        %v1032 = vor.u32 %v1029, %v1030
        %v1033 = vrot.slane %v1029, 4
        %v1035 = vshrl.u32 %v998, 16
        %v1037 = vrot.slane %v1035, 7
        %v1038 = vshll.u32 %v998, 16
        %v1040 = vor.u32 %v1037, %v1038
        %v1041 = vrot.slane %v1037, 4
        %v1043 = vshrl.u32 %v999, 16
        %v1045 = vrot.slane %v1043, 7
        %v1046 = vshll.u32 %v999, 16
        %v1048 = vor.u32 %v1045, %v1046
        %v1049 = vrot.slane %v1045, 4
        %v1051 = vshrl.u32 %v1000, 16
        %v1053 = vrot.slane %v1051, 7
        %v1054 = vshll.u32 %v1000, 16
        %v1056 = vor.u32 %v1053, %v1054
        %v1057 = vrot.slane %v1053, 4
        %v1059 = vshrl.u32 %v1001, 16
        %v1061 = vrot.slane %v1059, 7
        %v1062 = vshll.u32 %v1001, 16
        %v1064 = vor.u32 %v1061, %v1062
        %v1065 = vrot.slane %v1061, 4
        %s1082 = scalar_lea.vmem [#allocation2], 8
        %vm1083 = vcmask 125952
        %vm1084 = vsmask.f32 7938
        %vm1085 = vmand %vm1083, %vm1084
        %v1086 = vld [vmem:[%s1082] sm:$0xf]
        %v1087 = vsel %vm1085, %v1008, %v1086
        %1088 = vst [vmem:[%s1082] sm:$0xf] %v1087
        %vm1089 = vcmask 122880
        %vm1090 = vsmask.f32 256
        %vm1091 = vmand %vm1089, %vm1090
        %v1092 = vld [vmem:[%s1082 + $0x4] sm:$0x1]
        %v1093 = vsel %vm1091, %v1009, %v1092
        %1094 = vst [vmem:[%s1082 + $0x4] sm:$0x1] %v1093
        %v1095 = vld [vmem:[%s1082 + $0x8] sm:$0xf]
        %v1096 = vsel %vm1085, %v1016, %v1095
        %1097 = vst [vmem:[%s1082 + $0x8] sm:$0xf] %v1096
        %v1098 = vld [vmem:[%s1082 + $0xc] sm:$0x1]
        %v1099 = vsel %vm1091, %v1017, %v1098
        %1100 = vst [vmem:[%s1082 + $0xc] sm:$0x1] %v1099
        %v1101 = vld [vmem:[%s1082 + $0x10] sm:$0xf]
        %v1102 = vsel %vm1085, %v1024, %v1101
        %1103 = vst [vmem:[%s1082 + $0x10] sm:$0xf] %v1102
        %v1104 = vld [vmem:[%s1082 + $0x14] sm:$0x1]
        %v1105 = vsel %vm1091, %v1025, %v1104
        %1106 = vst [vmem:[%s1082 + $0x14] sm:$0x1] %v1105
        %v1107 = vld [vmem:[%s1082 + $0x18] sm:$0xf]
        %v1108 = vsel %vm1085, %v1032, %v1107
        %1109 = vst [vmem:[%s1082 + $0x18] sm:$0xf] %v1108
        %v1110 = vld [vmem:[%s1082 + $0x1c] sm:$0x1]
        %v1111 = vsel %vm1091, %v1033, %v1110
        %1112 = vst [vmem:[%s1082 + $0x1c] sm:$0x1] %v1111
        %v1113 = vld [vmem:[%s1082 + $0x20] sm:$0xf]
        %v1114 = vsel %vm1085, %v1040, %v1113
        %1115 = vst [vmem:[%s1082 + $0x20] sm:$0xf] %v1114
        %v1116 = vld [vmem:[%s1082 + $0x24] sm:$0x1]
        %v1117 = vsel %vm1091, %v1041, %v1116
        %1118 = vst [vmem:[%s1082 + $0x24] sm:$0x1] %v1117
        %v1119 = vld [vmem:[%s1082 + $0x28] sm:$0xf]
        %v1120 = vsel %vm1085, %v1048, %v1119
        %1121 = vst [vmem:[%s1082 + $0x28] sm:$0xf] %v1120
        %v1122 = vld [vmem:[%s1082 + $0x2c] sm:$0x1]
        %v1123 = vsel %vm1091, %v1049, %v1122
        %1124 = vst [vmem:[%s1082 + $0x2c] sm:$0x1] %v1123
        %v1125 = vld [vmem:[%s1082 + $0x30] sm:$0xf]
        %v1126 = vsel %vm1085, %v1056, %v1125
        %1127 = vst [vmem:[%s1082 + $0x30] sm:$0xf] %v1126
        %v1128 = vld [vmem:[%s1082 + $0x34] sm:$0x1]
        %v1129 = vsel %vm1091, %v1057, %v1128
        %1130 = vst [vmem:[%s1082 + $0x34] sm:$0x1] %v1129
        %v1131 = vld [vmem:[%s1082 + $0x38] sm:$0xf]
        %v1132 = vsel %vm1085, %v1064, %v1131
        %1133 = vst [vmem:[%s1082 + $0x38] sm:$0xf] %v1132
        %v1134 = vld [vmem:[%s1082 + $0x3c] sm:$0x1]
        %v1135 = vsel %vm1091, %v1065, %v1134
        %1136 = vst [vmem:[%s1082 + $0x3c] sm:$0x1] %v1135
        %v1137 = vld [vmem:[#allocation2] sm:$0xf]
        %v1138 = vld [vmem:[#allocation2 + $0x8] sm:$0xf]
        %v1139 = vld [vmem:[#allocation2 + $0x10] sm:$0xf]
        %v1140 = vld [vmem:[#allocation2 + $0x18] sm:$0xf]
        %v1141 = vld [vmem:[#allocation2 + $0x20] sm:$0xf]
        %v1142 = vld [vmem:[#allocation2 + $0x28] sm:$0xf]
        %v1143 = vld [vmem:[#allocation2 + $0x30] sm:$0xf]
        %v1144 = vld [vmem:[#allocation2 + $0x38] sm:$0xf]
        %v1145 = vld [vmem:[#allocation2 + $0x4] sm:$0x1]
        %v1146 = vld [vmem:[#allocation2 + $0xc] sm:$0x1]
        %v1147 = vld [vmem:[#allocation2 + $0x14] sm:$0x1]
        %v1148 = vld [vmem:[#allocation2 + $0x1c] sm:$0x1]
        %v1149 = vld [vmem:[#allocation2 + $0x24] sm:$0x1]
        %v1150 = vld [vmem:[#allocation2 + $0x2c] sm:$0x1]
        %v1151 = vld [vmem:[#allocation2 + $0x34] sm:$0x1]
        %v1152 = vld [vmem:[#allocation2 + $0x3c] sm:$0x1]
        %vm1153 = vsmask.f32 3328
        %vm1154 = vsmask.f32 7440
        %vm1155 = vmor %vm1153, %vm1154
        %v1157 = vshrl.u32 %v1137, 16
        %v1159 = vrot.slane %v1157, 4
        %v1160 = vshll.u32 %v1137, 16
        %v1162 = vrot.slane %v1160, 5
        %v1163 = vor.u32 %v1159, %v1162
        %v1164 = vrot.slane %v1163, 4
        %v1166 = vshll.u32 %v1145, 16
        %v1168 = vrot.slane %v1166, 5
        %v1169 = vsel %vm1155, %v1164, %v1168
        %v1171 = vshrl.u32 %v1138, 16
        %v1173 = vrot.slane %v1171, 4
        %v1174 = vshll.u32 %v1138, 16
        %v1176 = vrot.slane %v1174, 5
        %v1177 = vor.u32 %v1173, %v1176
        %v1178 = vrot.slane %v1177, 4
        %v1180 = vshll.u32 %v1146, 16
        %v1182 = vrot.slane %v1180, 5
        %v1183 = vsel %vm1155, %v1178, %v1182
        %v1185 = vshrl.u32 %v1139, 16
        %v1187 = vrot.slane %v1185, 4
        %v1188 = vshll.u32 %v1139, 16
        %v1190 = vrot.slane %v1188, 5
        %v1191 = vor.u32 %v1187, %v1190
        %v1192 = vrot.slane %v1191, 4
        %v1194 = vshll.u32 %v1147, 16
        %v1196 = vrot.slane %v1194, 5
        %v1197 = vsel %vm1155, %v1192, %v1196
        %v1199 = vshrl.u32 %v1140, 16
        %v1201 = vrot.slane %v1199, 4
        %v1202 = vshll.u32 %v1140, 16
        %v1204 = vrot.slane %v1202, 5
        %v1205 = vor.u32 %v1201, %v1204
        %v1206 = vrot.slane %v1205, 4
        %v1208 = vshll.u32 %v1148, 16
        %v1210 = vrot.slane %v1208, 5
        %v1211 = vsel %vm1155, %v1206, %v1210
        %v1213 = vshrl.u32 %v1141, 16
        %v1215 = vrot.slane %v1213, 4
        %v1216 = vshll.u32 %v1141, 16
        %v1218 = vrot.slane %v1216, 5
        %v1219 = vor.u32 %v1215, %v1218
        %v1220 = vrot.slane %v1219, 4
        %v1222 = vshll.u32 %v1149, 16
        %v1224 = vrot.slane %v1222, 5
        %v1225 = vsel %vm1155, %v1220, %v1224
        %v1227 = vshrl.u32 %v1142, 16
        %v1229 = vrot.slane %v1227, 4
        %v1230 = vshll.u32 %v1142, 16
        %v1232 = vrot.slane %v1230, 5
        %v1233 = vor.u32 %v1229, %v1232
        %v1234 = vrot.slane %v1233, 4
        %v1236 = vshll.u32 %v1150, 16
        %v1238 = vrot.slane %v1236, 5
        %v1239 = vsel %vm1155, %v1234, %v1238
        %v1241 = vshrl.u32 %v1143, 16
        %v1243 = vrot.slane %v1241, 4
        %v1244 = vshll.u32 %v1143, 16
        %v1246 = vrot.slane %v1244, 5
        %v1247 = vor.u32 %v1243, %v1246
        %v1248 = vrot.slane %v1247, 4
        %v1250 = vshll.u32 %v1151, 16
        %v1252 = vrot.slane %v1250, 5
        %v1253 = vsel %vm1155, %v1248, %v1252
        %v1255 = vshrl.u32 %v1144, 16
        %v1257 = vrot.slane %v1255, 4
        %v1258 = vshll.u32 %v1144, 16
        %v1260 = vrot.slane %v1258, 5
        %v1261 = vor.u32 %v1257, %v1260
        %v1262 = vrot.slane %v1261, 4
        %v1264 = vshll.u32 %v1152, 16
        %v1266 = vrot.slane %v1264, 5
        %v1267 = vsel %vm1155, %v1262, %v1266
        %v1268 = vld [vmem:[#allocation2] sm:$0xe]
        %v1269 = vld [vmem:[#allocation2 + $0x8] sm:$0xe]
        %v1270 = vld [vmem:[#allocation2 + $0x10] sm:$0xe]
        %v1271 = vld [vmem:[#allocation2 + $0x18] sm:$0xe]
        %v1272 = vld [vmem:[#allocation2 + $0x20] sm:$0xe]
        %v1273 = vld [vmem:[#allocation2 + $0x28] sm:$0xe]
        %v1274 = vld [vmem:[#allocation2 + $0x30] sm:$0xe]
        %v1275 = vld [vmem:[#allocation2 + $0x38] sm:$0xe]
        %vm1292 = vcmask 1042432
        %vm1293 = vcmask 1046532
        %vm1294 = vmor %vm1292, %vm1293
        %v1295 = vrot.slane %v1268, 5
        %v1296 = vrot.slane %v1295, 4
        %v1297 = vrot.slane %v1145, 5
        %v1298 = vsel %vm1294, %v1296, %v1297
        %v1299 = vrot.slane %v1269, 5
        %v1300 = vrot.slane %v1299, 4
        %v1301 = vrot.slane %v1146, 5
        %v1302 = vsel %vm1294, %v1300, %v1301
        %v1303 = vrot.slane %v1270, 5
        %v1304 = vrot.slane %v1303, 4
        %v1305 = vrot.slane %v1147, 5
        %v1306 = vsel %vm1294, %v1304, %v1305
        %v1307 = vrot.slane %v1271, 5
        %v1308 = vrot.slane %v1307, 4
        %v1309 = vrot.slane %v1148, 5
        %v1310 = vsel %vm1294, %v1308, %v1309
        %v1311 = vrot.slane %v1272, 5
        %v1312 = vrot.slane %v1311, 4
        %v1313 = vrot.slane %v1149, 5
        %v1314 = vsel %vm1294, %v1312, %v1313
        %v1315 = vrot.slane %v1273, 5
        %v1316 = vrot.slane %v1315, 4
        %v1317 = vrot.slane %v1150, 5
        %v1318 = vsel %vm1294, %v1316, %v1317
        %v1319 = vrot.slane %v1274, 5
        %v1320 = vrot.slane %v1319, 4
        %v1321 = vrot.slane %v1151, 5
        %v1322 = vsel %vm1294, %v1320, %v1321
        %v1323 = vrot.slane %v1275, 5
        %v1324 = vrot.slane %v1323, 4
        %v1325 = vrot.slane %v1152, 5
        %v1326 = vsel %vm1294, %v1324, %v1325
        %v1327 = vld [vmem:[%s1082] sm:$0xf]
        %v1328 = vld [vmem:[%s1082 + $0x8] sm:$0xf]
        %v1329 = vld [vmem:[%s1082 + $0x10] sm:$0xf]
        %v1330 = vld [vmem:[%s1082 + $0x18] sm:$0xf]
        %v1331 = vld [vmem:[%s1082 + $0x20] sm:$0xf]
        %v1332 = vld [vmem:[%s1082 + $0x28] sm:$0xf]
        %v1333 = vld [vmem:[%s1082 + $0x30] sm:$0xf]
        %v1334 = vld [vmem:[%s1082 + $0x38] sm:$0xf]
        %v1335 = vld [vmem:[%s1082 + $0x4] sm:$0x1]
        %v1336 = vld [vmem:[%s1082 + $0xc] sm:$0x1]
        %v1337 = vld [vmem:[%s1082 + $0x14] sm:$0x1]
        %v1338 = vld [vmem:[%s1082 + $0x1c] sm:$0x1]
        %v1339 = vld [vmem:[%s1082 + $0x24] sm:$0x1]
        %v1340 = vld [vmem:[%s1082 + $0x2c] sm:$0x1]
        %v1341 = vld [vmem:[%s1082 + $0x34] sm:$0x1]
        %v1342 = vld [vmem:[%s1082 + $0x3c] sm:$0x1]
        %v1344 = vshrl.u32 %v1327, 16
        %v1346 = vrot.slane %v1344, 4
        %v1347 = vshll.u32 %v1327, 16
        %v1349 = vrot.slane %v1347, 5
        %v1350 = vor.u32 %v1346, %v1349
        %v1351 = vrot.slane %v1350, 4
        %v1353 = vshll.u32 %v1335, 16
        %v1355 = vrot.slane %v1353, 5
        %v1356 = vsel %vm1155, %v1351, %v1355
        %v1358 = vshrl.u32 %v1328, 16
        %v1360 = vrot.slane %v1358, 4
        %v1361 = vshll.u32 %v1328, 16
        %v1363 = vrot.slane %v1361, 5
        %v1364 = vor.u32 %v1360, %v1363
        %v1365 = vrot.slane %v1364, 4
        %v1367 = vshll.u32 %v1336, 16
        %v1369 = vrot.slane %v1367, 5
        %v1370 = vsel %vm1155, %v1365, %v1369
        %v1372 = vshrl.u32 %v1329, 16
        %v1374 = vrot.slane %v1372, 4
        %v1375 = vshll.u32 %v1329, 16
        %v1377 = vrot.slane %v1375, 5
        %v1378 = vor.u32 %v1374, %v1377
        %v1379 = vrot.slane %v1378, 4
        %v1381 = vshll.u32 %v1337, 16
        %v1383 = vrot.slane %v1381, 5
        %v1384 = vsel %vm1155, %v1379, %v1383
        %v1386 = vshrl.u32 %v1330, 16
        %v1388 = vrot.slane %v1386, 4
        %v1389 = vshll.u32 %v1330, 16
        %v1391 = vrot.slane %v1389, 5
        %v1392 = vor.u32 %v1388, %v1391
        %v1393 = vrot.slane %v1392, 4
        %v1395 = vshll.u32 %v1338, 16
        %v1397 = vrot.slane %v1395, 5
        %v1398 = vsel %vm1155, %v1393, %v1397
        %v1400 = vshrl.u32 %v1331, 16
        %v1402 = vrot.slane %v1400, 4
        %v1403 = vshll.u32 %v1331, 16
        %v1405 = vrot.slane %v1403, 5
        %v1406 = vor.u32 %v1402, %v1405
        %v1407 = vrot.slane %v1406, 4
        %v1409 = vshll.u32 %v1339, 16
        %v1411 = vrot.slane %v1409, 5
        %v1412 = vsel %vm1155, %v1407, %v1411
        %v1414 = vshrl.u32 %v1332, 16
        %v1416 = vrot.slane %v1414, 4
        %v1417 = vshll.u32 %v1332, 16
        %v1419 = vrot.slane %v1417, 5
        %v1420 = vor.u32 %v1416, %v1419
        %v1421 = vrot.slane %v1420, 4
        %v1423 = vshll.u32 %v1340, 16
        %v1425 = vrot.slane %v1423, 5
        %v1426 = vsel %vm1155, %v1421, %v1425
        %v1428 = vshrl.u32 %v1333, 16
        %v1430 = vrot.slane %v1428, 4
        %v1431 = vshll.u32 %v1333, 16
        %v1433 = vrot.slane %v1431, 5
        %v1434 = vor.u32 %v1430, %v1433
        %v1435 = vrot.slane %v1434, 4
        %v1437 = vshll.u32 %v1341, 16
        %v1439 = vrot.slane %v1437, 5
        %v1440 = vsel %vm1155, %v1435, %v1439
        %v1442 = vshrl.u32 %v1334, 16
        %v1444 = vrot.slane %v1442, 4
        %v1445 = vshll.u32 %v1334, 16
        %v1447 = vrot.slane %v1445, 5
        %v1448 = vor.u32 %v1444, %v1447
        %v1449 = vrot.slane %v1448, 4
        %v1451 = vshll.u32 %v1342, 16
        %v1453 = vrot.slane %v1451, 5
        %v1454 = vsel %vm1155, %v1449, %v1453
        %v1455 = vld [vmem:[%s1082] sm:$0xe]
        %v1456 = vld [vmem:[%s1082 + $0x8] sm:$0xe]
        %v1457 = vld [vmem:[%s1082 + $0x10] sm:$0xe]
        %v1458 = vld [vmem:[%s1082 + $0x18] sm:$0xe]
        %v1459 = vld [vmem:[%s1082 + $0x20] sm:$0xe]
        %v1460 = vld [vmem:[%s1082 + $0x28] sm:$0xe]
        %v1461 = vld [vmem:[%s1082 + $0x30] sm:$0xe]
        %v1462 = vld [vmem:[%s1082 + $0x38] sm:$0xe]
        %v1479 = vrot.slane %v1455, 5
        %v1480 = vrot.slane %v1479, 4
        %v1481 = vrot.slane %v1335, 5
        %v1482 = vsel %vm1294, %v1480, %v1481
        %v1483 = vrot.slane %v1456, 5
        %v1484 = vrot.slane %v1483, 4
        %v1485 = vrot.slane %v1336, 5
        %v1486 = vsel %vm1294, %v1484, %v1485
        %v1487 = vrot.slane %v1457, 5
        %v1488 = vrot.slane %v1487, 4
        %v1489 = vrot.slane %v1337, 5
        %v1490 = vsel %vm1294, %v1488, %v1489
        %v1491 = vrot.slane %v1458, 5
        %v1492 = vrot.slane %v1491, 4
        %v1493 = vrot.slane %v1338, 5
        %v1494 = vsel %vm1294, %v1492, %v1493
        %v1495 = vrot.slane %v1459, 5
        %v1496 = vrot.slane %v1495, 4
        %v1497 = vrot.slane %v1339, 5
        %v1498 = vsel %vm1294, %v1496, %v1497
        %v1499 = vrot.slane %v1460, 5
        %v1500 = vrot.slane %v1499, 4
        %v1501 = vrot.slane %v1340, 5
        %v1502 = vsel %vm1294, %v1500, %v1501
        %v1503 = vrot.slane %v1461, 5
        %v1504 = vrot.slane %v1503, 4
        %v1505 = vrot.slane %v1341, 5
        %v1506 = vsel %vm1294, %v1504, %v1505
        %v1507 = vrot.slane %v1462, 5
        %v1508 = vrot.slane %v1507, 4
        %v1509 = vrot.slane %v1342, 5
        %v1510 = vsel %vm1294, %v1508, %v1509
        %s1511 = scalar_lea.vmem [#allocation2], 16
        %v1512 = vld [vmem:[%s1511] sm:$0xf]
        %v1513 = vld [vmem:[%s1511 + $0x8] sm:$0xf]
        %v1514 = vld [vmem:[%s1511 + $0x10] sm:$0xf]
        %v1515 = vld [vmem:[%s1511 + $0x18] sm:$0xf]
        %v1516 = vld [vmem:[%s1511 + $0x20] sm:$0xf]
        %v1517 = vld [vmem:[%s1511 + $0x28] sm:$0xf]
        %v1518 = vld [vmem:[%s1511 + $0x30] sm:$0xf]
        %v1519 = vld [vmem:[%s1511 + $0x38] sm:$0xf]
        %v1520 = vld [vmem:[%s1511 + $0x4] sm:$0x1]
        %v1521 = vld [vmem:[%s1511 + $0xc] sm:$0x1]
        %v1522 = vld [vmem:[%s1511 + $0x14] sm:$0x1]
        %v1523 = vld [vmem:[%s1511 + $0x1c] sm:$0x1]
        %v1524 = vld [vmem:[%s1511 + $0x24] sm:$0x1]
        %v1525 = vld [vmem:[%s1511 + $0x2c] sm:$0x1]
        %v1526 = vld [vmem:[%s1511 + $0x34] sm:$0x1]
        %v1527 = vld [vmem:[%s1511 + $0x3c] sm:$0x1]
        %v1529 = vshrl.u32 %v1512, 16
        %v1531 = vrot.slane %v1529, 4
        %v1532 = vshll.u32 %v1512, 16
        %v1534 = vrot.slane %v1532, 5
        %v1535 = vor.u32 %v1531, %v1534
        %v1536 = vrot.slane %v1535, 4
        %v1538 = vshll.u32 %v1520, 16
        %v1540 = vrot.slane %v1538, 5
        %v1541 = vsel %vm1155, %v1536, %v1540
        %v1543 = vshrl.u32 %v1513, 16
        %v1545 = vrot.slane %v1543, 4
        %v1546 = vshll.u32 %v1513, 16
        %v1548 = vrot.slane %v1546, 5
        %v1549 = vor.u32 %v1545, %v1548
        %v1550 = vrot.slane %v1549, 4
        %v1552 = vshll.u32 %v1521, 16
        %v1554 = vrot.slane %v1552, 5
        %v1555 = vsel %vm1155, %v1550, %v1554
        %v1557 = vshrl.u32 %v1514, 16
        %v1559 = vrot.slane %v1557, 4
        %v1560 = vshll.u32 %v1514, 16
        %v1562 = vrot.slane %v1560, 5
        %v1563 = vor.u32 %v1559, %v1562
        %v1564 = vrot.slane %v1563, 4
        %v1566 = vshll.u32 %v1522, 16
        %v1568 = vrot.slane %v1566, 5
        %v1569 = vsel %vm1155, %v1564, %v1568
        %v1571 = vshrl.u32 %v1515, 16
        %v1573 = vrot.slane %v1571, 4
        %v1574 = vshll.u32 %v1515, 16
        %v1576 = vrot.slane %v1574, 5
        %v1577 = vor.u32 %v1573, %v1576
        %v1578 = vrot.slane %v1577, 4
        %v1580 = vshll.u32 %v1523, 16
        %v1582 = vrot.slane %v1580, 5
        %v1583 = vsel %vm1155, %v1578, %v1582
        %v1585 = vshrl.u32 %v1516, 16
        %v1587 = vrot.slane %v1585, 4
        %v1588 = vshll.u32 %v1516, 16
        %v1590 = vrot.slane %v1588, 5
        %v1591 = vor.u32 %v1587, %v1590
        %v1592 = vrot.slane %v1591, 4
        %v1594 = vshll.u32 %v1524, 16
        %v1596 = vrot.slane %v1594, 5
        %v1597 = vsel %vm1155, %v1592, %v1596
        %v1599 = vshrl.u32 %v1517, 16
        %v1601 = vrot.slane %v1599, 4
        %v1602 = vshll.u32 %v1517, 16
        %v1604 = vrot.slane %v1602, 5
        %v1605 = vor.u32 %v1601, %v1604
        %v1606 = vrot.slane %v1605, 4
        %v1608 = vshll.u32 %v1525, 16
        %v1610 = vrot.slane %v1608, 5
        %v1611 = vsel %vm1155, %v1606, %v1610
        %v1613 = vshrl.u32 %v1518, 16
        %v1615 = vrot.slane %v1613, 4
        %v1616 = vshll.u32 %v1518, 16
        %v1618 = vrot.slane %v1616, 5
        %v1619 = vor.u32 %v1615, %v1618
        %v1620 = vrot.slane %v1619, 4
        %v1622 = vshll.u32 %v1526, 16
        %v1624 = vrot.slane %v1622, 5
        %v1625 = vsel %vm1155, %v1620, %v1624
        %v1627 = vshrl.u32 %v1519, 16
        %v1629 = vrot.slane %v1627, 4
        %v1630 = vshll.u32 %v1519, 16
        %v1632 = vrot.slane %v1630, 5
        %v1633 = vor.u32 %v1629, %v1632
        %v1634 = vrot.slane %v1633, 4
        %v1636 = vshll.u32 %v1527, 16
        %v1638 = vrot.slane %v1636, 5
        %v1639 = vsel %vm1155, %v1634, %v1638
        %v1640 = vld [vmem:[%s1511] sm:$0xe]
        %v1641 = vld [vmem:[%s1511 + $0x8] sm:$0xe]
        %v1642 = vld [vmem:[%s1511 + $0x10] sm:$0xe]
        %v1643 = vld [vmem:[%s1511 + $0x18] sm:$0xe]
        %v1644 = vld [vmem:[%s1511 + $0x20] sm:$0xe]
        %v1645 = vld [vmem:[%s1511 + $0x28] sm:$0xe]
        %v1646 = vld [vmem:[%s1511 + $0x30] sm:$0xe]
        %v1647 = vld [vmem:[%s1511 + $0x38] sm:$0xe]
        %v1664 = vrot.slane %v1640, 5
        %v1665 = vrot.slane %v1664, 4
        %v1666 = vrot.slane %v1520, 5
        %v1667 = vsel %vm1294, %v1665, %v1666
        %v1668 = vrot.slane %v1641, 5
        %v1669 = vrot.slane %v1668, 4
        %v1670 = vrot.slane %v1521, 5
        %v1671 = vsel %vm1294, %v1669, %v1670
        %v1672 = vrot.slane %v1642, 5
        %v1673 = vrot.slane %v1672, 4
        %v1674 = vrot.slane %v1522, 5
        %v1675 = vsel %vm1294, %v1673, %v1674
        %v1676 = vrot.slane %v1643, 5
        %v1677 = vrot.slane %v1676, 4
        %v1678 = vrot.slane %v1523, 5
        %v1679 = vsel %vm1294, %v1677, %v1678
        %v1680 = vrot.slane %v1644, 5
        %v1681 = vrot.slane %v1680, 4
        %v1682 = vrot.slane %v1524, 5
        %v1683 = vsel %vm1294, %v1681, %v1682
        %v1684 = vrot.slane %v1645, 5
        %v1685 = vrot.slane %v1684, 4
        %v1686 = vrot.slane %v1525, 5
        %v1687 = vsel %vm1294, %v1685, %v1686
        %v1688 = vrot.slane %v1646, 5
        %v1689 = vrot.slane %v1688, 4
        %v1690 = vrot.slane %v1526, 5
        %v1691 = vsel %vm1294, %v1689, %v1690
        %v1692 = vrot.slane %v1647, 5
        %v1693 = vrot.slane %v1692, 4
        %v1694 = vrot.slane %v1527, 5
        %v1695 = vsel %vm1294, %v1693, %v1694
        %v1704 = vunpack.c.l.b16 %v1137
        %v1705 = vunpack.c.l.b16 %v1138
        %v1706 = vunpack.c.l.b16 %v1139
        %v1707 = vunpack.c.l.b16 %v1140
        %v1708 = vunpack.c.l.b16 %v1141
        %v1709 = vunpack.c.l.b16 %v1142
        %v1710 = vunpack.c.l.b16 %v1143
        %v1711 = vunpack.c.l.b16 %v1144
        %v1712 = vpack.c.b16 %v1705, %v1704
        %v1713 = vpack.c.b16 %v1707, %v1706
        %v1714 = vpack.c.b16 %v1709, %v1708
        %v1715 = vpack.c.b16 %v1711, %v1710
        %v1716 = vunpack.c.l.b16 %v1169
        %v1717 = vunpack.c.l.b16 %v1183
        %v1718 = vunpack.c.l.b16 %v1197
        %v1719 = vunpack.c.l.b16 %v1211
        %v1720 = vunpack.c.l.b16 %v1225
        %v1721 = vunpack.c.l.b16 %v1239
        %v1722 = vunpack.c.l.b16 %v1253
        %v1723 = vunpack.c.l.b16 %v1267
        %v1724 = vpack.c.b16 %v1717, %v1716
        %v1725 = vpack.c.b16 %v1719, %v1718
        %v1726 = vpack.c.b16 %v1721, %v1720
        %v1727 = vpack.c.b16 %v1723, %v1722
        %1728 = vrot.lane.b32.xlu0 %v1724, 16
        %v1729 = vpop.permute.xlu0 %1728
        %1730 = vrot.lane.b32.xlu0 %v1725, 16
        %v1731 = vpop.permute.xlu0 %1730
        %1732 = vrot.lane.b32.xlu0 %v1726, 16
        %v1733 = vpop.permute.xlu0 %1732
        %1734 = vrot.lane.b32.xlu0 %v1727, 16
        %v1735 = vpop.permute.xlu0 %1734
        %v1736 = vunpack.c.l.b16 %v1298
        %v1737 = vunpack.c.l.b16 %v1302
        %v1738 = vunpack.c.l.b16 %v1306
        %v1739 = vunpack.c.l.b16 %v1310
        %v1740 = vunpack.c.l.b16 %v1314
        %v1741 = vunpack.c.l.b16 %v1318
        %v1742 = vunpack.c.l.b16 %v1322
        %v1743 = vunpack.c.l.b16 %v1326
        %v1744 = vpack.c.b16 %v1737, %v1736
        %v1745 = vpack.c.b16 %v1739, %v1738
        %v1746 = vpack.c.b16 %v1741, %v1740
        %v1747 = vpack.c.b16 %v1743, %v1742
        %1748 = vrot.lane.b32.xlu0 %v1744, 32
        %v1749 = vpop.permute.xlu0 %1748
        %1750 = vrot.lane.b32.xlu0 %v1745, 32
        %v1751 = vpop.permute.xlu0 %1750
        %1752 = vrot.lane.b32.xlu0 %v1746, 32
        %v1753 = vpop.permute.xlu0 %1752
        %1754 = vrot.lane.b32.xlu0 %v1747, 32
        %v1755 = vpop.permute.xlu0 %1754
        %v1764 = vunpack.c.l.b16 %v1327
        %v1765 = vunpack.c.l.b16 %v1328
        %v1766 = vunpack.c.l.b16 %v1329
        %v1767 = vunpack.c.l.b16 %v1330
        %v1768 = vunpack.c.l.b16 %v1331
        %v1769 = vunpack.c.l.b16 %v1332
        %v1770 = vunpack.c.l.b16 %v1333
        %v1771 = vunpack.c.l.b16 %v1334
        %v1772 = vpack.c.b16 %v1765, %v1764
        %v1773 = vpack.c.b16 %v1767, %v1766
        %v1774 = vpack.c.b16 %v1769, %v1768
        %v1775 = vpack.c.b16 %v1771, %v1770
        %1776 = vrot.lane.b32.xlu0 %v1772, 48
        %v1777 = vpop.permute.xlu0 %1776
        %1778 = vrot.lane.b32.xlu0 %v1773, 48
        %v1779 = vpop.permute.xlu0 %1778
        %1780 = vrot.lane.b32.xlu0 %v1774, 48
        %v1781 = vpop.permute.xlu0 %1780
        %1782 = vrot.lane.b32.xlu0 %v1775, 48
        %v1783 = vpop.permute.xlu0 %1782
        %v1784 = vunpack.c.l.b16 %v1356
        %v1785 = vunpack.c.l.b16 %v1370
        %v1786 = vunpack.c.l.b16 %v1384
        %v1787 = vunpack.c.l.b16 %v1398
        %v1788 = vunpack.c.l.b16 %v1412
        %v1789 = vunpack.c.l.b16 %v1426
        %v1790 = vunpack.c.l.b16 %v1440
        %v1791 = vunpack.c.l.b16 %v1454
        %v1792 = vpack.c.b16 %v1785, %v1784
        %v1793 = vpack.c.b16 %v1787, %v1786
        %v1794 = vpack.c.b16 %v1789, %v1788
        %v1795 = vpack.c.b16 %v1791, %v1790
        %1796 = vrot.lane.b32.xlu0 %v1792, 64
        %v1797 = vpop.permute.xlu0 %1796
        %1798 = vrot.lane.b32.xlu0 %v1793, 64
        %v1799 = vpop.permute.xlu0 %1798
        %1800 = vrot.lane.b32.xlu0 %v1794, 64
        %v1801 = vpop.permute.xlu0 %1800
        %1802 = vrot.lane.b32.xlu0 %v1795, 64
        %v1803 = vpop.permute.xlu0 %1802
        %v1804 = vunpack.c.l.b16 %v1482
        %v1805 = vunpack.c.l.b16 %v1486
        %v1806 = vunpack.c.l.b16 %v1490
        %v1807 = vunpack.c.l.b16 %v1494
        %v1808 = vunpack.c.l.b16 %v1498
        %v1809 = vunpack.c.l.b16 %v1502
        %v1810 = vunpack.c.l.b16 %v1506
        %v1811 = vunpack.c.l.b16 %v1510
        %v1812 = vpack.c.b16 %v1805, %v1804
        %v1813 = vpack.c.b16 %v1807, %v1806
        %v1814 = vpack.c.b16 %v1809, %v1808
        %v1815 = vpack.c.b16 %v1811, %v1810
        %1816 = vrot.lane.b32.xlu0 %v1812, 80
        %v1817 = vpop.permute.xlu0 %1816
        %1818 = vrot.lane.b32.xlu0 %v1813, 80
        %v1819 = vpop.permute.xlu0 %1818
        %1820 = vrot.lane.b32.xlu0 %v1814, 80
        %v1821 = vpop.permute.xlu0 %1820
        %1822 = vrot.lane.b32.xlu0 %v1815, 80
        %v1823 = vpop.permute.xlu0 %1822
        %v1832 = vunpack.c.l.b16 %v1512
        %v1833 = vunpack.c.l.b16 %v1513
        %v1834 = vunpack.c.l.b16 %v1514
        %v1835 = vunpack.c.l.b16 %v1515
        %v1836 = vunpack.c.l.b16 %v1516
        %v1837 = vunpack.c.l.b16 %v1517
        %v1838 = vunpack.c.l.b16 %v1518
        %v1839 = vunpack.c.l.b16 %v1519
        %v1840 = vpack.c.b16 %v1833, %v1832
        %v1841 = vpack.c.b16 %v1835, %v1834
        %v1842 = vpack.c.b16 %v1837, %v1836
        %v1843 = vpack.c.b16 %v1839, %v1838
        %1844 = vrot.lane.b32.xlu0 %v1840, 96
        %v1845 = vpop.permute.xlu0 %1844
        %1846 = vrot.lane.b32.xlu0 %v1841, 96
        %v1847 = vpop.permute.xlu0 %1846
        %1848 = vrot.lane.b32.xlu0 %v1842, 96
        %v1849 = vpop.permute.xlu0 %1848
        %1850 = vrot.lane.b32.xlu0 %v1843, 96
        %v1851 = vpop.permute.xlu0 %1850
        %v1852 = vunpack.c.l.b16 %v1541
        %v1853 = vunpack.c.l.b16 %v1555
        %v1854 = vunpack.c.l.b16 %v1569
        %v1855 = vunpack.c.l.b16 %v1583
        %v1856 = vunpack.c.l.b16 %v1597
        %v1857 = vunpack.c.l.b16 %v1611
        %v1858 = vunpack.c.l.b16 %v1625
        %v1859 = vunpack.c.l.b16 %v1639
        %v1860 = vpack.c.b16 %v1853, %v1852
        %v1861 = vpack.c.b16 %v1855, %v1854
        %v1862 = vpack.c.b16 %v1857, %v1856
        %v1863 = vpack.c.b16 %v1859, %v1858
        %1864 = vrot.lane.b32.xlu0 %v1860, 112
        %v1865 = vpop.permute.xlu0 %1864
        %1866 = vrot.lane.b32.xlu0 %v1861, 112
        %v1867 = vpop.permute.xlu0 %1866
        %1868 = vrot.lane.b32.xlu0 %v1862, 112
        %v1869 = vpop.permute.xlu0 %1868
        %1870 = vrot.lane.b32.xlu0 %v1863, 112
        %v1871 = vpop.permute.xlu0 %1870
        %v1872 = vunpack.c.l.b16 %v1667
        %v1873 = vunpack.c.l.b16 %v1671
        %v1874 = vunpack.c.l.b16 %v1675
        %v1875 = vunpack.c.l.b16 %v1679
        %v1876 = vunpack.c.l.b16 %v1683
        %v1877 = vunpack.c.l.b16 %v1687
        %v1878 = vunpack.c.l.b16 %v1691
        %v1879 = vunpack.c.l.b16 %v1695
        %v1880 = vpack.c.b16 %v1873, %v1872
        %v1881 = vpack.c.b16 %v1875, %v1874
        %v1882 = vpack.c.b16 %v1877, %v1876
        %v1883 = vpack.c.b16 %v1879, %v1878
        %v1886 = vsel %vm814, %v1712, %v1729
        %v1889 = vsel %vm814, %v1713, %v1731
        %v1892 = vsel %vm814, %v1714, %v1733
        %v1895 = vsel %vm814, %v1715, %v1735
        %v1897 = vsel %vm517, %v1886, %v1749
        %v1899 = vsel %vm517, %v1889, %v1751
        %v1901 = vsel %vm517, %v1892, %v1753
        %v1903 = vsel %vm517, %v1895, %v1755
        %vm1904 = vcmask 392192
        %v1906 = vsel %vm1904, %v1897, %v1777
        %v1908 = vsel %vm1904, %v1899, %v1779
        %v1910 = vsel %vm1904, %v1901, %v1781
        %v1912 = vsel %vm1904, %v1903, %v1783
        %vm1913 = vcmask 523264
        %v1915 = vsel %vm1913, %v1906, %v1797
        %v1917 = vsel %vm1913, %v1908, %v1799
        %v1919 = vsel %vm1913, %v1910, %v1801
        %v1921 = vsel %vm1913, %v1912, %v1803
        %vm1922 = vcmask 654336
        %v1924 = vsel %vm1922, %v1915, %v1817
        %v1926 = vsel %vm1922, %v1917, %v1819
        %v1928 = vsel %vm1922, %v1919, %v1821
        %v1930 = vsel %vm1922, %v1921, %v1823
        %vm1931 = vcmask 785408
        %v1933 = vsel %vm1931, %v1924, %v1845
        %v1935 = vsel %vm1931, %v1926, %v1847
        %v1937 = vsel %vm1931, %v1928, %v1849
        %v1939 = vsel %vm1931, %v1930, %v1851
        %vm1940 = vcmask 916480
        %v1942 = vsel %vm1940, %v1933, %v1865
        %v1945 = vsel %vm1940, %v1935, %v1867
        %v1948 = vsel %vm1940, %v1937, %v1869
        %v1951 = vsel %vm1940, %v1939, %v1871
        %v1953 = vld [vmem:[%s7] sm:$0xf]
        %v1954 = vld [vmem:[%s7 + $0x4] sm:$0xf]
        %v1955 = vld [vmem:[%s7 + $0x8] sm:$0xf]
        %v1956 = vld [vmem:[%s7 + $0xc] sm:$0xf]
        %v1957 = vld [vmem:[%s7 + $0x10] sm:$0xf]
        %v1958 = vld [vmem:[%s7 + $0x14] sm:$0xf]
        %v1959 = vld [vmem:[%s7 + $0x18] sm:$0xf]
        %v1960 = vld [vmem:[%s7 + $0x1c] sm:$0xf]
        %v1961 = vld [vmem:[%s7 + $0x20] sm:$0xf]
        %v1962 = vld [vmem:[%s7 + $0x24] sm:$0xf]
        %v1963 = vld [vmem:[%s7 + $0x28] sm:$0xf]
        %v1964 = vld [vmem:[%s7 + $0x2c] sm:$0xf]
        %v1965 = vld [vmem:[%s7 + $0x30] sm:$0xf]
        %v1966 = vld [vmem:[%s7 + $0x34] sm:$0xf]
        %v1967 = vld [vmem:[%s7 + $0x38] sm:$0xf]
        %v1968 = vld [vmem:[%s7 + $0x3c] sm:$0xf]
        %v1969 = vld [vmem:[%s7 + $0x40] sm:$0xf]
        %v1970 = vld [vmem:[%s7 + $0x44] sm:$0xf]
        %v1971 = vld [vmem:[%s8] sm:$0x1]
        %v1973 = vlaneseq
        %v1974 = vshrl.u32 %v1973, 7
        %v1975 = vsub.s32 0, %v1974
        %v1976 = vrot.slane %v1971, %v1975
        %v1996 = vunpack.c.l.b16 %v1953
        %v1997 = vunpack.c.l.b16 %v1954
        %v1998 = vunpack.c.l.b16 %v1955
        %v1999 = vunpack.c.l.b16 %v1956
        %v2000 = vunpack.c.l.b16 %v1957
        %v2001 = vunpack.c.l.b16 %v1958
        %v2002 = vunpack.c.l.b16 %v1959
        %v2003 = vunpack.c.l.b16 %v1960
        %v2004 = vunpack.c.l.b16 %v1961
        %v2005 = vunpack.c.l.b16 %v1962
        %v2006 = vunpack.c.l.b16 %v1963
        %v2007 = vunpack.c.l.b16 %v1964
        %v2008 = vunpack.c.l.b16 %v1965
        %v2009 = vunpack.c.l.b16 %v1966
        %v2010 = vunpack.c.l.b16 %v1967
        %v2011 = vunpack.c.l.b16 %v1968
        %v2012 = vunpack.c.l.b16 %v1969
        %v2013 = vunpack.c.l.b16 %v1970
        %v2014 = vpack.c.b16 %v1997, %v1996
        %v2015 = vpack.c.b16 %v1999, %v1998
        %v2016 = vpack.c.b16 %v2001, %v2000
        %v2017 = vpack.c.b16 %v2003, %v2002
        %v2018 = vpack.c.b16 %v2005, %v2004
        %v2019 = vpack.c.b16 %v2007, %v2006
        %v2020 = vpack.c.b16 %v2009, %v2008
        %v2021 = vpack.c.b16 %v2011, %v2010
        %v2022 = vpack.c.b16 %v2013, %v2012
        %v2033 = vsel %vm814, %v1880, 0
        %v2036 = vsel %vm814, %v1881, 0
        %v2039 = vsel %vm814, %v1882, 0
        %v2042 = vsel %vm814, %v1883, 0
        %2044 = vmatprep.subr.bf16.mxu0 0
        %2045 = vmatpush1.bf16.msra.mxu0 %v2021
        %2046 = vmatprep.subr.bf16.mxu0 0
        %2047 = vmatpush1.bf16.msra.mxu0 %v2020
        %2048 = vmatprep.subr.bf16.mxu0 0
        %2049 = vmatpush1.bf16.msra.mxu0 %v2019
        %2050 = vmatprep.subr.bf16.mxu0 0
        %2051 = vmatpush1.bf16.msra.mxu0 %v2018
        %2052 = vmatprep.subr.bf16.mxu0 0
        %2053 = vmatpush1.bf16.msra.mxu0 %v2017
        %2054 = vmatprep.subr.bf16.mxu0 0
        %2055 = vmatpush1.bf16.msra.mxu0 %v2016
        %2056 = vmatprep.subr.bf16.mxu0 0
        %2057 = vmatpush1.bf16.msra.mxu0 %v2015
        %2058 = vmatprep.subr.bf16.mxu0 0
        %2059 = vmatpush1.bf16.msra.mxu0 %v2014
        %2060 = vmatprep.subr.bf16.mxu0 0
        %2061 = vmatpush2.bf16.msra.mxu0 0
        %2062 = vmatprep.subr.bf16.mxu0 0
        %2063 = vmatpush2.bf16.msra.mxu0 0
        %2064 = vmatprep.subr.bf16.mxu0 0
        %2065 = vmatpush2.bf16.msra.mxu0 0
        %2066 = vmatprep.subr.bf16.mxu0 0
        %2067 = vmatpush2.bf16.msra.mxu0 0
        %2068 = vmatprep.subr.bf16.mxu0 0
        %2069 = vmatpush2.bf16.msra.mxu0 0
        %2070 = vmatprep.subr.bf16.mxu0 0
        %2071 = vmatpush2.bf16.msra.mxu0 0
        %2072 = vmatprep.subr.bf16.mxu0 0
        %2073 = vmatpush2.bf16.msra.mxu0 0
        %2074 = vmatprep.subr.bf16.mxu0 0
        %2075 = vmatpush2.bf16.msra.mxu0 %v2022
        %2076 = vmatprep.mubr.bf16.mxu0 %v2033
        %2077 = vmatmul.mubr.bf16.gmra.mxu0 %v1942
        %v2078 = vpop.f32.mrf.mxu0
        %v2079 = vadd.f32 %v1976, %v2078
        %v2080 = vpop.f32.mrf.mxu0
        %v2081 = vpop.f32.mrf.mxu0
        %v2082 = vadd.f32 %v1976, %v2081
        %v2083 = vpop.f32.mrf.mxu0
        %2084 = vmatprep.mubr.bf16.mxu0 %v2036
        %2085 = vmatmul.mubr.bf16.gmra.mxu0 %v1945
        %v2086 = vpop.f32.mrf.mxu0
        %v2087 = vadd.f32 %v1976, %v2086
        %v2088 = vpop.f32.mrf.mxu0
        %v2089 = vpop.f32.mrf.mxu0
        %v2090 = vadd.f32 %v1976, %v2089
        %v2091 = vpop.f32.mrf.mxu0
        %2092 = vmatprep.mubr.bf16.mxu0 %v2039
        %2093 = vmatmul.mubr.bf16.gmra.mxu0 %v1948
        %v2094 = vpop.f32.mrf.mxu0
        %v2095 = vadd.f32 %v1976, %v2094
        %v2096 = vpop.f32.mrf.mxu0
        %v2097 = vpop.f32.mrf.mxu0
        %v2098 = vadd.f32 %v1976, %v2097
        %v2099 = vpop.f32.mrf.mxu0
        %2100 = vmatprep.mubr.bf16.mxu0 %v2042
        %2101 = vmatmul.mubr.bf16.gmra.mxu0 %v1951
        %v2102 = vpop.f32.mrf.mxu0
        %v2103 = vadd.f32 %v1976, %v2102
        %v2104 = vpop.f32.mrf.mxu0
        %v2105 = vpop.f32.mrf.mxu0
        %v2106 = vadd.f32 %v1976, %v2105
        %v2107 = vpop.f32.mrf.mxu0
        %2108 = vdwg.mxu0
        %v2109 = vxor.u32 %v2079, 2147483648
        %v2110 = vxor.u32 %v2082, 2147483648
        %v2111 = vxor.u32 %v2087, 2147483648
        %v2112 = vxor.u32 %v2090, 2147483648
        %v2113 = vxor.u32 %v2095, 2147483648
        %v2114 = vxor.u32 %v2098, 2147483648
        %v2115 = vxor.u32 %v2103, 2147483648
        %v2116 = vxor.u32 %v2106, 2147483648
        %v2117 = vmul.f32 %v2109, 1.442695
        %v2118 = vpow.pop %v2117
        %v2119 = vmul.f32 %v2110, 1.442695
        %v2120 = vpow.pop %v2119
        %v2121 = vmul.f32 %v2111, 1.442695
        %v2122 = vpow.pop %v2121
        %v2123 = vmul.f32 %v2112, 1.442695
        %v2124 = vpow.pop %v2123
        %v2125 = vmul.f32 %v2113, 1.442695
        %v2126 = vpow.pop %v2125
        %v2127 = vmul.f32 %v2114, 1.442695
        %v2128 = vpow.pop %v2127
        %v2129 = vmul.f32 %v2115, 1.442695
        %v2130 = vpow.pop %v2129
        %v2131 = vmul.f32 %v2116, 1.442695
        %v2132 = vpow.pop %v2131
        %v2133 = vadd.f32 %v2118, 1.0
        %v2134 = vadd.f32 %v2120, 1.0
        %v2135 = vadd.f32 %v2122, 1.0
        %v2136 = vadd.f32 %v2124, 1.0
        %v2137 = vadd.f32 %v2126, 1.0
        %v2138 = vadd.f32 %v2128, 1.0
        %v2139 = vadd.f32 %v2130, 1.0
        %v2140 = vadd.f32 %v2132, 1.0
        %v2141 = vrcp.pop %v2133
        %v2142 = vmul.f32 1.0, %v2141
        %v2143 = vrcp.pop %v2134
        %v2144 = vmul.f32 1.0, %v2143
        %v2145 = vrcp.pop %v2135
        %v2146 = vmul.f32 1.0, %v2145
        %v2147 = vrcp.pop %v2136
        %v2148 = vmul.f32 1.0, %v2147
        %v2149 = vrcp.pop %v2137
        %v2150 = vmul.f32 1.0, %v2149
        %v2151 = vrcp.pop %v2138
        %v2152 = vmul.f32 1.0, %v2151
        %v2153 = vrcp.pop %v2139
        %v2154 = vmul.f32 1.0, %v2153
        %v2155 = vrcp.pop %v2140
        %v2156 = vmul.f32 1.0, %v2155
        %v2157 = vmul.f32 %v2079, %v2142
        %v2158 = vmul.f32 %v2082, %v2144
        %v2159 = vmul.f32 %v2087, %v2146
        %v2160 = vmul.f32 %v2090, %v2148
        %v2161 = vmul.f32 %v2095, %v2150
        %v2162 = vmul.f32 %v2098, %v2152
        %v2163 = vmul.f32 %v2103, %v2154
        %v2164 = vmul.f32 %v2106, %v2156
        %v2165 = vadd.f32 %v2157, %v643
        %v2166 = vadd.f32 %v2158, %v644
        %v2167 = vadd.f32 %v2159, %v645
        %v2168 = vadd.f32 %v2160, %v646
        %v2169 = vadd.f32 %v2161, %v647
        %v2170 = vadd.f32 %v2162, %v648
        %v2171 = vadd.f32 %v2163, %v649
        %v2172 = vadd.f32 %v2164, %v650
        %v2173 = vpack.c.bf16 %v2166, %v2165
        %v2174 = vpack.c.bf16 %v2168, %v2167
        %v2175 = vpack.c.bf16 %v2170, %v2169
        %v2176 = vpack.c.bf16 %v2172, %v2171
        %v2177 = vld [vmem:[%s9] sm:$0xf]
        %v2178 = vld [vmem:[%s9 + $0x4] sm:$0xf]
        %v2179 = vpack.c.bf16 %v788, %v787
        %v2180 = vpack.c.bf16 %v790, %v789
        %v2181 = vpack.c.bf16 %v792, %v791
        %v2182 = vpack.c.bf16 %v794, %v793
        %v2183 = vld [vmem:[%s10] sm:$0xf]
        %v2184 = vld [vmem:[%s10 + $0x4] sm:$0xf]
        %v2187 = vunpack.c.l.b16 %v2183
        %v2188 = vunpack.c.l.b16 %v2184
        %v2189 = vpack.c.b16 %v2188, %v2187
        %v2192 = vsel %vm814, %v2179, 0
        %v2195 = vsel %vm814, %v2180, 0
        %v2198 = vsel %vm814, %v2181, 0
        %v2201 = vsel %vm814, %v2182, 0
        %2203 = vmatprep.subr.bf16.mxu0 0
        %2204 = vmatpush1.bf16.msra.mxu0 0
        %2205 = vmatprep.subr.bf16.mxu0 0
        %2206 = vmatpush1.bf16.msra.mxu0 0
        %2207 = vmatprep.subr.bf16.mxu0 0
        %2208 = vmatpush1.bf16.msra.mxu0 0
        %2209 = vmatprep.subr.bf16.mxu0 0
        %2210 = vmatpush1.bf16.msra.mxu0 0
        %2211 = vmatprep.subr.bf16.mxu0 0
        %2212 = vmatpush1.bf16.msra.mxu0 0
        %2213 = vmatprep.subr.bf16.mxu0 0
        %2214 = vmatpush1.bf16.msra.mxu0 0
        %2215 = vmatprep.subr.bf16.mxu0 0
        %2216 = vmatpush1.bf16.msra.mxu0 0
        %2217 = vmatprep.subr.bf16.mxu0 0
        %2218 = vmatpush1.bf16.msra.mxu0 %v2189
        %2219 = vmatprep.subr.bf16.mxu0 0
        %2220 = vmatpush2.bf16.msra.mxu0 0
        %2221 = vmatprep.subr.bf16.mxu0 0
        %2222 = vmatpush2.bf16.msra.mxu0 0
        %2223 = vmatprep.subr.bf16.mxu0 0
        %2224 = vmatpush2.bf16.msra.mxu0 0
        %2225 = vmatprep.subr.bf16.mxu0 0
        %2226 = vmatpush2.bf16.msra.mxu0 0
        %2227 = vmatprep.subr.bf16.mxu0 0
        %2228 = vmatpush2.bf16.msra.mxu0 0
        %2229 = vmatprep.subr.bf16.mxu0 0
        %2230 = vmatpush2.bf16.msra.mxu0 0
        %2231 = vmatprep.subr.bf16.mxu0 0
        %2232 = vmatpush2.bf16.msra.mxu0 0
        %2233 = vmatprep.subr.bf16.mxu0 0
        %2234 = vmatpush2.bf16.msra.mxu0 0
        %2235 = vmatprep.mubr.bf16.mxu0 0
        %2236 = vmatmul.mubr.bf16.gmra.mxu0 %v2192
        %v2237 = vpop.f32.mrf.mxu0
        %v2238 = vadd.f32 0.0, %v2237
        %v2239 = vpop.f32.mrf.mxu0
        %v2240 = vpop.f32.mrf.mxu0
        %v2241 = vadd.f32 0.0, %v2240
        %v2242 = vpop.f32.mrf.mxu0
        %2243 = vmatprep.mubr.bf16.mxu0 0
        %2244 = vmatmul.mubr.bf16.gmra.mxu0 %v2195
        %v2245 = vpop.f32.mrf.mxu0
        %v2246 = vadd.f32 0.0, %v2245
        %v2247 = vpop.f32.mrf.mxu0
        %v2248 = vpop.f32.mrf.mxu0
        %v2249 = vadd.f32 0.0, %v2248
        %v2250 = vpop.f32.mrf.mxu0
        %2251 = vmatprep.mubr.bf16.mxu0 0
        %2252 = vmatmul.mubr.bf16.gmra.mxu0 %v2198
        %v2253 = vpop.f32.mrf.mxu0
        %v2254 = vadd.f32 0.0, %v2253
        %v2255 = vpop.f32.mrf.mxu0
        %v2256 = vpop.f32.mrf.mxu0
        %v2257 = vadd.f32 0.0, %v2256
        %v2258 = vpop.f32.mrf.mxu0
        %2259 = vmatprep.mubr.bf16.mxu0 0
        %2260 = vmatmul.mubr.bf16.gmra.mxu0 %v2201
        %v2261 = vpop.f32.mrf.mxu0
        %v2262 = vadd.f32 0.0, %v2261
        %v2263 = vpop.f32.mrf.mxu0
        %v2264 = vpop.f32.mrf.mxu0
        %v2265 = vadd.f32 0.0, %v2264
        %v2266 = vpop.f32.mrf.mxu0
        %2267 = vdwg.mxu0
        %v2270 = vunpack.c.l.b16 %v2177
        %v2271 = vunpack.c.l.b16 %v2178
        %v2272 = vpack.c.b16 %v2271, %v2270
        %v2275 = vsel %vm814, %v2173, 0
        %v2278 = vsel %vm814, %v2174, 0
        %v2281 = vsel %vm814, %v2175, 0
        %v2284 = vsel %vm814, %v2176, 0
        %2286 = vmatprep.subr.bf16.mxu0 0
        %2287 = vmatpush1.bf16.msra.mxu0 0
        %2288 = vmatprep.subr.bf16.mxu0 0
        %2289 = vmatpush1.bf16.msra.mxu0 0
        %2290 = vmatprep.subr.bf16.mxu0 0
        %2291 = vmatpush1.bf16.msra.mxu0 0
        %2292 = vmatprep.subr.bf16.mxu0 0
        %2293 = vmatpush1.bf16.msra.mxu0 0
        %2294 = vmatprep.subr.bf16.mxu0 0
        %2295 = vmatpush1.bf16.msra.mxu0 0
        %2296 = vmatprep.subr.bf16.mxu0 0
        %2297 = vmatpush1.bf16.msra.mxu0 0
        %2298 = vmatprep.subr.bf16.mxu0 0
        %2299 = vmatpush1.bf16.msra.mxu0 0
        %2300 = vmatprep.subr.bf16.mxu0 0
        %2301 = vmatpush1.bf16.msra.mxu0 %v2272
        %2302 = vmatprep.subr.bf16.mxu0 0
        %2303 = vmatpush2.bf16.msra.mxu0 0
        %2304 = vmatprep.subr.bf16.mxu0 0
        %2305 = vmatpush2.bf16.msra.mxu0 0
        %2306 = vmatprep.subr.bf16.mxu0 0
        %2307 = vmatpush2.bf16.msra.mxu0 0
        %2308 = vmatprep.subr.bf16.mxu0 0
        %2309 = vmatpush2.bf16.msra.mxu0 0
        %2310 = vmatprep.subr.bf16.mxu0 0
        %2311 = vmatpush2.bf16.msra.mxu0 0
        %2312 = vmatprep.subr.bf16.mxu0 0
        %2313 = vmatpush2.bf16.msra.mxu0 0
        %2314 = vmatprep.subr.bf16.mxu0 0
        %2315 = vmatpush2.bf16.msra.mxu0 0
        %2316 = vmatprep.subr.bf16.mxu0 0
        %2317 = vmatpush2.bf16.msra.mxu0 0
        %2318 = vmatprep.mubr.bf16.mxu0 0
        %2319 = vmatmul.mubr.bf16.gmra.mxu0 %v2275
        %v2320 = vpop.f32.mrf.mxu0
        %v2321 = vadd.f32 %v2238, %v2320
        %v2322 = vpop.f32.mrf.mxu0
        %v2323 = vpop.f32.mrf.mxu0
        %v2324 = vadd.f32 %v2241, %v2323
        %v2325 = vpop.f32.mrf.mxu0
        %2326 = vmatprep.mubr.bf16.mxu0 0
        %2327 = vmatmul.mubr.bf16.gmra.mxu0 %v2278
        %v2328 = vpop.f32.mrf.mxu0
        %v2329 = vadd.f32 %v2246, %v2328
        %v2330 = vpop.f32.mrf.mxu0
        %v2331 = vpop.f32.mrf.mxu0
        %v2332 = vadd.f32 %v2249, %v2331
        %v2333 = vpop.f32.mrf.mxu0
        %2334 = vmatprep.mubr.bf16.mxu0 0
        %2335 = vmatmul.mubr.bf16.gmra.mxu0 %v2281
        %v2336 = vpop.f32.mrf.mxu0
        %v2337 = vadd.f32 %v2254, %v2336
        %v2338 = vpop.f32.mrf.mxu0
        %v2339 = vpop.f32.mrf.mxu0
        %v2340 = vadd.f32 %v2257, %v2339
        %v2341 = vpop.f32.mrf.mxu0
        %2342 = vmatprep.mubr.bf16.mxu0 0
        %2343 = vmatmul.mubr.bf16.gmra.mxu0 %v2284
        %v2344 = vpop.f32.mrf.mxu0
        %v2345 = vadd.f32 %v2262, %v2344
        %v2346 = vpop.f32.mrf.mxu0
        %v2347 = vpop.f32.mrf.mxu0
        %v2348 = vadd.f32 %v2265, %v2347
        %v2349 = vpop.f32.mrf.mxu0
        %2350 = vdwg.mxu0
        %v2351 = vld [vmem:[%s11] sm:$0x1]
        %v2353 = vlaneseq
        %v2354 = vshrl.u32 %v2353, 7
        %v2355 = vsub.s32 0, %v2354
        %v2356 = vrot.slane %v2351, %v2355
        %v2358 = vadd.f32 %v2321, %v2356
        %v2359 = vadd.f32 %v2324, %v2356
        %v2360 = vadd.f32 %v2329, %v2356
        %v2361 = vadd.f32 %v2332, %v2356
        %v2362 = vadd.f32 %v2337, %v2356
        %v2363 = vadd.f32 %v2340, %v2356
        %v2364 = vadd.f32 %v2345, %v2356
        %v2365 = vadd.f32 %v2348, %v2356
        %v2366 = vxor.u32 %v2358, 2147483648
        %v2367 = vxor.u32 %v2359, 2147483648
        %v2368 = vxor.u32 %v2360, 2147483648
        %v2369 = vxor.u32 %v2361, 2147483648
        %v2370 = vxor.u32 %v2362, 2147483648
        %v2371 = vxor.u32 %v2363, 2147483648
        %v2372 = vxor.u32 %v2364, 2147483648
        %v2373 = vxor.u32 %v2365, 2147483648
        %v2374 = vmul.f32 %v2366, 1.442695
        %v2375 = vpow.pop %v2374
        %v2376 = vmul.f32 %v2367, 1.442695
        %v2377 = vpow.pop %v2376
        %v2378 = vmul.f32 %v2368, 1.442695
        %v2379 = vpow.pop %v2378
        %v2380 = vmul.f32 %v2369, 1.442695
        %v2381 = vpow.pop %v2380
        %v2382 = vmul.f32 %v2370, 1.442695
        %v2383 = vpow.pop %v2382
        %v2384 = vmul.f32 %v2371, 1.442695
        %v2385 = vpow.pop %v2384
        %v2386 = vmul.f32 %v2372, 1.442695
        %v2387 = vpow.pop %v2386
        %v2388 = vmul.f32 %v2373, 1.442695
        %v2389 = vpow.pop %v2388
        %v2390 = vadd.f32 %v2375, 1.0
        %v2391 = vadd.f32 %v2377, 1.0
        %v2392 = vadd.f32 %v2379, 1.0
        %v2393 = vadd.f32 %v2381, 1.0
        %v2394 = vadd.f32 %v2383, 1.0
        %v2395 = vadd.f32 %v2385, 1.0
        %v2396 = vadd.f32 %v2387, 1.0
        %v2397 = vadd.f32 %v2389, 1.0
        %v2398 = vrcp.pop %v2390
        %v2399 = vmul.f32 1.0, %v2398
        %v2400 = vrcp.pop %v2391
        %v2401 = vmul.f32 1.0, %v2400
        %v2402 = vrcp.pop %v2392
        %v2403 = vmul.f32 1.0, %v2402
        %v2404 = vrcp.pop %v2393
        %v2405 = vmul.f32 1.0, %v2404
        %v2406 = vrcp.pop %v2394
        %v2407 = vmul.f32 1.0, %v2406
        %v2408 = vrcp.pop %v2395
        %v2409 = vmul.f32 1.0, %v2408
        %v2410 = vrcp.pop %v2396
        %v2411 = vmul.f32 1.0, %v2410
        %v2412 = vrcp.pop %v2397
        %v2413 = vmul.f32 1.0, %v2412
        %v2414 = vmul.f32 %v2358, %v2399
        %v2415 = vmul.f32 %v2359, %v2401
        %v2416 = vmul.f32 %v2360, %v2403
        %v2417 = vmul.f32 %v2361, %v2405
        %v2418 = vmul.f32 %v2362, %v2407
        %v2419 = vmul.f32 %v2363, %v2409
        %v2420 = vmul.f32 %v2364, %v2411
        %v2421 = vmul.f32 %v2365, %v2413
        %v2422 = vsel %vm517, %v2414, 0.0
        %v2423 = vsel %vm517, %v2415, 0.0
        %v2424 = vadd.f32 %v2422, %v2423
        %v2425 = vsel %vm517, %v2416, 0.0
        %v2426 = vadd.f32 %v2424, %v2425
        %v2427 = vsel %vm517, %v2417, 0.0
        %v2428 = vadd.f32 %v2426, %v2427
        %v2429 = vsel %vm517, %v2418, 0.0
        %v2430 = vadd.f32 %v2428, %v2429
        %v2431 = vsel %vm517, %v2419, 0.0
        %v2432 = vadd.f32 %v2430, %v2431
        %v2433 = vsel %vm517, %v2420, 0.0
        %v2434 = vadd.f32 %v2432, %v2433
        %v2435 = vsel %vm517, %v2421, 0.0
        %v2436 = vadd.f32 %v2434, %v2435
        %v2437 = vrot.slane %v2436, 4
        %v2438 = vadd.f32 %v2436, %v2437
        %v2439 = vrot.slane %v2438, 2
        %v2440 = vadd.f32 %v2438, %v2439
        %v2441 = vrot.slane %v2440, 1
        %v2442 = vadd.f32 %v2440, %v2441
        %v2443 = vmul.f32 %v2442, 0.015625
        %v2444 = vld [vmem:[%s12] sm:$0xff]
        %v2445 = vld [vmem:[%s12 + $0x8] sm:$0xff]
        %v2446 = vld [vmem:[%s12 + $0x10] sm:$0xff]
        %v2447 = vld [vmem:[%s12 + $0x18] sm:$0xff]
        %v2448 = vld [vmem:[%s13] sm:$0x1]
        %v2450 = vsel %vm517, %v2443, 0
        %2452 = vmatprep.subr.mxu0 0.0
        %2453 = vmatpush1.msra.mxu0 0.0
        %2454 = vmatprep.subr.mxu0 0.0
        %2455 = vmatpush1.msra.mxu0 0.0
        %2456 = vmatprep.subr.mxu0 0.0
        %2457 = vmatpush1.msra.mxu0 0.0
        %2458 = vmatprep.subr.mxu0 0.0
        %2459 = vmatpush1.msra.mxu0 0.0
        %2460 = vmatprep.subr.mxu0 0.0
        %2461 = vmatpush1.msra.mxu0 0.0
        %2462 = vmatprep.subr.mxu0 0.0
        %2463 = vmatpush1.msra.mxu0 0.0
        %2464 = vmatprep.subr.mxu0 0.0
        %2465 = vmatpush1.msra.mxu0 0.0
        %2466 = vmatprep.subr.mxu0 0.0
        %2467 = vmatpush1.msra.mxu0 0.0
        %2468 = vmatprep.subr.mxu0 0.0
        %2469 = vmatpush1.msra.mxu0 0.0
        %2470 = vmatprep.subr.mxu0 0.0
        %2471 = vmatpush1.msra.mxu0 0.0
        %2472 = vmatprep.subr.mxu0 0.0
        %2473 = vmatpush1.msra.mxu0 0.0
        %2474 = vmatprep.subr.mxu0 0.0
        %2475 = vmatpush1.msra.mxu0 0.0
        %2476 = vmatprep.subr.mxu0 0.0
        %2477 = vmatpush1.msra.mxu0 %v2447
        %2478 = vmatprep.subr.mxu0 0.0
        %2479 = vmatpush1.msra.mxu0 %v2446
        %2480 = vmatprep.subr.mxu0 0.0
        %2481 = vmatpush1.msra.mxu0 %v2445
        %2482 = vmatprep.subr.mxu0 0.0
        %2483 = vmatpush1.msra.mxu0 %v2444
        %2484 = vmatprep.subr.mxu0 0.0
        %2485 = vmatpush2.msra.mxu0 0.0
        %2486 = vmatprep.subr.mxu0 0.0
        %2487 = vmatpush2.msra.mxu0 0.0
        %2488 = vmatprep.subr.mxu0 0.0
        %2489 = vmatpush2.msra.mxu0 0.0
        %2490 = vmatprep.subr.mxu0 0.0
        %2491 = vmatpush2.msra.mxu0 0.0
        %2492 = vmatprep.subr.mxu0 0.0
        %2493 = vmatpush2.msra.mxu0 0.0
        %2494 = vmatprep.subr.mxu0 0.0
        %2495 = vmatpush2.msra.mxu0 0.0
        %2496 = vmatprep.subr.mxu0 0.0
        %2497 = vmatpush2.msra.mxu0 0.0
        %2498 = vmatprep.subr.mxu0 0.0
        %2499 = vmatpush2.msra.mxu0 0.0
        %2500 = vmatprep.subr.mxu0 0.0
        %2501 = vmatpush2.msra.mxu0 0.0
        %2502 = vmatprep.subr.mxu0 0.0
        %2503 = vmatpush2.msra.mxu0 0.0
        %2504 = vmatprep.subr.mxu0 0.0
        %2505 = vmatpush2.msra.mxu0 0.0
        %2506 = vmatprep.subr.mxu0 0.0
        %2507 = vmatpush2.msra.mxu0 0.0
        %2508 = vmatprep.subr.mxu0 0.0
        %2509 = vmatpush2.msra.mxu0 0.0
        %2510 = vmatprep.subr.mxu0 0.0
        %2511 = vmatpush2.msra.mxu0 0.0
        %2512 = vmatprep.subr.mxu0 0.0
        %2513 = vmatpush2.msra.mxu0 0.0
        %2514 = vmatprep.subr.mxu0 0.0
        %2515 = vmatpush2.msra.mxu0 0.0
        %2516 = vmatprep.mubr.f32.mxu0 0.0
        %2517 = vmatmul.mubr.f32.gmra.mxu0 %v2450
        %v2518 = vpop.f32.mrf.mxu0
        %v2519 = vadd.f32 %v2448, %v2518
        %v2520 = vpop.f32.mrf.mxu0
        %2521 = vdwg.mxu0
        %2522 = vst [vmem:[%s459] sm:$0x1] %v2519
        %s2523 = sand.u32 %s335, 1
        %s2524 = scalar_lea.sflag [#allocation4], %s2523
        %s2525 = sand.u32 %s335, 1
        %s2526 = scalar_lea.vmem [#allocation3], %s2525
        // Predicated region
        $region77: #{yolov5_forward.5} parent=75 // pred_check
          %p2527 = pneg %p345
        $region78: #{yolov5_forward.5} parent=75 // pred_check_branch
          %2529 = sbr.rel (%p2527) target = $region80
        $region79: #{yolov5_forward.5} parent=75 // pred_region
          %s2531 = ssub.s32 16, 16
          %2532 = vsyncadd %s2524, %s2531
          %s2533 = smul.addr %s28, 16
          %s2534 = scalar_lea.hbm %s14, %s2533
          %s2536 = sshll.u32 %s2526, 4
          %s2537 = int_to_ptr.vmem [resolvable:$true] %s2536
          %2539 = dma.vmem_to_hbm [thread:$0]  %s2537, 16, %s2534, %s2524
        $region80: #{yolov5_forward.5} parent=75 // pred_fallthru
          _
      $region76: #{yolov5_forward.5} parent=5 // pred_fallthru
        _
      %p2540 = scmp.le.s32.totalorder 2, %s23
      // Predicated region
      $region81: #{yolov5_forward.5} parent=5 // pred_check
        %p2541 = pneg %p2540
      $region82: #{yolov5_forward.5} parent=5 // pred_check_branch
        %2543 = sbr.rel (%p2541) target = $region84
      $region83: #{yolov5_forward.5} parent=5 // pred_region
        %s2544 = ssub.s32 %s23, 2
        // Predicated region
        $region85: #{yolov5_forward.5} parent=83 // pred_check
          %p2545 = pneg %p351
        $region86: #{yolov5_forward.5} parent=83 // pred_check_branch
          %2547 = sbr.rel (%p2545) target = $region88
        $region87: #{yolov5_forward.5} parent=83 // pred_region
          %s2548 = sand.u32 %s336, 1
          %s2549 = scalar_lea.sflag [#allocation4], %s2548
          %s2550 = sand.u32 %s336, 1
          %s2551 = scalar_lea.vmem [#allocation3], %s2550
          %2552 = dma.done %s2549, 16
        $region88: #{yolov5_forward.5} parent=83 // pred_fallthru
          _
      $region84: #{yolov5_forward.5} parent=5 // pred_fallthru
        _
    $region6: #{yolov5_forward.5} parent=1 // loop_footer
      %s27 = sadd.s32 1, %s23
    $region7: #{yolov5_forward.5} parent=1 // loop_footer_branch
      %22 = sbr.rel target = $region3
    $region8: #{yolov5_forward.5} parent=1 // loop_exit
      _
    %2553 = vsyncpa [#allocation4], 1
    %s2554 = scalar_lea.sflag [#allocation4], 1
    %2555 = vsyncpa %s2554, 1

</llo_original>
